<compile_context>
chip_gen: v6e
topology: v6e:2x2x1
jax: 0.10.0
libtpu: 0.0.40
codegen_flags: <defaults>
</compile_context>

<pallas_src>
import functools

import jax
import jax.numpy as jnp
from jax.experimental import pallas as pl
from jax.experimental.pallas import tpu as pltpu


def _round_up(x, m):
    return ((x + m - 1) // m) * m


# ---------------------------------------------------------------------------
# Fused Pallas kernel: whole 16-layer stack for one block of batch elements
# ---------------------------------------------------------------------------
def _fused_text_encoder_kernel(x_ref, w0_ref, b0_ref, w1_ref, b1_ref,
                               w_hw_ref, b_hw_ref,
                               o_ref, buf_ref, *,
                               T, B, pad, stride, dilations):
    """
    x_ref   : (B, T, d_in)    bf16  channels-last input block (B batch elements)
    w0_ref  : (d_in, dh)      bf16  layer 0 (1x1 conv, relu)
    b0_ref  : (1, dh)         f32
    w1_ref  : (dh, dh)        bf16  layer 1 (1x1 conv, linear)
    b1_ref  : (1, dh)         f32
    w_hw_ref: (L, 3*dh, 2*dh) bf16  fused highway weights:
                                    rows = (tap -d | tap 0 | tap +d), cols = (gate | value)
    b_hw_ref: (L, 2*dh)       f32   fused highway bias (gate | value)
    o_ref   : (B, T, dh)      f32   output block
    buf_ref : (tpad, dh)      f32   VMEM activation buffer: B segments of T rows
                                    starting at pad + b*stride; halo/gap rows are zero
    """
    f32 = jnp.float32
    bf16 = jnp.bfloat16
    dh = buf_ref.shape[1]
    tpad = buf_ref.shape[0]
    n_rows = (B - 1) * stride + T              # active window: first..last data row

    # ---- layers 0 & 1: 1x1 convs over the whole batch block at once --------
    x_cat = jnp.concatenate([x_ref[b] for b in range(B)], axis=0)   # (B*T, d_in) bf16
    y = jnp.dot(x_cat, w0_ref[...], preferred_element_type=f32) + b0_ref[...]
    y = jnp.maximum(y, 0.0)
    y = jnp.dot(y.astype(bf16), w1_ref[...], preferred_element_type=f32) \
        + b1_ref[...]                                               # (B*T, dh) f32

    # ---- zero ONLY halo / gap rows; scatter data rows into their segments --
    buf_ref[0:pad, :] = jnp.zeros((pad, dh), f32)
    for b in range(B):
        off = pad + b * stride
        buf_ref[off:off + T, :] = y[b * T:(b + 1) * T, :]
        nxt = pad + (b + 1) * stride if b + 1 < B else tpad
        gap = nxt - (off + T)
        if gap > 0:
            buf_ref[off + T:nxt, :] = jnp.zeros((gap, dh), f32)

    # ---- highway conv layers: ONE matmul per layer --------------------------
    A = pad                                     # active-window start (8-aligned)
    for li, d in enumerate(dilations):
        x_c = buf_ref[A:A + n_rows, :]                      # residual (f32), aligned
        x_m = buf_ref[A - d:A - d + n_rows, :]              # tap -d
        x_p = buf_ref[A + d:A + d + n_rows, :]              # tap +d
        xin = jnp.concatenate([x_m, x_c, x_p], axis=-1).astype(bf16)  # (n_rows, 3*dh)
        h = jnp.dot(xin, w_hw_ref[li], preferred_element_type=f32) \
            + b_hw_ref[li:li + 1, :]                        # (n_rows, 2*dh)
        gate = jax.nn.sigmoid(h[:, :dh])                    # EUP
        hval = h[:, dh:]
        new = x_c + gate * (hval - x_c)                     # highway (one fewer mul)
        for b in range(B):                                  # write data rows only
            r0 = b * stride
            buf_ref[A + r0:A + r0 + T, :] = new[r0:r0 + T, :]

    # ---- emit ----------------------------------------------------------------
    for b in range(B):
        off = pad + b * stride
        o_ref[b] = buf_ref[off:off + T, :]


# ---------------------------------------------------------------------------
# Parameter construction (deterministic, synthetic) + weight norm
# ---------------------------------------------------------------------------
def _weight_norm(v, g):
    # PyTorch weight_norm default dim=0: normalize per output channel.
    nrm = jnp.sqrt(jnp.sum(v * v, axis=(1, 2), keepdims=True)) + 1e-12
    return g.reshape(-1, 1, 1) * v / nrm


def make_text_encoder_params(key, d_in, d_hidden):
    """Returns a list of layer dicts matching the nn.ModuleList ordering."""
    cfgs = []
    cfgs.append((d_in, d_hidden, 1, 1, "relu"))
    cfgs.append((d_hidden, d_hidden, 1, 1, "linear"))
    for _ in range(2):
        for i in range(4):
            cfgs.append((d_hidden, 2 * d_hidden, 3, 3 ** i, "highway"))
    for _ in range(2):
        cfgs.append((d_hidden, 2 * d_hidden, 3, 1, "highway"))
    for _ in range(2):
        cfgs.append((d_hidden, 2 * d_hidden, 1, 1, "highway"))

    params = []
    for (cin, cout, k, dil, mode) in cfgs:
        key, kv, kg, kb = jax.random.split(key, 4)
        v = jax.random.normal(kv, (cout, cin, k), jnp.float32) * 0.1
        g = 1.0 + 0.01 * jax.random.normal(kg, (cout,), jnp.float32)
        b = 0.01 * jax.random.normal(kb, (cout,), jnp.float32)
        w = _weight_norm(v, g)
        params.append(dict(w=w, b=b, kernel=k, dilation=dil, mode=mode))
    return params


def pack_params(params, d_hidden):
    """Repack torch-layout (Cout, Cin, K) weights into the fused-kernel layout."""
    p0, p1 = params[0], params[1]
    w0 = jnp.transpose(p0["w"][:, :, 0], (1, 0))            # (d_in, dh)
    b0 = p0["b"].reshape(1, -1)
    w1 = jnp.transpose(p1["w"][:, :, 0], (1, 0))             # (dh, dh)
    b1 = p1["b"].reshape(1, -1)

    w_hw_list, b_hw_list, dils = [], [], []
    for p in params[2:]:
        K = p["kernel"]
        w_kio = jnp.transpose(p["w"], (2, 1, 0))              # (K, Cin, 2*dh): cols = gate|value
        if K == 1:                                            # pad to 3 taps with zeros
            z = jnp.zeros_like(w_kio)
            w_kio = jnp.concatenate([z, w_kio, z], axis=0)    # (3, Cin, 2*dh)
        # fold the 3 taps into the contraction axis -> (3*dh, 2*dh)
        w_hw_list.append(w_kio.reshape(3 * d_hidden, 2 * d_hidden))
        b_hw_list.append(p["b"])                              # (2*dh,) = gate|value bias
        dils.append(int(p["dilation"]))

    return dict(
        w0=w0.astype(jnp.bfloat16), b0=b0.astype(jnp.float32),
        w1=w1.astype(jnp.bfloat16), b1=b1.astype(jnp.float32),
        w_hw=jnp.stack(w_hw_list).astype(jnp.bfloat16),       # (L, 3*dh, 2*dh)
        b_hw=jnp.stack(b_hw_list).astype(jnp.float32),        # (L, 2*dh)
        dilations=tuple(dils))


# ---------------------------------------------------------------------------
# Fused TextEncoder forward
# ---------------------------------------------------------------------------
def text_encoder_forward(L_nct, packed, block_n=None):
    """L_nct: (N, Cx, Tx) as in the PyTorch module. Returns (K, V), each (N, dh/2, T)."""
    N, d_in, T = L_nct.shape
    dh = packed["w1"].shape[0]
    dils = packed["dilations"]
    n_hw = len(dils)
    max_d = max(dils)

    # Batch block: biggest divisor of N <= 8 (bigger matmul M, fewer grid steps).
    if block_n is None:
        block_n = 1
        for cand in (8, 4, 2):
            if N % cand == 0:
                block_n = cand
                break
    B = block_n
    assert N % B == 0
    grid_n = N // B

    pad_l = _round_up(max_d, 8)                 # sublane-aligned left halo
    stride = _round_up(T + max_d, 8)            # per-element row stride (gap >= max_d)
    tpad = _round_up(pad_l + (B - 1) * stride + T + max_d, 8)

    x_ntc = jnp.transpose(L_nct, (0, 2, 1)).astype(jnp.bfloat16)   # (N, T, Cin) bf16

    kernel = functools.partial(_fused_text_encoder_kernel,
                               T=T, B=B, pad=pad_l, stride=stride, dilations=dils)

    # Explicit VMEM budget: resident weights + double-buffered I/O + scratch.
    weight_bytes = (int(packed["w0"].size) + int(packed["w1"].size)
                    + int(packed["w_hw"].size)) * 2 \
                   + (int(packed["b0"].size) + int(packed["b1"].size)
                      + int(packed["b_hw"].size)) * 4
    io_bytes = B * T * d_in * 2 + B * T * dh * 4
    scratch_bytes = tpad * dh * 4
    vmem_limit = 2 * (weight_bytes + io_bytes) + scratch_bytes + (2 << 20)
    vmem_limit = int(min(max(vmem_limit, 16 << 20), 64 << 20))
    # TODO(synk): at production widths (dh>=512) on v7x, stream w_hw per layer over an
    # "arbitrary" grid axis (or single-buffer the weight specs) instead of holding it whole.

    y = pl.pallas_call(
        kernel,
        out_shape=jax.ShapeDtypeStruct((N, T, dh), jnp.float32),
        grid=(grid_n,),
        in_specs=[
            pl.BlockSpec((B, T, d_in), lambda n: (n, 0, 0)),
            pl.BlockSpec((d_in, dh), lambda n: (0, 0)),
            pl.BlockSpec((1, dh), lambda n: (0, 0)),
            pl.BlockSpec((dh, dh), lambda n: (0, 0)),
            pl.BlockSpec((1, dh), lambda n: (0, 0)),
            pl.BlockSpec((n_hw, 3 * dh, 2 * dh), lambda n: (0, 0, 0)),
            pl.BlockSpec((n_hw, 2 * dh), lambda n: (0, 0)),
        ],
        out_specs=pl.BlockSpec((B, T, dh), lambda n: (n, 0, 0)),
        scratch_shapes=[pltpu.VMEM((tpad, dh), jnp.float32)],
        compiler_params=pltpu.CompilerParams(
            dimension_semantics=("parallel",),
            vmem_limit_bytes=vmem_limit),
    )(x_ntc, packed["w0"], packed["b0"], packed["w1"], packed["b1"],
      packed["w_hw"], packed["b_hw"])

    y_nct = jnp.transpose(y, (0, 2, 1))          # back to the module's (N, C, T) contract
    return y_nct[:, :dh // 2, :], y_nct[:, dh // 2:, :]


# ---------------------------------------------------------------------------
# Pure-JAX reference (same math / same bf16 matmul inputs) for sanity check
# ---------------------------------------------------------------------------
def reference_forward(L_nct, params):
    y = jnp.transpose(L_nct, (0, 2, 1)).astype(jnp.float32)      # (N, T, C)
    for p in params:
        Kk, d = p["kernel"], p["dilation"]
        padr = d * (Kk - 1) // 2
        w_kio = jnp.transpose(p["w"], (2, 1, 0))                  # (K, Cin, Cout)
        xp = jnp.pad(y, ((0, 0), (padr, padr), (0, 0)))
        T_ = y.shape[1]
        acc = jnp.zeros((y.shape[0], T_, w_kio.shape[2]), jnp.float32) + p["b"]
        for k in range(Kk):
            acc = acc + jnp.einsum(
                "ntc,co->nto",
                xp[:, k * d:k * d + T_, :].astype(jnp.bfloat16),
                w_kio[k].astype(jnp.bfloat16),
                preferred_element_type=jnp.float32)
        if p["mode"] == "relu":
            y = jnp.maximum(acc, 0.0)
        elif p["mode"] == "linear":
            y = acc
        else:
            C = y.shape[2]
            g = jax.nn.sigmoid(acc[..., :C])
            y = g * acc[..., C:] + (1.0 - g) * y
    y = jnp.transpose(y, (0, 2, 1))
    C = y.shape[1]
    return y[:, :C // 2, :], y[:, C // 2:, :]


if __name__ == "__main__":
    d_in, d_hidden = 16, 32
    N, T = 2, 16

    key = jax.random.PRNGKey(0)
    key, kx = jax.random.split(key)
    L = jax.random.normal(kx, (N, d_in, T), jnp.float32)          # (N, Cx, Tx)

    params = make_text_encoder_params(key, d_in, d_hidden)
    packed = pack_params(params, d_hidden)

    K_enc, V_enc = text_encoder_forward(L, packed)
    K_enc = jax.block_until_ready(K_enc)
    V_enc = jax.block_until_ready(V_enc)

    assert K_enc.shape == (N, d_hidden // 2, T)
    assert V_enc.shape == (N, d_hidden // 2, T)
    assert jnp.all(jnp.isfinite(K_enc)) and jnp.all(jnp.isfinite(V_enc))

    K_ref, V_ref = reference_forward(L, params)
    err = max(float(jnp.max(jnp.abs(K_enc - K_ref))),
              float(jnp.max(jnp.abs(V_enc - V_ref))))
    assert err < 5e-2, f"mismatch vs reference: {err}"

    print("KERNEL_OK")
</pallas_src>

<mosaic_0001>
module attributes {stable_mosaic.version = 11 : i64} {
  func.func @_fused_text_encoder_kernel(%arg0: i32, %arg1: memref<2x16x16xbf16, #tpu.memory_space<vmem>>, %arg2: memref<16x32xbf16, #tpu.memory_space<vmem>>, %arg3: memref<1x32xf32, #tpu.memory_space<vmem>>, %arg4: memref<32x32xbf16, #tpu.memory_space<vmem>>, %arg5: memref<1x32xf32, #tpu.memory_space<vmem>>, %arg6: memref<12x96x64xbf16, #tpu.memory_space<vmem>>, %arg7: memref<12x64xf32, #tpu.memory_space<vmem>>, %arg8: memref<2x16x32xf32, #tpu.memory_space<vmem>>, %arg9: memref<128x32xf32, #tpu.memory_space<vmem>>) attributes {dimension_semantics = [#tpu.dimension_semantics<parallel>], iteration_bounds = array<i64: 1>, scalar_prefetch = 0 : i64, scratch_operands = 1 : i64, tpu.core_type = #tpu.core_type<tc>, window_params = [{transform_indices = @transform_0, window_bounds = array<i64: 2, 16, 16>}, {pipeline_mode = #tpu.pipeline_mode<synchronous>, transform_indices = @transform_1, window_bounds = array<i64: 16, 32>}, {pipeline_mode = #tpu.pipeline_mode<synchronous>, transform_indices = @transform_2, window_bounds = array<i64: 1, 32>}, {pipeline_mode = #tpu.pipeline_mode<synchronous>, transform_indices = @transform_3, window_bounds = array<i64: 32, 32>}, {pipeline_mode = #tpu.pipeline_mode<synchronous>, transform_indices = @transform_4, window_bounds = array<i64: 1, 32>}, {pipeline_mode = #tpu.pipeline_mode<synchronous>, transform_indices = @transform_5, window_bounds = array<i64: 12, 96, 64>}, {pipeline_mode = #tpu.pipeline_mode<synchronous>, transform_indices = @transform_6, window_bounds = array<i64: 12, 64>}, {transform_indices = @transform_7, window_bounds = array<i64: 2, 16, 32>}]} {
    %c0 = arith.constant 0 : index
    %c0_0 = arith.constant 0 : index
    %c0_1 = arith.constant 0 : index
    %0 = vector.load %arg1[%c0, %c0_0, %c0_1] : memref<2x16x16xbf16, #tpu.memory_space<vmem>>, vector<1x16x16xbf16>
    %1 = vector.shape_cast %0 : vector<1x16x16xbf16> to vector<16x16xbf16>
    %c1 = arith.constant 1 : index
    %c0_2 = arith.constant 0 : index
    %c0_3 = arith.constant 0 : index
    %2 = vector.load %arg1[%c1, %c0_2, %c0_3] : memref<2x16x16xbf16, #tpu.memory_space<vmem>>, vector<1x16x16xbf16>
    %3 = vector.shape_cast %2 : vector<1x16x16xbf16> to vector<16x16xbf16>
    %4 = tpu.concatenate %1, %3 in 0 : vector<16x16xbf16>, vector<16x16xbf16> -> vector<32x16xbf16>
    %c0_4 = arith.constant 0 : index
    %c0_5 = arith.constant 0 : index
    %5 = vector.load %arg2[%c0_4, %c0_5] : memref<16x32xbf16, #tpu.memory_space<vmem>>, vector<16x32xbf16>
    %cst = arith.constant dense<0.000000e+00> : vector<32x32xf32>
    %6 = tpu.matmul %4, %5, %cst {dimension_numbers = #tpu.dot_dimension_numbers<[1], [0], [0], [1], [0, 0, 1, 1], [], []>} : vector<32x16xbf16>, vector<16x32xbf16>, vector<32x32xf32> -> vector<32x32xf32>
    %c0_6 = arith.constant 0 : index
    %c0_7 = arith.constant 0 : index
    %7 = vector.load %arg3[%c0_6, %c0_7] : memref<1x32xf32, #tpu.memory_space<vmem>>, vector<1x32xf32>
    %8 = vector.broadcast %7 : vector<1x32xf32> to vector<32x32xf32>
    %9 = arith.addf %6, %8 : vector<32x32xf32>
    %cst_8 = arith.constant 0.000000e+00 : f32
    %10 = vector.broadcast %cst_8 : f32 to vector<32x32xf32>
    %11 = arith.maximumf %9, %10 : vector<32x32xf32>
    %12 = arith.truncf %11 : vector<32x32xf32> to vector<32x32xbf16>
    %c0_9 = arith.constant 0 : index
    %c0_10 = arith.constant 0 : index
    %13 = vector.load %arg4[%c0_9, %c0_10] : memref<32x32xbf16, #tpu.memory_space<vmem>>, vector<32x32xbf16>
    %cst_11 = arith.constant dense<0.000000e+00> : vector<32x32xf32>
    %14 = tpu.matmul %12, %13, %cst_11 {dimension_numbers = #tpu.dot_dimension_numbers<[1], [0], [0], [1], [0, 0, 1, 1], [], []>} : vector<32x32xbf16>, vector<32x32xbf16>, vector<32x32xf32> -> vector<32x32xf32>
    %c0_12 = arith.constant 0 : index
    %c0_13 = arith.constant 0 : index
    %15 = vector.load %arg5[%c0_12, %c0_13] : memref<1x32xf32, #tpu.memory_space<vmem>>, vector<1x32xf32>
    %16 = vector.broadcast %15 : vector<1x32xf32> to vector<32x32xf32>
    %17 = arith.addf %14, %16 : vector<32x32xf32>
    %cst_14 = arith.constant 0.000000e+00 : f32
    %18 = vector.broadcast %cst_14 : f32 to vector<32x32xf32>
    %c0_15 = arith.constant 0 : index
    %c0_16 = arith.constant 0 : index
    %19 = vector.load %arg9[%c0_15, %c0_16] : memref<128x32xf32, #tpu.memory_space<vmem>>, vector<32x32xf32>
    tpu.vector_store %arg9[%c0_15, %c0_16], %18 {strides = array<i32>} : memref<128x32xf32, #tpu.memory_space<vmem>>, vector<32x32xf32>,
    %20 = vector.extract_strided_slice %17 {offsets = [0, 0], sizes = [16, 32], strides = [1, 1]} : vector<32x32xf32> to vector<16x32xf32>
    %c32 = arith.constant 32 : index
    %c0_17 = arith.constant 0 : index
    %21 = vector.load %arg9[%c32, %c0_17] : memref<128x32xf32, #tpu.memory_space<vmem>>, vector<16x32xf32>
    tpu.vector_store %arg9[%c32, %c0_17], %20 {strides = array<i32>} : memref<128x32xf32, #tpu.memory_space<vmem>>, vector<16x32xf32>,
    %cst_18 = arith.constant 0.000000e+00 : f32
    %22 = vector.broadcast %cst_18 : f32 to vector<32x32xf32>
    %c48 = arith.constant 48 : index
    %c0_19 = arith.constant 0 : index
    %23 = vector.load %arg9[%c48, %c0_19] : memref<128x32xf32, #tpu.memory_space<vmem>>, vector<32x32xf32>
    tpu.vector_store %arg9[%c48, %c0_19], %22 {strides = array<i32>} : memref<128x32xf32, #tpu.memory_space<vmem>>, vector<32x32xf32>,
    %24 = vector.extract_strided_slice %17 {offsets = [16, 0], sizes = [16, 32], strides = [1, 1]} : vector<32x32xf32> to vector<16x32xf32>
    %c80 = arith.constant 80 : index
    %c0_20 = arith.constant 0 : index
    %25 = vector.load %arg9[%c80, %c0_20] : memref<128x32xf32, #tpu.memory_space<vmem>>, vector<16x32xf32>
    tpu.vector_store %arg9[%c80, %c0_20], %24 {strides = array<i32>} : memref<128x32xf32, #tpu.memory_space<vmem>>, vector<16x32xf32>,
    %cst_21 = arith.constant 0.000000e+00 : f32
    %26 = vector.broadcast %cst_21 : f32 to vector<32x32xf32>
    %c96 = arith.constant 96 : index
    %c0_22 = arith.constant 0 : index
    %27 = vector.load %arg9[%c96, %c0_22] : memref<128x32xf32, #tpu.memory_space<vmem>>, vector<32x32xf32>
    tpu.vector_store %arg9[%c96, %c0_22], %26 {strides = array<i32>} : memref<128x32xf32, #tpu.memory_space<vmem>>, vector<32x32xf32>,
    %c32_23 = arith.constant 32 : index
    %c0_24 = arith.constant 0 : index
    %28 = vector.load %arg9[%c32_23, %c0_24] : memref<128x32xf32, #tpu.memory_space<vmem>>, vector<64x32xf32>
    %c31 = arith.constant 31 : index
    %c0_25 = arith.constant 0 : index
    %29 = vector.load %arg9[%c31, %c0_25] : memref<128x32xf32, #tpu.memory_space<vmem>>, vector<64x32xf32>
    %c33 = arith.constant 33 : index
    %c0_26 = arith.constant 0 : index
    %30 = vector.load %arg9[%c33, %c0_26] : memref<128x32xf32, #tpu.memory_space<vmem>>, vector<64x32xf32>
    %31 = tpu.concatenate %29, %28, %30 in 1 : vector<64x32xf32>, vector<64x32xf32>, vector<64x32xf32> -> vector<64x96xf32>
    %32 = arith.truncf %31 : vector<64x96xf32> to vector<64x96xbf16>
    %c0_27 = arith.constant 0 : index
    %c0_28 = arith.constant 0 : index
    %c0_29 = arith.constant 0 : index
    %33 = vector.load %arg6[%c0_27, %c0_28, %c0_29] : memref<12x96x64xbf16, #tpu.memory_space<vmem>>, vector<1x96x64xbf16>
    %34 = vector.shape_cast %33 : vector<1x96x64xbf16> to vector<96x64xbf16>
    %cst_30 = arith.constant dense<0.000000e+00> : vector<64x64xf32>
    %35 = tpu.matmul %32, %34, %cst_30 {dimension_numbers = #tpu.dot_dimension_numbers<[1], [0], [0], [1], [0, 0, 1, 1], [], []>} : vector<64x96xbf16>, vector<96x64xbf16>, vector<64x64xf32> -> vector<64x64xf32>
    %c0_31 = arith.constant 0 : index
    %c0_32 = arith.constant 0 : index
    %36 = vector.load %arg7[%c0_31, %c0_32] : memref<12x64xf32, #tpu.memory_space<vmem>>, vector<1x64xf32>
    %37 = vector.broadcast %36 : vector<1x64xf32> to vector<64x64xf32>
    %38 = arith.addf %35, %37 : vector<64x64xf32>
    %39 = vector.extract_strided_slice %38 {offsets = [0, 0], sizes = [64, 32], strides = [1, 1]} : vector<64x64xf32> to vector<64x32xf32>
    %40 = arith.negf %39 : vector<64x32xf32>
    %41 = math.exp %40 : vector<64x32xf32>
    %cst_33 = arith.constant 1.000000e+00 : f32
    %42 = vector.broadcast %cst_33 : f32 to vector<64x32xf32>
    %43 = arith.addf %42, %41 : vector<64x32xf32>
    %44 = arith.divf %42, %43 : vector<64x32xf32>
    %45 = vector.extract_strided_slice %38 {offsets = [0, 32], sizes = [64, 32], strides = [1, 1]} : vector<64x64xf32> to vector<64x32xf32>
    %46 = arith.subf %45, %28 : vector<64x32xf32>
    %47 = arith.mulf %44, %46 : vector<64x32xf32>
    %48 = arith.addf %28, %47 : vector<64x32xf32>
    %49 = vector.extract_strided_slice %48 {offsets = [0, 0], sizes = [16, 32], strides = [1, 1]} : vector<64x32xf32> to vector<16x32xf32>
    %c32_34 = arith.constant 32 : index
    %c0_35 = arith.constant 0 : index
    %50 = vector.load %arg9[%c32_34, %c0_35] : memref<128x32xf32, #tpu.memory_space<vmem>>, vector<16x32xf32>
    tpu.vector_store %arg9[%c32_34, %c0_35], %49 {strides = array<i32>} : memref<128x32xf32, #tpu.memory_space<vmem>>, vector<16x32xf32>,
    %51 = vector.extract_strided_slice %48 {offsets = [48, 0], sizes = [16, 32], strides = [1, 1]} : vector<64x32xf32> to vector<16x32xf32>
    %c80_36 = arith.constant 80 : index
    %c0_37 = arith.constant 0 : index
    %52 = vector.load %arg9[%c80_36, %c0_37] : memref<128x32xf32, #tpu.memory_space<vmem>>, vector<16x32xf32>
    tpu.vector_store %arg9[%c80_36, %c0_37], %51 {strides = array<i32>} : memref<128x32xf32, #tpu.memory_space<vmem>>, vector<16x32xf32>,
    %c32_38 = arith.constant 32 : index
    %c0_39 = arith.constant 0 : index
    %53 = vector.load %arg9[%c32_38, %c0_39] : memref<128x32xf32, #tpu.memory_space<vmem>>, vector<64x32xf32>
    %c29 = arith.constant 29 : index
    %c0_40 = arith.constant 0 : index
    %54 = vector.load %arg9[%c29, %c0_40] : memref<128x32xf32, #tpu.memory_space<vmem>>, vector<64x32xf32>
    %c35 = arith.constant 35 : index
    %c0_41 = arith.constant 0 : index
    %55 = vector.load %arg9[%c35, %c0_41] : memref<128x32xf32, #tpu.memory_space<vmem>>, vector<64x32xf32>
    %56 = tpu.concatenate %54, %53, %55 in 1 : vector<64x32xf32>, vector<64x32xf32>, vector<64x32xf32> -> vector<64x96xf32>
    %57 = arith.truncf %56 : vector<64x96xf32> to vector<64x96xbf16>
    %c1_42 = arith.constant 1 : index
    %c0_43 = arith.constant 0 : index
    %c0_44 = arith.constant 0 : index
    %58 = vector.load %arg6[%c1_42, %c0_43, %c0_44] : memref<12x96x64xbf16, #tpu.memory_space<vmem>>, vector<1x96x64xbf16>
    %59 = vector.shape_cast %58 : vector<1x96x64xbf16> to vector<96x64xbf16>
    %cst_45 = arith.constant dense<0.000000e+00> : vector<64x64xf32>
    %60 = tpu.matmul %57, %59, %cst_45 {dimension_numbers = #tpu.dot_dimension_numbers<[1], [0], [0], [1], [0, 0, 1, 1], [], []>} : vector<64x96xbf16>, vector<96x64xbf16>, vector<64x64xf32> -> vector<64x64xf32>
    %c1_46 = arith.constant 1 : index
    %c0_47 = arith.constant 0 : index
    %61 = vector.load %arg7[%c1_46, %c0_47] : memref<12x64xf32, #tpu.memory_space<vmem>>, vector<1x64xf32>
    %62 = vector.broadcast %61 : vector<1x64xf32> to vector<64x64xf32>
    %63 = arith.addf %60, %62 : vector<64x64xf32>
    %64 = vector.extract_strided_slice %63 {offsets = [0, 0], sizes = [64, 32], strides = [1, 1]} : vector<64x64xf32> to vector<64x32xf32>
    %65 = arith.negf %64 : vector<64x32xf32>
    %66 = math.exp %65 : vector<64x32xf32>
    %cst_48 = arith.constant 1.000000e+00 : f32
    %67 = vector.broadcast %cst_48 : f32 to vector<64x32xf32>
    %68 = arith.addf %67, %66 : vector<64x32xf32>
    %69 = arith.divf %67, %68 : vector<64x32xf32>
    %70 = vector.extract_strided_slice %63 {offsets = [0, 32], sizes = [64, 32], strides = [1, 1]} : vector<64x64xf32> to vector<64x32xf32>
    %71 = arith.subf %70, %53 : vector<64x32xf32>
    %72 = arith.mulf %69, %71 : vector<64x32xf32>
    %73 = arith.addf %53, %72 : vector<64x32xf32>
    %74 = vector.extract_strided_slice %73 {offsets = [0, 0], sizes = [16, 32], strides = [1, 1]} : vector<64x32xf32> to vector<16x32xf32>
    %c32_49 = arith.constant 32 : index
    %c0_50 = arith.constant 0 : index
    %75 = vector.load %arg9[%c32_49, %c0_50] : memref<128x32xf32, #tpu.memory_space<vmem>>, vector<16x32xf32>
    tpu.vector_store %arg9[%c32_49, %c0_50], %74 {strides = array<i32>} : memref<128x32xf32, #tpu.memory_space<vmem>>, vector<16x32xf32>,
    %76 = vector.extract_strided_slice %73 {offsets = [48, 0], sizes = [16, 32], strides = [1, 1]} : vector<64x32xf32> to vector<16x32xf32>
    %c80_51 = arith.constant 80 : index
    %c0_52 = arith.constant 0 : index
    %77 = vector.load %arg9[%c80_51, %c0_52] : memref<128x32xf32, #tpu.memory_space<vmem>>, vector<16x32xf32>
    tpu.vector_store %arg9[%c80_51, %c0_52], %76 {strides = array<i32>} : memref<128x32xf32, #tpu.memory_space<vmem>>, vector<16x32xf32>,
    %c32_53 = arith.constant 32 : index
    %c0_54 = arith.constant 0 : index
    %78 = vector.load %arg9[%c32_53, %c0_54] : memref<128x32xf32, #tpu.memory_space<vmem>>, vector<64x32xf32>
    %c23 = arith.constant 23 : index
    %c0_55 = arith.constant 0 : index
    %79 = vector.load %arg9[%c23, %c0_55] : memref<128x32xf32, #tpu.memory_space<vmem>>, vector<64x32xf32>
    %c41 = arith.constant 41 : index
    %c0_56 = arith.constant 0 : index
    %80 = vector.load %arg9[%c41, %c0_56] : memref<128x32xf32, #tpu.memory_space<vmem>>, vector<64x32xf32>
    %81 = tpu.concatenate %79, %78, %80 in 1 : vector<64x32xf32>, vector<64x32xf32>, vector<64x32xf32> -> vector<64x96xf32>
    %82 = arith.truncf %81 : vector<64x96xf32> to vector<64x96xbf16>
    %c2 = arith.constant 2 : index
    %c0_57 = arith.constant 0 : index
    %c0_58 = arith.constant 0 : index
    %83 = vector.load %arg6[%c2, %c0_57, %c0_58] : memref<12x96x64xbf16, #tpu.memory_space<vmem>>, vector<1x96x64xbf16>
    %84 = vector.shape_cast %83 : vector<1x96x64xbf16> to vector<96x64xbf16>
    %cst_59 = arith.constant dense<0.000000e+00> : vector<64x64xf32>
    %85 = tpu.matmul %82, %84, %cst_59 {dimension_numbers = #tpu.dot_dimension_numbers<[1], [0], [0], [1], [0, 0, 1, 1], [], []>} : vector<64x96xbf16>, vector<96x64xbf16>, vector<64x64xf32> -> vector<64x64xf32>
    %c2_60 = arith.constant 2 : index
    %c0_61 = arith.constant 0 : index
    %86 = vector.load %arg7[%c2_60, %c0_61] : memref<12x64xf32, #tpu.memory_space<vmem>>, vector<1x64xf32>
    %87 = vector.broadcast %86 : vector<1x64xf32> to vector<64x64xf32>
    %88 = arith.addf %85, %87 : vector<64x64xf32>
    %89 = vector.extract_strided_slice %88 {offsets = [0, 0], sizes = [64, 32], strides = [1, 1]} : vector<64x64xf32> to vector<64x32xf32>
    %90 = arith.negf %89 : vector<64x32xf32>
    %91 = math.exp %90 : vector<64x32xf32>
    %cst_62 = arith.constant 1.000000e+00 : f32
    %92 = vector.broadcast %cst_62 : f32 to vector<64x32xf32>
    %93 = arith.addf %92, %91 : vector<64x32xf32>
    %94 = arith.divf %92, %93 : vector<64x32xf32>
    %95 = vector.extract_strided_slice %88 {offsets = [0, 32], sizes = [64, 32], strides = [1, 1]} : vector<64x64xf32> to vector<64x32xf32>
    %96 = arith.subf %95, %78 : vector<64x32xf32>
    %97 = arith.mulf %94, %96 : vector<64x32xf32>
    %98 = arith.addf %78, %97 : vector<64x32xf32>
    %99 = vector.extract_strided_slice %98 {offsets = [0, 0], sizes = [16, 32], strides = [1, 1]} : vector<64x32xf32> to vector<16x32xf32>
    %c32_63 = arith.constant 32 : index
    %c0_64 = arith.constant 0 : index
    %100 = vector.load %arg9[%c32_63, %c0_64] : memref<128x32xf32, #tpu.memory_space<vmem>>, vector<16x32xf32>
    tpu.vector_store %arg9[%c32_63, %c0_64], %99 {strides = array<i32>} : memref<128x32xf32, #tpu.memory_space<vmem>>, vector<16x32xf32>,
    %101 = vector.extract_strided_slice %98 {offsets = [48, 0], sizes = [16, 32], strides = [1, 1]} : vector<64x32xf32> to vector<16x32xf32>
    %c80_65 = arith.constant 80 : index
    %c0_66 = arith.constant 0 : index
    %102 = vector.load %arg9[%c80_65, %c0_66] : memref<128x32xf32, #tpu.memory_space<vmem>>, vector<16x32xf32>
    tpu.vector_store %arg9[%c80_65, %c0_66], %101 {strides = array<i32>} : memref<128x32xf32, #tpu.memory_space<vmem>>, vector<16x32xf32>,
    %c32_67 = arith.constant 32 : index
    %c0_68 = arith.constant 0 : index
    %103 = vector.load %arg9[%c32_67, %c0_68] : memref<128x32xf32, #tpu.memory_space<vmem>>, vector<64x32xf32>
    %c5 = arith.constant 5 : index
    %c0_69 = arith.constant 0 : index
    %104 = vector.load %arg9[%c5, %c0_69] : memref<128x32xf32, #tpu.memory_space<vmem>>, vector<64x32xf32>
    %c59 = arith.constant 59 : index
    %c0_70 = arith.constant 0 : index
    %105 = vector.load %arg9[%c59, %c0_70] : memref<128x32xf32, #tpu.memory_space<vmem>>, vector<64x32xf32>
    %106 = tpu.concatenate %104, %103, %105 in 1 : vector<64x32xf32>, vector<64x32xf32>, vector<64x32xf32> -> vector<64x96xf32>
    %107 = arith.truncf %106 : vector<64x96xf32> to vector<64x96xbf16>
    %c3 = arith.constant 3 : index
    %c0_71 = arith.constant 0 : index
    %c0_72 = arith.constant 0 : index
    %108 = vector.load %arg6[%c3, %c0_71, %c0_72] : memref<12x96x64xbf16, #tpu.memory_space<vmem>>, vector<1x96x64xbf16>
    %109 = vector.shape_cast %108 : vector<1x96x64xbf16> to vector<96x64xbf16>
    %cst_73 = arith.constant dense<0.000000e+00> : vector<64x64xf32>
    %110 = tpu.matmul %107, %109, %cst_73 {dimension_numbers = #tpu.dot_dimension_numbers<[1], [0], [0], [1], [0, 0, 1, 1], [], []>} : vector<64x96xbf16>, vector<96x64xbf16>, vector<64x64xf32> -> vector<64x64xf32>
    %c3_74 = arith.constant 3 : index
    %c0_75 = arith.constant 0 : index
    %111 = vector.load %arg7[%c3_74, %c0_75] : memref<12x64xf32, #tpu.memory_space<vmem>>, vector<1x64xf32>
    %112 = vector.broadcast %111 : vector<1x64xf32> to vector<64x64xf32>
    %113 = arith.addf %110, %112 : vector<64x64xf32>
    %114 = vector.extract_strided_slice %113 {offsets = [0, 0], sizes = [64, 32], strides = [1, 1]} : vector<64x64xf32> to vector<64x32xf32>
    %115 = arith.negf %114 : vector<64x32xf32>
    %116 = math.exp %115 : vector<64x32xf32>
    %cst_76 = arith.constant 1.000000e+00 : f32
    %117 = vector.broadcast %cst_76 : f32 to vector<64x32xf32>
    %118 = arith.addf %117, %116 : vector<64x32xf32>
    %119 = arith.divf %117, %118 : vector<64x32xf32>
    %120 = vector.extract_strided_slice %113 {offsets = [0, 32], sizes = [64, 32], strides = [1, 1]} : vector<64x64xf32> to vector<64x32xf32>
    %121 = arith.subf %120, %103 : vector<64x32xf32>
    %122 = arith.mulf %119, %121 : vector<64x32xf32>
    %123 = arith.addf %103, %122 : vector<64x32xf32>
    %124 = vector.extract_strided_slice %123 {offsets = [0, 0], sizes = [16, 32], strides = [1, 1]} : vector<64x32xf32> to vector<16x32xf32>
    %c32_77 = arith.constant 32 : index
    %c0_78 = arith.constant 0 : index
    %125 = vector.load %arg9[%c32_77, %c0_78] : memref<128x32xf32, #tpu.memory_space<vmem>>, vector<16x32xf32>
    tpu.vector_store %arg9[%c32_77, %c0_78], %124 {strides = array<i32>} : memref<128x32xf32, #tpu.memory_space<vmem>>, vector<16x32xf32>,
    %126 = vector.extract_strided_slice %123 {offsets = [48, 0], sizes = [16, 32], strides = [1, 1]} : vector<64x32xf32> to vector<16x32xf32>
    %c80_79 = arith.constant 80 : index
    %c0_80 = arith.constant 0 : index
    %127 = vector.load %arg9[%c80_79, %c0_80] : memref<128x32xf32, #tpu.memory_space<vmem>>, vector<16x32xf32>
    tpu.vector_store %arg9[%c80_79, %c0_80], %126 {strides = array<i32>} : memref<128x32xf32, #tpu.memory_space<vmem>>, vector<16x32xf32>,
    %c32_81 = arith.constant 32 : index
    %c0_82 = arith.constant 0 : index
    %128 = vector.load %arg9[%c32_81, %c0_82] : memref<128x32xf32, #tpu.memory_space<vmem>>, vector<64x32xf32>
    %c31_83 = arith.constant 31 : index
    %c0_84 = arith.constant 0 : index
    %129 = vector.load %arg9[%c31_83, %c0_84] : memref<128x32xf32, #tpu.memory_space<vmem>>, vector<64x32xf32>
    %c33_85 = arith.constant 33 : index
    %c0_86 = arith.constant 0 : index
    %130 = vector.load %arg9[%c33_85, %c0_86] : memref<128x32xf32, #tpu.memory_space<vmem>>, vector<64x32xf32>
    %131 = tpu.concatenate %129, %128, %130 in 1 : vector<64x32xf32>, vector<64x32xf32>, vector<64x32xf32> -> vector<64x96xf32>
    %132 = arith.truncf %131 : vector<64x96xf32> to vector<64x96xbf16>
    %c4 = arith.constant 4 : index
    %c0_87 = arith.constant 0 : index
    %c0_88 = arith.constant 0 : index
    %133 = vector.load %arg6[%c4, %c0_87, %c0_88] : memref<12x96x64xbf16, #tpu.memory_space<vmem>>, vector<1x96x64xbf16>
    %134 = vector.shape_cast %133 : vector<1x96x64xbf16> to vector<96x64xbf16>
    %cst_89 = arith.constant dense<0.000000e+00> : vector<64x64xf32>
    %135 = tpu.matmul %132, %134, %cst_89 {dimension_numbers = #tpu.dot_dimension_numbers<[1], [0], [0], [1], [0, 0, 1, 1], [], []>} : vector<64x96xbf16>, vector<96x64xbf16>, vector<64x64xf32> -> vector<64x64xf32>
    %c4_90 = arith.constant 4 : index
    %c0_91 = arith.constant 0 : index
    %136 = vector.load %arg7[%c4_90, %c0_91] : memref<12x64xf32, #tpu.memory_space<vmem>>, vector<1x64xf32>
    %137 = vector.broadcast %136 : vector<1x64xf32> to vector<64x64xf32>
    %138 = arith.addf %135, %137 : vector<64x64xf32>
    %139 = vector.extract_strided_slice %138 {offsets = [0, 0], sizes = [64, 32], strides = [1, 1]} : vector<64x64xf32> to vector<64x32xf32>
    %140 = arith.negf %139 : vector<64x32xf32>
    %141 = math.exp %140 : vector<64x32xf32>
    %cst_92 = arith.constant 1.000000e+00 : f32
    %142 = vector.broadcast %cst_92 : f32 to vector<64x32xf32>
    %143 = arith.addf %142, %141 : vector<64x32xf32>
    %144 = arith.divf %142, %143 : vector<64x32xf32>
    %145 = vector.extract_strided_slice %138 {offsets = [0, 32], sizes = [64, 32], strides = [1, 1]} : vector<64x64xf32> to vector<64x32xf32>
    %146 = arith.subf %145, %128 : vector<64x32xf32>
    %147 = arith.mulf %144, %146 : vector<64x32xf32>
    %148 = arith.addf %128, %147 : vector<64x32xf32>
    %149 = vector.extract_strided_slice %148 {offsets = [0, 0], sizes = [16, 32], strides = [1, 1]} : vector<64x32xf32> to vector<16x32xf32>
    %c32_93 = arith.constant 32 : index
    %c0_94 = arith.constant 0 : index
    %150 = vector.load %arg9[%c32_93, %c0_94] : memref<128x32xf32, #tpu.memory_space<vmem>>, vector<16x32xf32>
    tpu.vector_store %arg9[%c32_93, %c0_94], %149 {strides = array<i32>} : memref<128x32xf32, #tpu.memory_space<vmem>>, vector<16x32xf32>,
    %151 = vector.extract_strided_slice %148 {offsets = [48, 0], sizes = [16, 32], strides = [1, 1]} : vector<64x32xf32> to vector<16x32xf32>
    %c80_95 = arith.constant 80 : index
    %c0_96 = arith.constant 0 : index
    %152 = vector.load %arg9[%c80_95, %c0_96] : memref<128x32xf32, #tpu.memory_space<vmem>>, vector<16x32xf32>
    tpu.vector_store %arg9[%c80_95, %c0_96], %151 {strides = array<i32>} : memref<128x32xf32, #tpu.memory_space<vmem>>, vector<16x32xf32>,
    %c32_97 = arith.constant 32 : index
    %c0_98 = arith.constant 0 : index
    %153 = vector.load %arg9[%c32_97, %c0_98] : memref<128x32xf32, #tpu.memory_space<vmem>>, vector<64x32xf32>
    %c29_99 = arith.constant 29 : index
    %c0_100 = arith.constant 0 : index
    %154 = vector.load %arg9[%c29_99, %c0_100] : memref<128x32xf32, #tpu.memory_space<vmem>>, vector<64x32xf32>
    %c35_101 = arith.constant 35 : index
    %c0_102 = arith.constant 0 : index
    %155 = vector.load %arg9[%c35_101, %c0_102] : memref<128x32xf32, #tpu.memory_space<vmem>>, vector<64x32xf32>
    %156 = tpu.concatenate %154, %153, %155 in 1 : vector<64x32xf32>, vector<64x32xf32>, vector<64x32xf32> -> vector<64x96xf32>
    %157 = arith.truncf %156 : vector<64x96xf32> to vector<64x96xbf16>
    %c5_103 = arith.constant 5 : index
    %c0_104 = arith.constant 0 : index
    %c0_105 = arith.constant 0 : index
    %158 = vector.load %arg6[%c5_103, %c0_104, %c0_105] : memref<12x96x64xbf16, #tpu.memory_space<vmem>>, vector<1x96x64xbf16>
    %159 = vector.shape_cast %158 : vector<1x96x64xbf16> to vector<96x64xbf16>
    %cst_106 = arith.constant dense<0.000000e+00> : vector<64x64xf32>
    %160 = tpu.matmul %157, %159, %cst_106 {dimension_numbers = #tpu.dot_dimension_numbers<[1], [0], [0], [1], [0, 0, 1, 1], [], []>} : vector<64x96xbf16>, vector<96x64xbf16>, vector<64x64xf32> -> vector<64x64xf32>
    %c5_107 = arith.constant 5 : index
    %c0_108 = arith.constant 0 : index
    %161 = vector.load %arg7[%c5_107, %c0_108] : memref<12x64xf32, #tpu.memory_space<vmem>>, vector<1x64xf32>
    %162 = vector.broadcast %161 : vector<1x64xf32> to vector<64x64xf32>
    %163 = arith.addf %160, %162 : vector<64x64xf32>
    %164 = vector.extract_strided_slice %163 {offsets = [0, 0], sizes = [64, 32], strides = [1, 1]} : vector<64x64xf32> to vector<64x32xf32>
    %165 = arith.negf %164 : vector<64x32xf32>
    %166 = math.exp %165 : vector<64x32xf32>
    %cst_109 = arith.constant 1.000000e+00 : f32
    %167 = vector.broadcast %cst_109 : f32 to vector<64x32xf32>
    %168 = arith.addf %167, %166 : vector<64x32xf32>
    %169 = arith.divf %167, %168 : vector<64x32xf32>
    %170 = vector.extract_strided_slice %163 {offsets = [0, 32], sizes = [64, 32], strides = [1, 1]} : vector<64x64xf32> to vector<64x32xf32>
    %171 = arith.subf %170, %153 : vector<64x32xf32>
    %172 = arith.mulf %169, %171 : vector<64x32xf32>
    %173 = arith.addf %153, %172 : vector<64x32xf32>
    %174 = vector.extract_strided_slice %173 {offsets = [0, 0], sizes = [16, 32], strides = [1, 1]} : vector<64x32xf32> to vector<16x32xf32>
    %c32_110 = arith.constant 32 : index
    %c0_111 = arith.constant 0 : index
    %175 = vector.load %arg9[%c32_110, %c0_111] : memref<128x32xf32, #tpu.memory_space<vmem>>, vector<16x32xf32>
    tpu.vector_store %arg9[%c32_110, %c0_111], %174 {strides = array<i32>} : memref<128x32xf32, #tpu.memory_space<vmem>>, vector<16x32xf32>,
    %176 = vector.extract_strided_slice %173 {offsets = [48, 0], sizes = [16, 32], strides = [1, 1]} : vector<64x32xf32> to vector<16x32xf32>
    %c80_112 = arith.constant 80 : index
    %c0_113 = arith.constant 0 : index
    %177 = vector.load %arg9[%c80_112, %c0_113] : memref<128x32xf32, #tpu.memory_space<vmem>>, vector<16x32xf32>
    tpu.vector_store %arg9[%c80_112, %c0_113], %176 {strides = array<i32>} : memref<128x32xf32, #tpu.memory_space<vmem>>, vector<16x32xf32>,
    %c32_114 = arith.constant 32 : index
    %c0_115 = arith.constant 0 : index
    %178 = vector.load %arg9[%c32_114, %c0_115] : memref<128x32xf32, #tpu.memory_space<vmem>>, vector<64x32xf32>
    %c23_116 = arith.constant 23 : index
    %c0_117 = arith.constant 0 : index
    %179 = vector.load %arg9[%c23_116, %c0_117] : memref<128x32xf32, #tpu.memory_space<vmem>>, vector<64x32xf32>
    %c41_118 = arith.constant 41 : index
    %c0_119 = arith.constant 0 : index
    %180 = vector.load %arg9[%c41_118, %c0_119] : memref<128x32xf32, #tpu.memory_space<vmem>>, vector<64x32xf32>
    %181 = tpu.concatenate %179, %178, %180 in 1 : vector<64x32xf32>, vector<64x32xf32>, vector<64x32xf32> -> vector<64x96xf32>
    %182 = arith.truncf %181 : vector<64x96xf32> to vector<64x96xbf16>
    %c6 = arith.constant 6 : index
    %c0_120 = arith.constant 0 : index
    %c0_121 = arith.constant 0 : index
    %183 = vector.load %arg6[%c6, %c0_120, %c0_121] : memref<12x96x64xbf16, #tpu.memory_space<vmem>>, vector<1x96x64xbf16>
    %184 = vector.shape_cast %183 : vector<1x96x64xbf16> to vector<96x64xbf16>
    %cst_122 = arith.constant dense<0.000000e+00> : vector<64x64xf32>
    %185 = tpu.matmul %182, %184, %cst_122 {dimension_numbers = #tpu.dot_dimension_numbers<[1], [0], [0], [1], [0, 0, 1, 1], [], []>} : vector<64x96xbf16>, vector<96x64xbf16>, vector<64x64xf32> -> vector<64x64xf32>
    %c6_123 = arith.constant 6 : index
    %c0_124 = arith.constant 0 : index
    %186 = vector.load %arg7[%c6_123, %c0_124] : memref<12x64xf32, #tpu.memory_space<vmem>>, vector<1x64xf32>
    %187 = vector.broadcast %186 : vector<1x64xf32> to vector<64x64xf32>
    %188 = arith.addf %185, %187 : vector<64x64xf32>
    %189 = vector.extract_strided_slice %188 {offsets = [0, 0], sizes = [64, 32], strides = [1, 1]} : vector<64x64xf32> to vector<64x32xf32>
    %190 = arith.negf %189 : vector<64x32xf32>
    %191 = math.exp %190 : vector<64x32xf32>
    %cst_125 = arith.constant 1.000000e+00 : f32
    %192 = vector.broadcast %cst_125 : f32 to vector<64x32xf32>
    %193 = arith.addf %192, %191 : vector<64x32xf32>
    %194 = arith.divf %192, %193 : vector<64x32xf32>
    %195 = vector.extract_strided_slice %188 {offsets = [0, 32], sizes = [64, 32], strides = [1, 1]} : vector<64x64xf32> to vector<64x32xf32>
    %196 = arith.subf %195, %178 : vector<64x32xf32>
    %197 = arith.mulf %194, %196 : vector<64x32xf32>
    %198 = arith.addf %178, %197 : vector<64x32xf32>
    %199 = vector.extract_strided_slice %198 {offsets = [0, 0], sizes = [16, 32], strides = [1, 1]} : vector<64x32xf32> to vector<16x32xf32>
    %c32_126 = arith.constant 32 : index
    %c0_127 = arith.constant 0 : index
    %200 = vector.load %arg9[%c32_126, %c0_127] : memref<128x32xf32, #tpu.memory_space<vmem>>, vector<16x32xf32>
    tpu.vector_store %arg9[%c32_126, %c0_127], %199 {strides = array<i32>} : memref<128x32xf32, #tpu.memory_space<vmem>>, vector<16x32xf32>,
    %201 = vector.extract_strided_slice %198 {offsets = [48, 0], sizes = [16, 32], strides = [1, 1]} : vector<64x32xf32> to vector<16x32xf32>
    %c80_128 = arith.constant 80 : index
    %c0_129 = arith.constant 0 : index
    %202 = vector.load %arg9[%c80_128, %c0_129] : memref<128x32xf32, #tpu.memory_space<vmem>>, vector<16x32xf32>
    tpu.vector_store %arg9[%c80_128, %c0_129], %201 {strides = array<i32>} : memref<128x32xf32, #tpu.memory_space<vmem>>, vector<16x32xf32>,
    %c32_130 = arith.constant 32 : index
    %c0_131 = arith.constant 0 : index
    %203 = vector.load %arg9[%c32_130, %c0_131] : memref<128x32xf32, #tpu.memory_space<vmem>>, vector<64x32xf32>
    %c5_132 = arith.constant 5 : index
    %c0_133 = arith.constant 0 : index
    %204 = vector.load %arg9[%c5_132, %c0_133] : memref<128x32xf32, #tpu.memory_space<vmem>>, vector<64x32xf32>
    %c59_134 = arith.constant 59 : index
    %c0_135 = arith.constant 0 : index
    %205 = vector.load %arg9[%c59_134, %c0_135] : memref<128x32xf32, #tpu.memory_space<vmem>>, vector<64x32xf32>
    %206 = tpu.concatenate %204, %203, %205 in 1 : vector<64x32xf32>, vector<64x32xf32>, vector<64x32xf32> -> vector<64x96xf32>
    %207 = arith.truncf %206 : vector<64x96xf32> to vector<64x96xbf16>
    %c7 = arith.constant 7 : index
    %c0_136 = arith.constant 0 : index
    %c0_137 = arith.constant 0 : index
    %208 = vector.load %arg6[%c7, %c0_136, %c0_137] : memref<12x96x64xbf16, #tpu.memory_space<vmem>>, vector<1x96x64xbf16>
    %209 = vector.shape_cast %208 : vector<1x96x64xbf16> to vector<96x64xbf16>
    %cst_138 = arith.constant dense<0.000000e+00> : vector<64x64xf32>
    %210 = tpu.matmul %207, %209, %cst_138 {dimension_numbers = #tpu.dot_dimension_numbers<[1], [0], [0], [1], [0, 0, 1, 1], [], []>} : vector<64x96xbf16>, vector<96x64xbf16>, vector<64x64xf32> -> vector<64x64xf32>
    %c7_139 = arith.constant 7 : index
    %c0_140 = arith.constant 0 : index
    %211 = vector.load %arg7[%c7_139, %c0_140] : memref<12x64xf32, #tpu.memory_space<vmem>>, vector<1x64xf32>
    %212 = vector.broadcast %211 : vector<1x64xf32> to vector<64x64xf32>
    %213 = arith.addf %210, %212 : vector<64x64xf32>
    %214 = vector.extract_strided_slice %213 {offsets = [0, 0], sizes = [64, 32], strides = [1, 1]} : vector<64x64xf32> to vector<64x32xf32>
    %215 = arith.negf %214 : vector<64x32xf32>
    %216 = math.exp %215 : vector<64x32xf32>
    %cst_141 = arith.constant 1.000000e+00 : f32
    %217 = vector.broadcast %cst_141 : f32 to vector<64x32xf32>
    %218 = arith.addf %217, %216 : vector<64x32xf32>
    %219 = arith.divf %217, %218 : vector<64x32xf32>
    %220 = vector.extract_strided_slice %213 {offsets = [0, 32], sizes = [64, 32], strides = [1, 1]} : vector<64x64xf32> to vector<64x32xf32>
    %221 = arith.subf %220, %203 : vector<64x32xf32>
    %222 = arith.mulf %219, %221 : vector<64x32xf32>
    %223 = arith.addf %203, %222 : vector<64x32xf32>
    %224 = vector.extract_strided_slice %223 {offsets = [0, 0], sizes = [16, 32], strides = [1, 1]} : vector<64x32xf32> to vector<16x32xf32>
    %c32_142 = arith.constant 32 : index
    %c0_143 = arith.constant 0 : index
    %225 = vector.load %arg9[%c32_142, %c0_143] : memref<128x32xf32, #tpu.memory_space<vmem>>, vector<16x32xf32>
    tpu.vector_store %arg9[%c32_142, %c0_143], %224 {strides = array<i32>} : memref<128x32xf32, #tpu.memory_space<vmem>>, vector<16x32xf32>,
    %226 = vector.extract_strided_slice %223 {offsets = [48, 0], sizes = [16, 32], strides = [1, 1]} : vector<64x32xf32> to vector<16x32xf32>
    %c80_144 = arith.constant 80 : index
    %c0_145 = arith.constant 0 : index
    %227 = vector.load %arg9[%c80_144, %c0_145] : memref<128x32xf32, #tpu.memory_space<vmem>>, vector<16x32xf32>
    tpu.vector_store %arg9[%c80_144, %c0_145], %226 {strides = array<i32>} : memref<128x32xf32, #tpu.memory_space<vmem>>, vector<16x32xf32>,
    %c32_146 = arith.constant 32 : index
    %c0_147 = arith.constant 0 : index
    %228 = vector.load %arg9[%c32_146, %c0_147] : memref<128x32xf32, #tpu.memory_space<vmem>>, vector<64x32xf32>
    %c31_148 = arith.constant 31 : index
    %c0_149 = arith.constant 0 : index
    %229 = vector.load %arg9[%c31_148, %c0_149] : memref<128x32xf32, #tpu.memory_space<vmem>>, vector<64x32xf32>
    %c33_150 = arith.constant 33 : index
    %c0_151 = arith.constant 0 : index
    %230 = vector.load %arg9[%c33_150, %c0_151] : memref<128x32xf32, #tpu.memory_space<vmem>>, vector<64x32xf32>
    %231 = tpu.concatenate %229, %228, %230 in 1 : vector<64x32xf32>, vector<64x32xf32>, vector<64x32xf32> -> vector<64x96xf32>
    %232 = arith.truncf %231 : vector<64x96xf32> to vector<64x96xbf16>
    %c8 = arith.constant 8 : index
    %c0_152 = arith.constant 0 : index
    %c0_153 = arith.constant 0 : index
    %233 = vector.load %arg6[%c8, %c0_152, %c0_153] : memref<12x96x64xbf16, #tpu.memory_space<vmem>>, vector<1x96x64xbf16>
    %234 = vector.shape_cast %233 : vector<1x96x64xbf16> to vector<96x64xbf16>
    %cst_154 = arith.constant dense<0.000000e+00> : vector<64x64xf32>
    %235 = tpu.matmul %232, %234, %cst_154 {dimension_numbers = #tpu.dot_dimension_numbers<[1], [0], [0], [1], [0, 0, 1, 1], [], []>} : vector<64x96xbf16>, vector<96x64xbf16>, vector<64x64xf32> -> vector<64x64xf32>
    %c8_155 = arith.constant 8 : index
    %c0_156 = arith.constant 0 : index
    %236 = vector.load %arg7[%c8_155, %c0_156] : memref<12x64xf32, #tpu.memory_space<vmem>>, vector<1x64xf32>
    %237 = vector.broadcast %236 : vector<1x64xf32> to vector<64x64xf32>
    %238 = arith.addf %235, %237 : vector<64x64xf32>
    %239 = vector.extract_strided_slice %238 {offsets = [0, 0], sizes = [64, 32], strides = [1, 1]} : vector<64x64xf32> to vector<64x32xf32>
    %240 = arith.negf %239 : vector<64x32xf32>
    %241 = math.exp %240 : vector<64x32xf32>
    %cst_157 = arith.constant 1.000000e+00 : f32
    %242 = vector.broadcast %cst_157 : f32 to vector<64x32xf32>
    %243 = arith.addf %242, %241 : vector<64x32xf32>
    %244 = arith.divf %242, %243 : vector<64x32xf32>
    %245 = vector.extract_strided_slice %238 {offsets = [0, 32], sizes = [64, 32], strides = [1, 1]} : vector<64x64xf32> to vector<64x32xf32>
    %246 = arith.subf %245, %228 : vector<64x32xf32>
    %247 = arith.mulf %244, %246 : vector<64x32xf32>
    %248 = arith.addf %228, %247 : vector<64x32xf32>
    %249 = vector.extract_strided_slice %248 {offsets = [0, 0], sizes = [16, 32], strides = [1, 1]} : vector<64x32xf32> to vector<16x32xf32>
    %c32_158 = arith.constant 32 : index
    %c0_159 = arith.constant 0 : index
    %250 = vector.load %arg9[%c32_158, %c0_159] : memref<128x32xf32, #tpu.memory_space<vmem>>, vector<16x32xf32>
    tpu.vector_store %arg9[%c32_158, %c0_159], %249 {strides = array<i32>} : memref<128x32xf32, #tpu.memory_space<vmem>>, vector<16x32xf32>,
    %251 = vector.extract_strided_slice %248 {offsets = [48, 0], sizes = [16, 32], strides = [1, 1]} : vector<64x32xf32> to vector<16x32xf32>
    %c80_160 = arith.constant 80 : index
    %c0_161 = arith.constant 0 : index
    %252 = vector.load %arg9[%c80_160, %c0_161] : memref<128x32xf32, #tpu.memory_space<vmem>>, vector<16x32xf32>
    tpu.vector_store %arg9[%c80_160, %c0_161], %251 {strides = array<i32>} : memref<128x32xf32, #tpu.memory_space<vmem>>, vector<16x32xf32>,
    %c32_162 = arith.constant 32 : index
    %c0_163 = arith.constant 0 : index
    %253 = vector.load %arg9[%c32_162, %c0_163] : memref<128x32xf32, #tpu.memory_space<vmem>>, vector<64x32xf32>
    %c31_164 = arith.constant 31 : index
    %c0_165 = arith.constant 0 : index
    %254 = vector.load %arg9[%c31_164, %c0_165] : memref<128x32xf32, #tpu.memory_space<vmem>>, vector<64x32xf32>
    %c33_166 = arith.constant 33 : index
    %c0_167 = arith.constant 0 : index
    %255 = vector.load %arg9[%c33_166, %c0_167] : memref<128x32xf32, #tpu.memory_space<vmem>>, vector<64x32xf32>
    %256 = tpu.concatenate %254, %253, %255 in 1 : vector<64x32xf32>, vector<64x32xf32>, vector<64x32xf32> -> vector<64x96xf32>
    %257 = arith.truncf %256 : vector<64x96xf32> to vector<64x96xbf16>
    %c9 = arith.constant 9 : index
    %c0_168 = arith.constant 0 : index
    %c0_169 = arith.constant 0 : index
    %258 = vector.load %arg6[%c9, %c0_168, %c0_169] : memref<12x96x64xbf16, #tpu.memory_space<vmem>>, vector<1x96x64xbf16>
    %259 = vector.shape_cast %258 : vector<1x96x64xbf16> to vector<96x64xbf16>
    %cst_170 = arith.constant dense<0.000000e+00> : vector<64x64xf32>
    %260 = tpu.matmul %257, %259, %cst_170 {dimension_numbers = #tpu.dot_dimension_numbers<[1], [0], [0], [1], [0, 0, 1, 1], [], []>} : vector<64x96xbf16>, vector<96x64xbf16>, vector<64x64xf32> -> vector<64x64xf32>
    %c9_171 = arith.constant 9 : index
    %c0_172 = arith.constant 0 : index
    %261 = vector.load %arg7[%c9_171, %c0_172] : memref<12x64xf32, #tpu.memory_space<vmem>>, vector<1x64xf32>
    %262 = vector.broadcast %261 : vector<1x64xf32> to vector<64x64xf32>
    %263 = arith.addf %260, %262 : vector<64x64xf32>
    %264 = vector.extract_strided_slice %263 {offsets = [0, 0], sizes = [64, 32], strides = [1, 1]} : vector<64x64xf32> to vector<64x32xf32>
    %265 = arith.negf %264 : vector<64x32xf32>
    %266 = math.exp %265 : vector<64x32xf32>
    %cst_173 = arith.constant 1.000000e+00 : f32
    %267 = vector.broadcast %cst_173 : f32 to vector<64x32xf32>
    %268 = arith.addf %267, %266 : vector<64x32xf32>
    %269 = arith.divf %267, %268 : vector<64x32xf32>
    %270 = vector.extract_strided_slice %263 {offsets = [0, 32], sizes = [64, 32], strides = [1, 1]} : vector<64x64xf32> to vector<64x32xf32>
    %271 = arith.subf %270, %253 : vector<64x32xf32>
    %272 = arith.mulf %269, %271 : vector<64x32xf32>
    %273 = arith.addf %253, %272 : vector<64x32xf32>
    %274 = vector.extract_strided_slice %273 {offsets = [0, 0], sizes = [16, 32], strides = [1, 1]} : vector<64x32xf32> to vector<16x32xf32>
    %c32_174 = arith.constant 32 : index
    %c0_175 = arith.constant 0 : index
    %275 = vector.load %arg9[%c32_174, %c0_175] : memref<128x32xf32, #tpu.memory_space<vmem>>, vector<16x32xf32>
    tpu.vector_store %arg9[%c32_174, %c0_175], %274 {strides = array<i32>} : memref<128x32xf32, #tpu.memory_space<vmem>>, vector<16x32xf32>,
    %276 = vector.extract_strided_slice %273 {offsets = [48, 0], sizes = [16, 32], strides = [1, 1]} : vector<64x32xf32> to vector<16x32xf32>
    %c80_176 = arith.constant 80 : index
    %c0_177 = arith.constant 0 : index
    %277 = vector.load %arg9[%c80_176, %c0_177] : memref<128x32xf32, #tpu.memory_space<vmem>>, vector<16x32xf32>
    tpu.vector_store %arg9[%c80_176, %c0_177], %276 {strides = array<i32>} : memref<128x32xf32, #tpu.memory_space<vmem>>, vector<16x32xf32>,
    %c32_178 = arith.constant 32 : index
    %c0_179 = arith.constant 0 : index
    %278 = vector.load %arg9[%c32_178, %c0_179] : memref<128x32xf32, #tpu.memory_space<vmem>>, vector<64x32xf32>
    %c31_180 = arith.constant 31 : index
    %c0_181 = arith.constant 0 : index
    %279 = vector.load %arg9[%c31_180, %c0_181] : memref<128x32xf32, #tpu.memory_space<vmem>>, vector<64x32xf32>
    %c33_182 = arith.constant 33 : index
    %c0_183 = arith.constant 0 : index
    %280 = vector.load %arg9[%c33_182, %c0_183] : memref<128x32xf32, #tpu.memory_space<vmem>>, vector<64x32xf32>
    %281 = tpu.concatenate %279, %278, %280 in 1 : vector<64x32xf32>, vector<64x32xf32>, vector<64x32xf32> -> vector<64x96xf32>
    %282 = arith.truncf %281 : vector<64x96xf32> to vector<64x96xbf16>
    %c10 = arith.constant 10 : index
    %c0_184 = arith.constant 0 : index
    %c0_185 = arith.constant 0 : index
    %283 = vector.load %arg6[%c10, %c0_184, %c0_185] : memref<12x96x64xbf16, #tpu.memory_space<vmem>>, vector<1x96x64xbf16>
    %284 = vector.shape_cast %283 : vector<1x96x64xbf16> to vector<96x64xbf16>
    %cst_186 = arith.constant dense<0.000000e+00> : vector<64x64xf32>
    %285 = tpu.matmul %282, %284, %cst_186 {dimension_numbers = #tpu.dot_dimension_numbers<[1], [0], [0], [1], [0, 0, 1, 1], [], []>} : vector<64x96xbf16>, vector<96x64xbf16>, vector<64x64xf32> -> vector<64x64xf32>
    %c10_187 = arith.constant 10 : index
    %c0_188 = arith.constant 0 : index
    %286 = vector.load %arg7[%c10_187, %c0_188] : memref<12x64xf32, #tpu.memory_space<vmem>>, vector<1x64xf32>
    %287 = vector.broadcast %286 : vector<1x64xf32> to vector<64x64xf32>
    %288 = arith.addf %285, %287 : vector<64x64xf32>
    %289 = vector.extract_strided_slice %288 {offsets = [0, 0], sizes = [64, 32], strides = [1, 1]} : vector<64x64xf32> to vector<64x32xf32>
    %290 = arith.negf %289 : vector<64x32xf32>
    %291 = math.exp %290 : vector<64x32xf32>
    %cst_189 = arith.constant 1.000000e+00 : f32
    %292 = vector.broadcast %cst_189 : f32 to vector<64x32xf32>
    %293 = arith.addf %292, %291 : vector<64x32xf32>
    %294 = arith.divf %292, %293 : vector<64x32xf32>
    %295 = vector.extract_strided_slice %288 {offsets = [0, 32], sizes = [64, 32], strides = [1, 1]} : vector<64x64xf32> to vector<64x32xf32>
    %296 = arith.subf %295, %278 : vector<64x32xf32>
    %297 = arith.mulf %294, %296 : vector<64x32xf32>
    %298 = arith.addf %278, %297 : vector<64x32xf32>
    %299 = vector.extract_strided_slice %298 {offsets = [0, 0], sizes = [16, 32], strides = [1, 1]} : vector<64x32xf32> to vector<16x32xf32>
    %c32_190 = arith.constant 32 : index
    %c0_191 = arith.constant 0 : index
    %300 = vector.load %arg9[%c32_190, %c0_191] : memref<128x32xf32, #tpu.memory_space<vmem>>, vector<16x32xf32>
    tpu.vector_store %arg9[%c32_190, %c0_191], %299 {strides = array<i32>} : memref<128x32xf32, #tpu.memory_space<vmem>>, vector<16x32xf32>,
    %301 = vector.extract_strided_slice %298 {offsets = [48, 0], sizes = [16, 32], strides = [1, 1]} : vector<64x32xf32> to vector<16x32xf32>
    %c80_192 = arith.constant 80 : index
    %c0_193 = arith.constant 0 : index
    %302 = vector.load %arg9[%c80_192, %c0_193] : memref<128x32xf32, #tpu.memory_space<vmem>>, vector<16x32xf32>
    tpu.vector_store %arg9[%c80_192, %c0_193], %301 {strides = array<i32>} : memref<128x32xf32, #tpu.memory_space<vmem>>, vector<16x32xf32>,
    %c32_194 = arith.constant 32 : index
    %c0_195 = arith.constant 0 : index
    %303 = vector.load %arg9[%c32_194, %c0_195] : memref<128x32xf32, #tpu.memory_space<vmem>>, vector<64x32xf32>
    %c31_196 = arith.constant 31 : index
    %c0_197 = arith.constant 0 : index
    %304 = vector.load %arg9[%c31_196, %c0_197] : memref<128x32xf32, #tpu.memory_space<vmem>>, vector<64x32xf32>
    %c33_198 = arith.constant 33 : index
    %c0_199 = arith.constant 0 : index
    %305 = vector.load %arg9[%c33_198, %c0_199] : memref<128x32xf32, #tpu.memory_space<vmem>>, vector<64x32xf32>
    %306 = tpu.concatenate %304, %303, %305 in 1 : vector<64x32xf32>, vector<64x32xf32>, vector<64x32xf32> -> vector<64x96xf32>
    %307 = arith.truncf %306 : vector<64x96xf32> to vector<64x96xbf16>
    %c11 = arith.constant 11 : index
    %c0_200 = arith.constant 0 : index
    %c0_201 = arith.constant 0 : index
    %308 = vector.load %arg6[%c11, %c0_200, %c0_201] : memref<12x96x64xbf16, #tpu.memory_space<vmem>>, vector<1x96x64xbf16>
    %309 = vector.shape_cast %308 : vector<1x96x64xbf16> to vector<96x64xbf16>
    %cst_202 = arith.constant dense<0.000000e+00> : vector<64x64xf32>
    %310 = tpu.matmul %307, %309, %cst_202 {dimension_numbers = #tpu.dot_dimension_numbers<[1], [0], [0], [1], [0, 0, 1, 1], [], []>} : vector<64x96xbf16>, vector<96x64xbf16>, vector<64x64xf32> -> vector<64x64xf32>
    %c11_203 = arith.constant 11 : index
    %c0_204 = arith.constant 0 : index
    %311 = vector.load %arg7[%c11_203, %c0_204] : memref<12x64xf32, #tpu.memory_space<vmem>>, vector<1x64xf32>
    %312 = vector.broadcast %311 : vector<1x64xf32> to vector<64x64xf32>
    %313 = arith.addf %310, %312 : vector<64x64xf32>
    %314 = vector.extract_strided_slice %313 {offsets = [0, 0], sizes = [64, 32], strides = [1, 1]} : vector<64x64xf32> to vector<64x32xf32>
    %315 = arith.negf %314 : vector<64x32xf32>
    %316 = math.exp %315 : vector<64x32xf32>
    %cst_205 = arith.constant 1.000000e+00 : f32
    %317 = vector.broadcast %cst_205 : f32 to vector<64x32xf32>
    %318 = arith.addf %317, %316 : vector<64x32xf32>
    %319 = arith.divf %317, %318 : vector<64x32xf32>
    %320 = vector.extract_strided_slice %313 {offsets = [0, 32], sizes = [64, 32], strides = [1, 1]} : vector<64x64xf32> to vector<64x32xf32>
    %321 = arith.subf %320, %303 : vector<64x32xf32>
    %322 = arith.mulf %319, %321 : vector<64x32xf32>
    %323 = arith.addf %303, %322 : vector<64x32xf32>
    %324 = vector.extract_strided_slice %323 {offsets = [0, 0], sizes = [16, 32], strides = [1, 1]} : vector<64x32xf32> to vector<16x32xf32>
    %c32_206 = arith.constant 32 : index
    %c0_207 = arith.constant 0 : index
    %325 = vector.load %arg9[%c32_206, %c0_207] : memref<128x32xf32, #tpu.memory_space<vmem>>, vector<16x32xf32>
    tpu.vector_store %arg9[%c32_206, %c0_207], %324 {strides = array<i32>} : memref<128x32xf32, #tpu.memory_space<vmem>>, vector<16x32xf32>,
    %326 = vector.extract_strided_slice %323 {offsets = [48, 0], sizes = [16, 32], strides = [1, 1]} : vector<64x32xf32> to vector<16x32xf32>
    %c80_208 = arith.constant 80 : index
    %c0_209 = arith.constant 0 : index
    %327 = vector.load %arg9[%c80_208, %c0_209] : memref<128x32xf32, #tpu.memory_space<vmem>>, vector<16x32xf32>
    tpu.vector_store %arg9[%c80_208, %c0_209], %326 {strides = array<i32>} : memref<128x32xf32, #tpu.memory_space<vmem>>, vector<16x32xf32>,
    %c32_210 = arith.constant 32 : index
    %c0_211 = arith.constant 0 : index
    %328 = vector.load %arg9[%c32_210, %c0_211] : memref<128x32xf32, #tpu.memory_space<vmem>>, vector<16x32xf32>
    %c0_212 = arith.constant 0 : index
    %c0_213 = arith.constant 0 : index
    %c0_214 = arith.constant 0 : index
    %329 = vector.load %arg8[%c0_212, %c0_213, %c0_214] : memref<2x16x32xf32, #tpu.memory_space<vmem>>, vector<1x16x32xf32>
    %330 = vector.shape_cast %329 : vector<1x16x32xf32> to vector<16x32xf32>
    %331 = vector.shape_cast %328 : vector<16x32xf32> to vector<1x16x32xf32>
    tpu.vector_store %arg8[%c0_212, %c0_213, %c0_214], %331 {strides = array<i32>} : memref<2x16x32xf32, #tpu.memory_space<vmem>>, vector<1x16x32xf32>,
    %c80_215 = arith.constant 80 : index
    %c0_216 = arith.constant 0 : index
    %332 = vector.load %arg9[%c80_215, %c0_216] : memref<128x32xf32, #tpu.memory_space<vmem>>, vector<16x32xf32>
    %c1_217 = arith.constant 1 : index
    %c0_218 = arith.constant 0 : index
    %c0_219 = arith.constant 0 : index
    %333 = vector.load %arg8[%c1_217, %c0_218, %c0_219] : memref<2x16x32xf32, #tpu.memory_space<vmem>>, vector<1x16x32xf32>
    %334 = vector.shape_cast %333 : vector<1x16x32xf32> to vector<16x32xf32>
    %335 = vector.shape_cast %332 : vector<16x32xf32> to vector<1x16x32xf32>
    tpu.vector_store %arg8[%c1_217, %c0_218, %c0_219], %335 {strides = array<i32>} : memref<2x16x32xf32, #tpu.memory_space<vmem>>, vector<1x16x32xf32>,
    return
  }
  func.func @transform_0(%arg0: i32) -> (i32, i32, i32) {
    %c0_i32 = arith.constant 0 : i32
    %c0_i32_0 = arith.constant 0 : i32
    %c0_i32_1 = arith.constant 0 : i32
    return %arg0, %c0_i32, %c0_i32_0 : i32, i32, i32
  }
  func.func @transform_1(%arg0: i32) -> (i32, i32) {
    %c0_i32 = arith.constant 0 : i32
    %c0_i32_0 = arith.constant 0 : i32
    %c0_i32_1 = arith.constant 0 : i32
    return %c0_i32, %c0_i32_0 : i32, i32
  }
  func.func @transform_2(%arg0: i32) -> (i32, i32) {
    %c0_i32 = arith.constant 0 : i32
    %c0_i32_0 = arith.constant 0 : i32
    %c0_i32_1 = arith.constant 0 : i32
    return %c0_i32, %c0_i32_0 : i32, i32
  }
  func.func @transform_3(%arg0: i32) -> (i32, i32) {
    %c0_i32 = arith.constant 0 : i32
    %c0_i32_0 = arith.constant 0 : i32
    %c0_i32_1 = arith.constant 0 : i32
    return %c0_i32, %c0_i32_0 : i32, i32
  }
  func.func @transform_4(%arg0: i32) -> (i32, i32) {
    %c0_i32 = arith.constant 0 : i32
    %c0_i32_0 = arith.constant 0 : i32
    %c0_i32_1 = arith.constant 0 : i32
    return %c0_i32, %c0_i32_0 : i32, i32
  }
  func.func @transform_5(%arg0: i32) -> (i32, i32, i32) {
    %c0_i32 = arith.constant 0 : i32
    %c0_i32_0 = arith.constant 0 : i32
    %c0_i32_1 = arith.constant 0 : i32
    %c0_i32_2 = arith.constant 0 : i32
    return %c0_i32, %c0_i32_0, %c0_i32_1 : i32, i32, i32
  }
  func.func @transform_6(%arg0: i32) -> (i32, i32) {
    %c0_i32 = arith.constant 0 : i32
    %c0_i32_0 = arith.constant 0 : i32
    %c0_i32_1 = arith.constant 0 : i32
    return %c0_i32, %c0_i32_0 : i32, i32
  }
  func.func @transform_7(%arg0: i32) -> (i32, i32, i32) {
    %c0_i32 = arith.constant 0 : i32
    %c0_i32_0 = arith.constant 0 : i32
    %c0_i32_1 = arith.constant 0 : i32
    return %arg0, %c0_i32, %c0_i32_0 : i32, i32, i32
  }
}

</mosaic_0001>

<llo_original>
// kernel: tpu_custom_call.1
$region0: #{tpu_custom_call.1}
  #allocation0 [shape = 'u32[]', space=smem, size = 0x4, offset = 0x4, fixed_abs, tag = 'smem constant byte address 0x4 - core index']
  #allocation1 [shape = 'u32[144,128]{1,0:T(1,128)}', space=vmem, size = 0x12000, scoped, tag = 'internal scratch']
  #allocation2 [shape = 'f32[128,32]{1,0:T(8,128)}', space=vmem, size = 0x10000, scoped, tag = 'scratch operand']
  %s0 = inlined_call_operand.vmem [shape: bf16[2,16,16], index: 0, kind: input, shape index: {}]
  %s1 = inlined_call_operand.vmem [shape: bf16[16,32], index: 1, kind: input, shape index: {}]
  %s2 = inlined_call_operand.vmem [shape: f32[1,32], index: 2, kind: input, shape index: {}]
  %s3 = inlined_call_operand.vmem [shape: bf16[32,32], index: 3, kind: input, shape index: {}]
  %s4 = inlined_call_operand.vmem [shape: f32[1,32], index: 4, kind: input, shape index: {}]
  %s5 = inlined_call_operand.vmem [shape: bf16[12,96,64], index: 5, kind: input, shape index: {}]
  %s6 = inlined_call_operand.vmem [shape: f32[12,64], index: 6, kind: input, shape index: {}]
  %s7 = inlined_call_operand.hbm [shape: f32[2,16,32], index: 7, kind: output, shape index: {}]
  %s8 = sld [smem:[#allocation0]]
  $region38: #{tpu_custom_call.1} parent=0
    _
  %s10 = ssub.s32 1, %s8
  %s11 = scalar_select 0, %s10, %s8
  $region1: #{tpu_custom_call.1} parent=0
    #allocation3 [shape = 'u8[16384]{0}', space=vmem, size = 0x4000, scoped, tag = 'output window, operand 0, single buffered']
    #allocation4 [shape = 's32[1]{0}', space=sflag, size = 0x4, scoped, tag = 'scoped memory for tpu_custom_call.1']
    %12 = vsyncpa [#allocation4], 0
    // Predicated region
    $region2: #{tpu_custom_call.1} parent=1 // pred_check
      _
    $region3: #{tpu_custom_call.1} parent=1 // pred_check_branch
      %14 = sbr.rel (0) target = $region5
    $region4: #{tpu_custom_call.1} parent=1 // pred_region
      _
    $region5: #{tpu_custom_call.1} parent=1 // pred_fallthru
      _
    // Predicated region
    $region6: #{tpu_custom_call.1} parent=1 // pred_check
      _
    $region7: #{tpu_custom_call.1} parent=1 // pred_check_branch
      %16 = sbr.rel (0) target = $region9
    $region8: #{tpu_custom_call.1} parent=1 // pred_region
      _
    $region9: #{tpu_custom_call.1} parent=1 // pred_fallthru
      _
    // Predicated region
    $region10: #{tpu_custom_call.1} parent=1 // pred_check
      _
    $region11: #{tpu_custom_call.1} parent=1 // pred_check_branch
      %18 = sbr.rel (0) target = $region13
    $region12: #{tpu_custom_call.1} parent=1 // pred_region
      _
    $region13: #{tpu_custom_call.1} parent=1 // pred_fallthru
      _
    // Predicated region
    $region14: #{tpu_custom_call.1} parent=1 // pred_check
      _
    $region15: #{tpu_custom_call.1} parent=1 // pred_check_branch
      %20 = sbr.rel (0) target = $region17
    $region16: #{tpu_custom_call.1} parent=1 // pred_region
      _
    $region17: #{tpu_custom_call.1} parent=1 // pred_fallthru
      _
    // Predicated region
    $region18: #{tpu_custom_call.1} parent=1 // pred_check
      _
    $region19: #{tpu_custom_call.1} parent=1 // pred_check_branch
      %22 = sbr.rel (0) target = $region21
    $region20: #{tpu_custom_call.1} parent=1 // pred_region
      _
    $region21: #{tpu_custom_call.1} parent=1 // pred_fallthru
      _
    // Predicated region
    $region22: #{tpu_custom_call.1} parent=1 // pred_check
      _
    $region23: #{tpu_custom_call.1} parent=1 // pred_check_branch
      %24 = sbr.rel (0) target = $region25
    $region24: #{tpu_custom_call.1} parent=1 // pred_region
      _
    $region25: #{tpu_custom_call.1} parent=1 // pred_fallthru
      _
    // Predicated region
    $region26: #{tpu_custom_call.1} parent=1 // pred_check
      _
    $region27: #{tpu_custom_call.1} parent=1 // pred_check_branch
      %26 = sbr.rel (0) target = $region29
    $region28: #{tpu_custom_call.1} parent=1 // pred_region
      _
    $region29: #{tpu_custom_call.1} parent=1 // pred_fallthru
      _
    %v28 = vld [vmem:[%s0] sm:$0xf]
    %v29 = vld [vmem:[%s0 + $0x4] sm:$0xf]
    %s30 = scalar_lea.vmem %s0, 8
    %v31 = vld [vmem:[%s30] sm:$0xf]
    %v32 = vld [vmem:[%s30 + $0x4] sm:$0xf]
    %v35 = vunpack.c.l.b16 %v28
    %v36 = vunpack.c.l.b16 %v29
    %v37 = vpack.c.b16 %v36, %v35
    %v40 = vunpack.c.l.b16 %v31
    %v41 = vunpack.c.l.b16 %v32
    %v42 = vpack.c.b16 %v41, %v40
    %v43 = vld [vmem:[%s1] sm:$0xf]
    %v44 = vld [vmem:[%s1 + $0x4] sm:$0xf]
    %v45 = vld [vmem:[%s2] sm:$0x1]
    %v47 = vlaneseq
    %v48 = vshrl.u32 %v47, 7
    %v49 = vsub.s32 0, %v48
    %v50 = vrot.slane %v45, %v49
    %v54 = vunpack.c.l.b16 %v43
    %v55 = vunpack.c.l.b16 %v44
    %v56 = vpack.c.b16 %v55, %v54
    %vm58 = vcmask 130048
    %v60 = vsel %vm58, %v37, 0
    %v63 = vsel %vm58, %v42, 0
    %65 = vmatprep.subr.bf16.mxu0 0
    %66 = vmatpush1.bf16.msra.mxu0 0
    %67 = vmatprep.subr.bf16.mxu0 0
    %68 = vmatpush1.bf16.msra.mxu0 0
    %69 = vmatprep.subr.bf16.mxu0 0
    %70 = vmatpush1.bf16.msra.mxu0 0
    %71 = vmatprep.subr.bf16.mxu0 0
    %72 = vmatpush1.bf16.msra.mxu0 0
    %73 = vmatprep.subr.bf16.mxu0 0
    %74 = vmatpush1.bf16.msra.mxu0 0
    %75 = vmatprep.subr.bf16.mxu0 0
    %76 = vmatpush1.bf16.msra.mxu0 0
    %77 = vmatprep.subr.bf16.mxu0 0
    %78 = vmatpush1.bf16.msra.mxu0 0
    %79 = vmatprep.subr.bf16.mxu0 0
    %80 = vmatpush1.bf16.msra.mxu0 %v56
    %81 = vmatprep.subr.bf16.mxu0 0
    %82 = vmatpush2.bf16.msra.mxu0 0
    %83 = vmatprep.subr.bf16.mxu0 0
    %84 = vmatpush2.bf16.msra.mxu0 0
    %85 = vmatprep.subr.bf16.mxu0 0
    %86 = vmatpush2.bf16.msra.mxu0 0
    %87 = vmatprep.subr.bf16.mxu0 0
    %88 = vmatpush2.bf16.msra.mxu0 0
    %89 = vmatprep.subr.bf16.mxu0 0
    %90 = vmatpush2.bf16.msra.mxu0 0
    %91 = vmatprep.subr.bf16.mxu0 0
    %92 = vmatpush2.bf16.msra.mxu0 0
    %93 = vmatprep.subr.bf16.mxu0 0
    %94 = vmatpush2.bf16.msra.mxu0 0
    %95 = vmatprep.subr.bf16.mxu0 0
    %96 = vmatpush2.bf16.msra.mxu0 0
    %97 = vmatprep.mubr.bf16.mxu0 0
    %98 = vmatmul.mubr.bf16.gmra.mxu0 %v60
    %v99 = vpop.f32.mrf.mxu0
    %v100 = vadd.f32 %v50, %v99
    %v101 = vpop.f32.mrf.mxu0
    %v102 = vpop.f32.mrf.mxu0
    %v103 = vadd.f32 %v50, %v102
    %v104 = vpop.f32.mrf.mxu0
    %105 = vmatprep.mubr.bf16.mxu0 0
    %106 = vmatmul.mubr.bf16.gmra.mxu0 %v63
    %v107 = vpop.f32.mrf.mxu0
    %v108 = vadd.f32 %v50, %v107
    %v109 = vpop.f32.mrf.mxu0
    %v110 = vpop.f32.mrf.mxu0
    %v111 = vadd.f32 %v50, %v110
    %v112 = vpop.f32.mrf.mxu0
    %113 = vdwg.mxu0
    %v114 = vmax.f32 %v100, 0.0
    %v115 = vmax.f32 %v103, 0.0
    %v116 = vmax.f32 %v108, 0.0
    %v117 = vmax.f32 %v111, 0.0
    %v118 = vpack.c.bf16 %v115, %v114
    %v119 = vpack.c.bf16 %v117, %v116
    %v120 = vld [vmem:[%s3] sm:$0xf]
    %v121 = vld [vmem:[%s3 + $0x4] sm:$0xf]
    %v122 = vld [vmem:[%s3 + $0x8] sm:$0xf]
    %v123 = vld [vmem:[%s3 + $0xc] sm:$0xf]
    %v124 = vld [vmem:[%s4] sm:$0x1]
    %v126 = vlaneseq
    %v127 = vshrl.u32 %v126, 7
    %v128 = vsub.s32 0, %v127
    %v129 = vrot.slane %v124, %v128
    %v135 = vunpack.c.l.b16 %v120
    %v136 = vunpack.c.l.b16 %v121
    %v137 = vunpack.c.l.b16 %v122
    %v138 = vunpack.c.l.b16 %v123
    %v139 = vpack.c.b16 %v136, %v135
    %v140 = vpack.c.b16 %v138, %v137
    %vm143 = vcmask 261120
    %v145 = vsel %vm143, %v118, 0
    %v148 = vsel %vm143, %v119, 0
    %150 = vmatprep.subr.bf16.mxu0 0
    %151 = vmatpush1.bf16.msra.mxu0 0
    %152 = vmatprep.subr.bf16.mxu0 0
    %153 = vmatpush1.bf16.msra.mxu0 0
    %154 = vmatprep.subr.bf16.mxu0 0
    %155 = vmatpush1.bf16.msra.mxu0 0
    %156 = vmatprep.subr.bf16.mxu0 0
    %157 = vmatpush1.bf16.msra.mxu0 0
    %158 = vmatprep.subr.bf16.mxu0 0
    %159 = vmatpush1.bf16.msra.mxu0 0
    %160 = vmatprep.subr.bf16.mxu0 0
    %161 = vmatpush1.bf16.msra.mxu0 0
    %162 = vmatprep.subr.bf16.mxu0 0
    %163 = vmatpush1.bf16.msra.mxu0 %v140
    %164 = vmatprep.subr.bf16.mxu0 0
    %165 = vmatpush1.bf16.msra.mxu0 %v139
    %166 = vmatprep.subr.bf16.mxu0 0
    %167 = vmatpush2.bf16.msra.mxu0 0
    %168 = vmatprep.subr.bf16.mxu0 0
    %169 = vmatpush2.bf16.msra.mxu0 0
    %170 = vmatprep.subr.bf16.mxu0 0
    %171 = vmatpush2.bf16.msra.mxu0 0
    %172 = vmatprep.subr.bf16.mxu0 0
    %173 = vmatpush2.bf16.msra.mxu0 0
    %174 = vmatprep.subr.bf16.mxu0 0
    %175 = vmatpush2.bf16.msra.mxu0 0
    %176 = vmatprep.subr.bf16.mxu0 0
    %177 = vmatpush2.bf16.msra.mxu0 0
    %178 = vmatprep.subr.bf16.mxu0 0
    %179 = vmatpush2.bf16.msra.mxu0 0
    %180 = vmatprep.subr.bf16.mxu0 0
    %181 = vmatpush2.bf16.msra.mxu0 0
    %182 = vmatprep.mubr.bf16.mxu0 0
    %183 = vmatmul.mubr.bf16.gmra.mxu0 %v145
    %v184 = vpop.f32.mrf.mxu0
    %v185 = vadd.f32 %v129, %v184
    %v186 = vpop.f32.mrf.mxu0
    %v187 = vpop.f32.mrf.mxu0
    %v188 = vadd.f32 %v129, %v187
    %v189 = vpop.f32.mrf.mxu0
    %190 = vmatprep.mubr.bf16.mxu0 0
    %191 = vmatmul.mubr.bf16.gmra.mxu0 %v148
    %v192 = vpop.f32.mrf.mxu0
    %v193 = vadd.f32 %v129, %v192
    %v194 = vpop.f32.mrf.mxu0
    %v195 = vpop.f32.mrf.mxu0
    %v196 = vadd.f32 %v129, %v195
    %v197 = vpop.f32.mrf.mxu0
    %198 = vdwg.mxu0
    %199 = vst.msk [vmem:[#allocation2] sm:$0xff] %vm143, 0.0
    %200 = vst.msk [vmem:[#allocation2 + $0x8] sm:$0xff] %vm143, 0.0
    %201 = vst.msk [vmem:[#allocation2 + $0x10] sm:$0xff] %vm143, 0.0
    %202 = vst.msk [vmem:[#allocation2 + $0x18] sm:$0xff] %vm143, 0.0
    %203 = vst.msk [vmem:[#allocation2 + $0x20] sm:$0xff] %vm143, %v185
    %204 = vst.msk [vmem:[#allocation2 + $0x28] sm:$0xff] %vm143, %v188
    %205 = vst.msk [vmem:[#allocation2 + $0x30] sm:$0xff] %vm143, 0.0
    %206 = vst.msk [vmem:[#allocation2 + $0x38] sm:$0xff] %vm143, 0.0
    %207 = vst.msk [vmem:[#allocation2 + $0x40] sm:$0xff] %vm143, 0.0
    %208 = vst.msk [vmem:[#allocation2 + $0x48] sm:$0xff] %vm143, 0.0
    %209 = vst.msk [vmem:[#allocation2 + $0x50] sm:$0xff] %vm143, %v193
    %210 = vst.msk [vmem:[#allocation2 + $0x58] sm:$0xff] %vm143, %v196
    %211 = vst.msk [vmem:[#allocation2 + $0x60] sm:$0xff] %vm143, 0.0
    %212 = vst.msk [vmem:[#allocation2 + $0x68] sm:$0xff] %vm143, 0.0
    %213 = vst.msk [vmem:[#allocation2 + $0x70] sm:$0xff] %vm143, 0.0
    %214 = vst.msk [vmem:[#allocation2 + $0x78] sm:$0xff] %vm143, 0.0
    %v215 = vld [vmem:[#allocation2 + $0x20] sm:$0xff]
    %v216 = vld [vmem:[#allocation2 + $0x28] sm:$0xff]
    %v217 = vld [vmem:[#allocation2 + $0x30] sm:$0xff]
    %v218 = vld [vmem:[#allocation2 + $0x38] sm:$0xff]
    %v219 = vld [vmem:[#allocation2 + $0x40] sm:$0xff]
    %v220 = vld [vmem:[#allocation2 + $0x48] sm:$0xff]
    %v221 = vld [vmem:[#allocation2 + $0x50] sm:$0xff]
    %v222 = vld [vmem:[#allocation2 + $0x58] sm:$0xff]
    %v223 = vld [vmem:[#allocation2 + $0x1f] sm:$0xff]
    %v224 = vld [vmem:[#allocation2 + $0x27] sm:$0xff]
    %v225 = vld [vmem:[#allocation2 + $0x2f] sm:$0xff]
    %v226 = vld [vmem:[#allocation2 + $0x37] sm:$0xff]
    %v227 = vld [vmem:[#allocation2 + $0x3f] sm:$0xff]
    %v228 = vld [vmem:[#allocation2 + $0x47] sm:$0xff]
    %v229 = vld [vmem:[#allocation2 + $0x4f] sm:$0xff]
    %v230 = vld [vmem:[#allocation2 + $0x57] sm:$0xff]
    %v231 = vld [vmem:[#allocation2 + $0x21] sm:$0xff]
    %v232 = vld [vmem:[#allocation2 + $0x29] sm:$0xff]
    %v233 = vld [vmem:[#allocation2 + $0x31] sm:$0xff]
    %v234 = vld [vmem:[#allocation2 + $0x39] sm:$0xff]
    %v235 = vld [vmem:[#allocation2 + $0x41] sm:$0xff]
    %v236 = vld [vmem:[#allocation2 + $0x49] sm:$0xff]
    %v237 = vld [vmem:[#allocation2 + $0x51] sm:$0xff]
    %v238 = vld [vmem:[#allocation2 + $0x59] sm:$0xff]
    %247 = vrot.lane.b32.xlu0 %v215, 32
    %v248 = vpop.permute.xlu0 %247
    %249 = vrot.lane.b32.xlu0 %v216, 32
    %v250 = vpop.permute.xlu0 %249
    %251 = vrot.lane.b32.xlu0 %v217, 32
    %v252 = vpop.permute.xlu0 %251
    %253 = vrot.lane.b32.xlu0 %v218, 32
    %v254 = vpop.permute.xlu0 %253
    %255 = vrot.lane.b32.xlu0 %v219, 32
    %v256 = vpop.permute.xlu0 %255
    %257 = vrot.lane.b32.xlu0 %v220, 32
    %v258 = vpop.permute.xlu0 %257
    %259 = vrot.lane.b32.xlu0 %v221, 32
    %v260 = vpop.permute.xlu0 %259
    %261 = vrot.lane.b32.xlu0 %v222, 32
    %v262 = vpop.permute.xlu0 %261
    %279 = vrot.lane.b32.xlu0 %v231, 64
    %v280 = vpop.permute.xlu0 %279
    %281 = vrot.lane.b32.xlu0 %v232, 64
    %v282 = vpop.permute.xlu0 %281
    %283 = vrot.lane.b32.xlu0 %v233, 64
    %v284 = vpop.permute.xlu0 %283
    %285 = vrot.lane.b32.xlu0 %v234, 64
    %v286 = vpop.permute.xlu0 %285
    %287 = vrot.lane.b32.xlu0 %v235, 64
    %v288 = vpop.permute.xlu0 %287
    %289 = vrot.lane.b32.xlu0 %v236, 64
    %v290 = vpop.permute.xlu0 %289
    %291 = vrot.lane.b32.xlu0 %v237, 64
    %v292 = vpop.permute.xlu0 %291
    %293 = vrot.lane.b32.xlu0 %v238, 64
    %v294 = vpop.permute.xlu0 %293
    %v303 = vsel %vm143, %v223, %v248
    %v304 = vsel %vm143, %v224, %v250
    %v305 = vsel %vm143, %v225, %v252
    %v306 = vsel %vm143, %v226, %v254
    %v307 = vsel %vm143, %v227, %v256
    %v308 = vsel %vm143, %v228, %v258
    %v309 = vsel %vm143, %v229, %v260
    %v310 = vsel %vm143, %v230, %v262
    %vm311 = vcmask 523264
    %v312 = vsel %vm311, %v303, %v280
    %v313 = vsel %vm311, %v304, %v282
    %v314 = vsel %vm311, %v305, %v284
    %v315 = vsel %vm311, %v306, %v286
    %v316 = vsel %vm311, %v307, %v288
    %v317 = vsel %vm311, %v308, %v290
    %v318 = vsel %vm311, %v309, %v292
    %v319 = vsel %vm311, %v310, %v294
    %v320 = vpack.c.bf16 %v313, %v312
    %v321 = vpack.c.bf16 %v315, %v314
    %v322 = vpack.c.bf16 %v317, %v316
    %v323 = vpack.c.bf16 %v319, %v318
    %v324 = vld [vmem:[%s5] sm:$0xf]
    %v325 = vld [vmem:[%s5 + $0x4] sm:$0xf]
    %v326 = vld [vmem:[%s5 + $0x8] sm:$0xf]
    %v327 = vld [vmem:[%s5 + $0xc] sm:$0xf]
    %v328 = vld [vmem:[%s5 + $0x10] sm:$0xf]
    %v329 = vld [vmem:[%s5 + $0x14] sm:$0xf]
    %v330 = vld [vmem:[%s5 + $0x18] sm:$0xf]
    %v331 = vld [vmem:[%s5 + $0x1c] sm:$0xf]
    %v332 = vld [vmem:[%s5 + $0x20] sm:$0xf]
    %v333 = vld [vmem:[%s5 + $0x24] sm:$0xf]
    %v334 = vld [vmem:[%s5 + $0x28] sm:$0xf]
    %v335 = vld [vmem:[%s5 + $0x2c] sm:$0xf]
    %v336 = vld [vmem:[%s6] sm:$0x1]
    %v337 = vlaneseq
    %v338 = vshrl.u32 %v337, 7
    %v339 = vsub.s32 0, %v338
    %v340 = vrot.slane %v336, %v339
    %v353 = vunpack.c.l.b16 %v324
    %v354 = vunpack.c.l.b16 %v325
    %v355 = vunpack.c.l.b16 %v326
    %v356 = vunpack.c.l.b16 %v327
    %v357 = vunpack.c.l.b16 %v328
    %v358 = vunpack.c.l.b16 %v329
    %v359 = vunpack.c.l.b16 %v330
    %v360 = vunpack.c.l.b16 %v331
    %v361 = vunpack.c.l.b16 %v332
    %v362 = vunpack.c.l.b16 %v333
    %v363 = vunpack.c.l.b16 %v334
    %v364 = vunpack.c.l.b16 %v335
    %v365 = vpack.c.b16 %v354, %v353
    %v366 = vpack.c.b16 %v356, %v355
    %v367 = vpack.c.b16 %v358, %v357
    %v368 = vpack.c.b16 %v360, %v359
    %v369 = vpack.c.b16 %v362, %v361
    %v370 = vpack.c.b16 %v364, %v363
    %vm377 = vcmask 785408
    %v379 = vsel %vm377, %v320, 0
    %v382 = vsel %vm377, %v321, 0
    %v385 = vsel %vm377, %v322, 0
    %v388 = vsel %vm377, %v323, 0
    %390 = vmatprep.subr.bf16.mxu0 0
    %391 = vmatpush1.bf16.msra.mxu0 0
    %392 = vmatprep.subr.bf16.mxu0 0
    %393 = vmatpush1.bf16.msra.mxu0 0
    %394 = vmatprep.subr.bf16.mxu0 0
    %395 = vmatpush1.bf16.msra.mxu0 %v370
    %396 = vmatprep.subr.bf16.mxu0 0
    %397 = vmatpush1.bf16.msra.mxu0 %v369
    %398 = vmatprep.subr.bf16.mxu0 0
    %399 = vmatpush1.bf16.msra.mxu0 %v368
    %400 = vmatprep.subr.bf16.mxu0 0
    %401 = vmatpush1.bf16.msra.mxu0 %v367
    %402 = vmatprep.subr.bf16.mxu0 0
    %403 = vmatpush1.bf16.msra.mxu0 %v366
    %404 = vmatprep.subr.bf16.mxu0 0
    %405 = vmatpush1.bf16.msra.mxu0 %v365
    %406 = vmatprep.subr.bf16.mxu0 0
    %407 = vmatpush2.bf16.msra.mxu0 0
    %408 = vmatprep.subr.bf16.mxu0 0
    %409 = vmatpush2.bf16.msra.mxu0 0
    %410 = vmatprep.subr.bf16.mxu0 0
    %411 = vmatpush2.bf16.msra.mxu0 0
    %412 = vmatprep.subr.bf16.mxu0 0
    %413 = vmatpush2.bf16.msra.mxu0 0
    %414 = vmatprep.subr.bf16.mxu0 0
    %415 = vmatpush2.bf16.msra.mxu0 0
    %416 = vmatprep.subr.bf16.mxu0 0
    %417 = vmatpush2.bf16.msra.mxu0 0
    %418 = vmatprep.subr.bf16.mxu0 0
    %419 = vmatpush2.bf16.msra.mxu0 0
    %420 = vmatprep.subr.bf16.mxu0 0
    %421 = vmatpush2.bf16.msra.mxu0 0
    %422 = vmatprep.mubr.bf16.mxu0 0
    %423 = vmatmul.mubr.bf16.gmra.mxu0 %v379
    %v424 = vpop.f32.mrf.mxu0
    %v425 = vadd.f32 %v340, %v424
    %v426 = vpop.f32.mrf.mxu0
    %v427 = vpop.f32.mrf.mxu0
    %v428 = vadd.f32 %v340, %v427
    %v429 = vpop.f32.mrf.mxu0
    %430 = vmatprep.mubr.bf16.mxu0 0
    %431 = vmatmul.mubr.bf16.gmra.mxu0 %v382
    %v432 = vpop.f32.mrf.mxu0
    %v433 = vpop.f32.mrf.mxu0
    %v434 = vpop.f32.mrf.mxu0
    %v435 = vpop.f32.mrf.mxu0
    %436 = vmatprep.mubr.bf16.mxu0 0
    %437 = vmatmul.mubr.bf16.gmra.mxu0 %v385
    %v438 = vpop.f32.mrf.mxu0
    %v439 = vpop.f32.mrf.mxu0
    %v440 = vpop.f32.mrf.mxu0
    %v441 = vpop.f32.mrf.mxu0
    %442 = vmatprep.mubr.bf16.mxu0 0
    %443 = vmatmul.mubr.bf16.gmra.mxu0 %v388
    %v444 = vpop.f32.mrf.mxu0
    %v445 = vadd.f32 %v340, %v444
    %v446 = vpop.f32.mrf.mxu0
    %v447 = vpop.f32.mrf.mxu0
    %v448 = vadd.f32 %v340, %v447
    %v449 = vpop.f32.mrf.mxu0
    %450 = vdwg.mxu0
    %v451 = vxor.u32 %v425, 2147483648
    %v452 = vxor.u32 %v428, 2147483648
    %v453 = vxor.u32 %v445, 2147483648
    %v454 = vxor.u32 %v448, 2147483648
    %v455 = vmul.f32 %v451, 1.442695
    %v456 = vpow.pop %v455
    %v457 = vmul.f32 %v452, 1.442695
    %v458 = vpow.pop %v457
    %v459 = vmul.f32 %v453, 1.442695
    %v460 = vpow.pop %v459
    %v461 = vmul.f32 %v454, 1.442695
    %v462 = vpow.pop %v461
    %v463 = vadd.f32 %v456, 1.0
    %v464 = vadd.f32 %v458, 1.0
    %v465 = vadd.f32 %v460, 1.0
    %v466 = vadd.f32 %v462, 1.0
    %v467 = vrcp.pop %v463
    %v468 = vmul.f32 1.0, %v467
    %v469 = vrcp.pop %v464
    %v470 = vmul.f32 1.0, %v469
    %v471 = vrcp.pop %v465
    %v472 = vmul.f32 1.0, %v471
    %v473 = vrcp.pop %v466
    %v474 = vmul.f32 1.0, %v473
    %v475 = vsub.f32 %v425, %v248
    %v476 = vsub.f32 %v428, %v250
    %v477 = vsub.f32 %v445, %v260
    %v478 = vsub.f32 %v448, %v262
    %483 = vrot.lane.b32.xlu0 %v475, 96
    %v484 = vpop.permute.xlu0 %483
    %485 = vrot.lane.b32.xlu0 %v476, 96
    %v486 = vpop.permute.xlu0 %485
    %487 = vrot.lane.b32.xlu0 %v477, 96
    %v488 = vpop.permute.xlu0 %487
    %489 = vrot.lane.b32.xlu0 %v478, 96
    %v490 = vpop.permute.xlu0 %489
    %v495 = vmul.f32 %v468, %v484
    %v496 = vmul.f32 %v470, %v486
    %v497 = vmul.f32 %v472, %v488
    %v498 = vmul.f32 %v474, %v490
    %v499 = vadd.f32 %v215, %v495
    %v500 = vadd.f32 %v216, %v496
    %v501 = vadd.f32 %v221, %v497
    %v502 = vadd.f32 %v222, %v498
    %503 = vst.msk [vmem:[#allocation2 + $0x20] sm:$0xff] %vm143, %v499
    %504 = vst.msk [vmem:[#allocation2 + $0x28] sm:$0xff] %vm143, %v500
    %505 = vst.msk [vmem:[#allocation2 + $0x50] sm:$0xff] %vm143, %v501
    %506 = vst.msk [vmem:[#allocation2 + $0x58] sm:$0xff] %vm143, %v502
    %v507 = vld [vmem:[#allocation2 + $0x20] sm:$0xff]
    %v508 = vld [vmem:[#allocation2 + $0x28] sm:$0xff]
    %v509 = vld [vmem:[#allocation2 + $0x30] sm:$0xff]
    %v510 = vld [vmem:[#allocation2 + $0x38] sm:$0xff]
    %v511 = vld [vmem:[#allocation2 + $0x40] sm:$0xff]
    %v512 = vld [vmem:[#allocation2 + $0x48] sm:$0xff]
    %v513 = vld [vmem:[#allocation2 + $0x50] sm:$0xff]
    %v514 = vld [vmem:[#allocation2 + $0x58] sm:$0xff]
    %v515 = vld [vmem:[#allocation2 + $0x1d] sm:$0xff]
    %v516 = vld [vmem:[#allocation2 + $0x25] sm:$0xff]
    %v517 = vld [vmem:[#allocation2 + $0x2d] sm:$0xff]
    %v518 = vld [vmem:[#allocation2 + $0x35] sm:$0xff]
    %v519 = vld [vmem:[#allocation2 + $0x3d] sm:$0xff]
    %v520 = vld [vmem:[#allocation2 + $0x45] sm:$0xff]
    %v521 = vld [vmem:[#allocation2 + $0x4d] sm:$0xff]
    %v522 = vld [vmem:[#allocation2 + $0x55] sm:$0xff]
    %v523 = vld [vmem:[#allocation2 + $0x23] sm:$0xff]
    %v524 = vld [vmem:[#allocation2 + $0x2b] sm:$0xff]
    %v525 = vld [vmem:[#allocation2 + $0x33] sm:$0xff]
    %v526 = vld [vmem:[#allocation2 + $0x3b] sm:$0xff]
    %v527 = vld [vmem:[#allocation2 + $0x43] sm:$0xff]
    %v528 = vld [vmem:[#allocation2 + $0x4b] sm:$0xff]
    %v529 = vld [vmem:[#allocation2 + $0x53] sm:$0xff]
    %v530 = vld [vmem:[#allocation2 + $0x5b] sm:$0xff]
    %539 = vrot.lane.b32.xlu0 %v507, 32
    %v540 = vpop.permute.xlu0 %539
    %541 = vrot.lane.b32.xlu0 %v508, 32
    %v542 = vpop.permute.xlu0 %541
    %543 = vrot.lane.b32.xlu0 %v509, 32
    %v544 = vpop.permute.xlu0 %543
    %545 = vrot.lane.b32.xlu0 %v510, 32
    %v546 = vpop.permute.xlu0 %545
    %547 = vrot.lane.b32.xlu0 %v511, 32
    %v548 = vpop.permute.xlu0 %547
    %549 = vrot.lane.b32.xlu0 %v512, 32
    %v550 = vpop.permute.xlu0 %549
    %551 = vrot.lane.b32.xlu0 %v513, 32
    %v552 = vpop.permute.xlu0 %551
    %553 = vrot.lane.b32.xlu0 %v514, 32
    %v554 = vpop.permute.xlu0 %553
    %571 = vrot.lane.b32.xlu0 %v523, 64
    %v572 = vpop.permute.xlu0 %571
    %573 = vrot.lane.b32.xlu0 %v524, 64
    %v574 = vpop.permute.xlu0 %573
    %575 = vrot.lane.b32.xlu0 %v525, 64
    %v576 = vpop.permute.xlu0 %575
    %577 = vrot.lane.b32.xlu0 %v526, 64
    %v578 = vpop.permute.xlu0 %577
    %579 = vrot.lane.b32.xlu0 %v527, 64
    %v580 = vpop.permute.xlu0 %579
    %581 = vrot.lane.b32.xlu0 %v528, 64
    %v582 = vpop.permute.xlu0 %581
    %583 = vrot.lane.b32.xlu0 %v529, 64
    %v584 = vpop.permute.xlu0 %583
    %585 = vrot.lane.b32.xlu0 %v530, 64
    %v586 = vpop.permute.xlu0 %585
    %v595 = vsel %vm143, %v515, %v540
    %v596 = vsel %vm143, %v516, %v542
    %v597 = vsel %vm143, %v517, %v544
    %v598 = vsel %vm143, %v518, %v546
    %v599 = vsel %vm143, %v519, %v548
    %v600 = vsel %vm143, %v520, %v550
    %v601 = vsel %vm143, %v521, %v552
    %v602 = vsel %vm143, %v522, %v554
    %v603 = vsel %vm311, %v595, %v572
    %v604 = vsel %vm311, %v596, %v574
    %v605 = vsel %vm311, %v597, %v576
    %v606 = vsel %vm311, %v598, %v578
    %v607 = vsel %vm311, %v599, %v580
    %v608 = vsel %vm311, %v600, %v582
    %v609 = vsel %vm311, %v601, %v584
    %v610 = vsel %vm311, %v602, %v586
    %v611 = vpack.c.bf16 %v604, %v603
    %v612 = vpack.c.bf16 %v606, %v605
    %v613 = vpack.c.bf16 %v608, %v607
    %v614 = vpack.c.bf16 %v610, %v609
    %s615 = scalar_lea.vmem %s5, 48
    %v616 = vld [vmem:[%s615] sm:$0xf]
    %v617 = vld [vmem:[%s615 + $0x4] sm:$0xf]
    %v618 = vld [vmem:[%s615 + $0x8] sm:$0xf]
    %v619 = vld [vmem:[%s615 + $0xc] sm:$0xf]
    %v620 = vld [vmem:[%s615 + $0x10] sm:$0xf]
    %v621 = vld [vmem:[%s615 + $0x14] sm:$0xf]
    %v622 = vld [vmem:[%s615 + $0x18] sm:$0xf]
    %v623 = vld [vmem:[%s615 + $0x1c] sm:$0xf]
    %v624 = vld [vmem:[%s615 + $0x20] sm:$0xf]
    %v625 = vld [vmem:[%s615 + $0x24] sm:$0xf]
    %v626 = vld [vmem:[%s615 + $0x28] sm:$0xf]
    %v627 = vld [vmem:[%s615 + $0x2c] sm:$0xf]
    %v628 = vld [vmem:[%s6 + $0x1] sm:$0x1]
    %v629 = vlaneseq
    %v630 = vshrl.u32 %v629, 7
    %v631 = vsub.s32 0, %v630
    %v632 = vrot.slane %v628, %v631
    %v645 = vunpack.c.l.b16 %v616
    %v646 = vunpack.c.l.b16 %v617
    %v647 = vunpack.c.l.b16 %v618
    %v648 = vunpack.c.l.b16 %v619
    %v649 = vunpack.c.l.b16 %v620
    %v650 = vunpack.c.l.b16 %v621
    %v651 = vunpack.c.l.b16 %v622
    %v652 = vunpack.c.l.b16 %v623
    %v653 = vunpack.c.l.b16 %v624
    %v654 = vunpack.c.l.b16 %v625
    %v655 = vunpack.c.l.b16 %v626
    %v656 = vunpack.c.l.b16 %v627
    %v657 = vpack.c.b16 %v646, %v645
    %v658 = vpack.c.b16 %v648, %v647
    %v659 = vpack.c.b16 %v650, %v649
    %v660 = vpack.c.b16 %v652, %v651
    %v661 = vpack.c.b16 %v654, %v653
    %v662 = vpack.c.b16 %v656, %v655
    %v670 = vsel %vm377, %v611, 0
    %v673 = vsel %vm377, %v612, 0
    %v676 = vsel %vm377, %v613, 0
    %v679 = vsel %vm377, %v614, 0
    %681 = vmatprep.subr.bf16.mxu0 0
    %682 = vmatpush1.bf16.msra.mxu0 0
    %683 = vmatprep.subr.bf16.mxu0 0
    %684 = vmatpush1.bf16.msra.mxu0 0
    %685 = vmatprep.subr.bf16.mxu0 0
    %686 = vmatpush1.bf16.msra.mxu0 %v662
    %687 = vmatprep.subr.bf16.mxu0 0
    %688 = vmatpush1.bf16.msra.mxu0 %v661
    %689 = vmatprep.subr.bf16.mxu0 0
    %690 = vmatpush1.bf16.msra.mxu0 %v660
    %691 = vmatprep.subr.bf16.mxu0 0
    %692 = vmatpush1.bf16.msra.mxu0 %v659
    %693 = vmatprep.subr.bf16.mxu0 0
    %694 = vmatpush1.bf16.msra.mxu0 %v658
    %695 = vmatprep.subr.bf16.mxu0 0
    %696 = vmatpush1.bf16.msra.mxu0 %v657
    %697 = vmatprep.subr.bf16.mxu0 0
    %698 = vmatpush2.bf16.msra.mxu0 0
    %699 = vmatprep.subr.bf16.mxu0 0
    %700 = vmatpush2.bf16.msra.mxu0 0
    %701 = vmatprep.subr.bf16.mxu0 0
    %702 = vmatpush2.bf16.msra.mxu0 0
    %703 = vmatprep.subr.bf16.mxu0 0
    %704 = vmatpush2.bf16.msra.mxu0 0
    %705 = vmatprep.subr.bf16.mxu0 0
    %706 = vmatpush2.bf16.msra.mxu0 0
    %707 = vmatprep.subr.bf16.mxu0 0
    %708 = vmatpush2.bf16.msra.mxu0 0
    %709 = vmatprep.subr.bf16.mxu0 0
    %710 = vmatpush2.bf16.msra.mxu0 0
    %711 = vmatprep.subr.bf16.mxu0 0
    %712 = vmatpush2.bf16.msra.mxu0 0
    %713 = vmatprep.mubr.bf16.mxu0 0
    %714 = vmatmul.mubr.bf16.gmra.mxu0 %v670
    %v715 = vpop.f32.mrf.mxu0
    %v716 = vadd.f32 %v632, %v715
    %v717 = vpop.f32.mrf.mxu0
    %v718 = vpop.f32.mrf.mxu0
    %v719 = vadd.f32 %v632, %v718
    %v720 = vpop.f32.mrf.mxu0
    %721 = vmatprep.mubr.bf16.mxu0 0
    %722 = vmatmul.mubr.bf16.gmra.mxu0 %v673
    %v723 = vpop.f32.mrf.mxu0
    %v724 = vpop.f32.mrf.mxu0
    %v725 = vpop.f32.mrf.mxu0
    %v726 = vpop.f32.mrf.mxu0
    %727 = vmatprep.mubr.bf16.mxu0 0
    %728 = vmatmul.mubr.bf16.gmra.mxu0 %v676
    %v729 = vpop.f32.mrf.mxu0
    %v730 = vpop.f32.mrf.mxu0
    %v731 = vpop.f32.mrf.mxu0
    %v732 = vpop.f32.mrf.mxu0
    %733 = vmatprep.mubr.bf16.mxu0 0
    %734 = vmatmul.mubr.bf16.gmra.mxu0 %v679
    %v735 = vpop.f32.mrf.mxu0
    %v736 = vadd.f32 %v632, %v735
    %v737 = vpop.f32.mrf.mxu0
    %v738 = vpop.f32.mrf.mxu0
    %v739 = vadd.f32 %v632, %v738
    %v740 = vpop.f32.mrf.mxu0
    %741 = vdwg.mxu0
    %v742 = vxor.u32 %v716, 2147483648
    %v743 = vxor.u32 %v719, 2147483648
    %v744 = vxor.u32 %v736, 2147483648
    %v745 = vxor.u32 %v739, 2147483648
    %v746 = vmul.f32 %v742, 1.442695
    %v747 = vpow.pop %v746
    %v748 = vmul.f32 %v743, 1.442695
    %v749 = vpow.pop %v748
    %v750 = vmul.f32 %v744, 1.442695
    %v751 = vpow.pop %v750
    %v752 = vmul.f32 %v745, 1.442695
    %v753 = vpow.pop %v752
    %v754 = vadd.f32 %v747, 1.0
    %v755 = vadd.f32 %v749, 1.0
    %v756 = vadd.f32 %v751, 1.0
    %v757 = vadd.f32 %v753, 1.0
    %v758 = vrcp.pop %v754
    %v759 = vmul.f32 1.0, %v758
    %v760 = vrcp.pop %v755
    %v761 = vmul.f32 1.0, %v760
    %v762 = vrcp.pop %v756
    %v763 = vmul.f32 1.0, %v762
    %v764 = vrcp.pop %v757
    %v765 = vmul.f32 1.0, %v764
    %v766 = vsub.f32 %v716, %v540
    %v767 = vsub.f32 %v719, %v542
    %v768 = vsub.f32 %v736, %v552
    %v769 = vsub.f32 %v739, %v554
    %774 = vrot.lane.b32.xlu0 %v766, 96
    %v775 = vpop.permute.xlu0 %774
    %776 = vrot.lane.b32.xlu0 %v767, 96
    %v777 = vpop.permute.xlu0 %776
    %778 = vrot.lane.b32.xlu0 %v768, 96
    %v779 = vpop.permute.xlu0 %778
    %780 = vrot.lane.b32.xlu0 %v769, 96
    %v781 = vpop.permute.xlu0 %780
    %v786 = vmul.f32 %v759, %v775
    %v787 = vmul.f32 %v761, %v777
    %v788 = vmul.f32 %v763, %v779
    %v789 = vmul.f32 %v765, %v781
    %v790 = vadd.f32 %v507, %v786
    %v791 = vadd.f32 %v508, %v787
    %v792 = vadd.f32 %v513, %v788
    %v793 = vadd.f32 %v514, %v789
    %794 = vst.msk [vmem:[#allocation2 + $0x20] sm:$0xff] %vm143, %v790
    %795 = vst.msk [vmem:[#allocation2 + $0x28] sm:$0xff] %vm143, %v791
    %796 = vst.msk [vmem:[#allocation2 + $0x50] sm:$0xff] %vm143, %v792
    %797 = vst.msk [vmem:[#allocation2 + $0x58] sm:$0xff] %vm143, %v793
    %v798 = vld [vmem:[#allocation2 + $0x20] sm:$0xff]
    %v799 = vld [vmem:[#allocation2 + $0x28] sm:$0xff]
    %v800 = vld [vmem:[#allocation2 + $0x30] sm:$0xff]
    %v801 = vld [vmem:[#allocation2 + $0x38] sm:$0xff]
    %v802 = vld [vmem:[#allocation2 + $0x40] sm:$0xff]
    %v803 = vld [vmem:[#allocation2 + $0x48] sm:$0xff]
    %v804 = vld [vmem:[#allocation2 + $0x50] sm:$0xff]
    %v805 = vld [vmem:[#allocation2 + $0x58] sm:$0xff]
    %v806 = vld [vmem:[#allocation2 + $0x17] sm:$0xff]
    %v807 = vld [vmem:[#allocation2 + $0x1f] sm:$0xff]
    %v808 = vld [vmem:[#allocation2 + $0x27] sm:$0xff]
    %v809 = vld [vmem:[#allocation2 + $0x2f] sm:$0xff]
    %v810 = vld [vmem:[#allocation2 + $0x37] sm:$0xff]
    %v811 = vld [vmem:[#allocation2 + $0x3f] sm:$0xff]
    %v812 = vld [vmem:[#allocation2 + $0x47] sm:$0xff]
    %v813 = vld [vmem:[#allocation2 + $0x4f] sm:$0xff]
    %v814 = vld [vmem:[#allocation2 + $0x29] sm:$0xff]
    %v815 = vld [vmem:[#allocation2 + $0x31] sm:$0xff]
    %v816 = vld [vmem:[#allocation2 + $0x39] sm:$0xff]
    %v817 = vld [vmem:[#allocation2 + $0x41] sm:$0xff]
    %v818 = vld [vmem:[#allocation2 + $0x49] sm:$0xff]
    %v819 = vld [vmem:[#allocation2 + $0x51] sm:$0xff]
    %v820 = vld [vmem:[#allocation2 + $0x59] sm:$0xff]
    %v821 = vld [vmem:[#allocation2 + $0x61] sm:$0xff]
    %830 = vrot.lane.b32.xlu0 %v798, 32
    %v831 = vpop.permute.xlu0 %830
    %832 = vrot.lane.b32.xlu0 %v799, 32
    %v833 = vpop.permute.xlu0 %832
    %834 = vrot.lane.b32.xlu0 %v800, 32
    %v835 = vpop.permute.xlu0 %834
    %836 = vrot.lane.b32.xlu0 %v801, 32
    %v837 = vpop.permute.xlu0 %836
    %838 = vrot.lane.b32.xlu0 %v802, 32
    %v839 = vpop.permute.xlu0 %838
    %840 = vrot.lane.b32.xlu0 %v803, 32
    %v841 = vpop.permute.xlu0 %840
    %842 = vrot.lane.b32.xlu0 %v804, 32
    %v843 = vpop.permute.xlu0 %842
    %844 = vrot.lane.b32.xlu0 %v805, 32
    %v845 = vpop.permute.xlu0 %844
    %862 = vrot.lane.b32.xlu0 %v814, 64
    %v863 = vpop.permute.xlu0 %862
    %864 = vrot.lane.b32.xlu0 %v815, 64
    %v865 = vpop.permute.xlu0 %864
    %866 = vrot.lane.b32.xlu0 %v816, 64
    %v867 = vpop.permute.xlu0 %866
    %868 = vrot.lane.b32.xlu0 %v817, 64
    %v869 = vpop.permute.xlu0 %868
    %870 = vrot.lane.b32.xlu0 %v818, 64
    %v871 = vpop.permute.xlu0 %870
    %872 = vrot.lane.b32.xlu0 %v819, 64
    %v873 = vpop.permute.xlu0 %872
    %874 = vrot.lane.b32.xlu0 %v820, 64
    %v875 = vpop.permute.xlu0 %874
    %876 = vrot.lane.b32.xlu0 %v821, 64
    %v877 = vpop.permute.xlu0 %876
    %v886 = vsel %vm143, %v806, %v831
    %v887 = vsel %vm143, %v807, %v833
    %v888 = vsel %vm143, %v808, %v835
    %v889 = vsel %vm143, %v809, %v837
    %v890 = vsel %vm143, %v810, %v839
    %v891 = vsel %vm143, %v811, %v841
    %v892 = vsel %vm143, %v812, %v843
    %v893 = vsel %vm143, %v813, %v845
    %v894 = vsel %vm311, %v886, %v863
    %v895 = vsel %vm311, %v887, %v865
    %v896 = vsel %vm311, %v888, %v867
    %v897 = vsel %vm311, %v889, %v869
    %v898 = vsel %vm311, %v890, %v871
    %v899 = vsel %vm311, %v891, %v873
    %v900 = vsel %vm311, %v892, %v875
    %v901 = vsel %vm311, %v893, %v877
    %v902 = vpack.c.bf16 %v895, %v894
    %v903 = vpack.c.bf16 %v897, %v896
    %v904 = vpack.c.bf16 %v899, %v898
    %v905 = vpack.c.bf16 %v901, %v900
    %s906 = scalar_lea.vmem %s5, 96
    %v907 = vld [vmem:[%s906] sm:$0xf]
    %v908 = vld [vmem:[%s906 + $0x4] sm:$0xf]
    %v909 = vld [vmem:[%s906 + $0x8] sm:$0xf]
    %v910 = vld [vmem:[%s906 + $0xc] sm:$0xf]
    %v911 = vld [vmem:[%s906 + $0x10] sm:$0xf]
    %v912 = vld [vmem:[%s906 + $0x14] sm:$0xf]
    %v913 = vld [vmem:[%s906 + $0x18] sm:$0xf]
    %v914 = vld [vmem:[%s906 + $0x1c] sm:$0xf]
    %v915 = vld [vmem:[%s906 + $0x20] sm:$0xf]
    %v916 = vld [vmem:[%s906 + $0x24] sm:$0xf]
    %v917 = vld [vmem:[%s906 + $0x28] sm:$0xf]
    %v918 = vld [vmem:[%s906 + $0x2c] sm:$0xf]
    %v919 = vld [vmem:[%s6 + $0x2] sm:$0x1]
    %v920 = vlaneseq
    %v921 = vshrl.u32 %v920, 7
    %v922 = vsub.s32 0, %v921
    %v923 = vrot.slane %v919, %v922
    %v936 = vunpack.c.l.b16 %v907
    %v937 = vunpack.c.l.b16 %v908
    %v938 = vunpack.c.l.b16 %v909
    %v939 = vunpack.c.l.b16 %v910
    %v940 = vunpack.c.l.b16 %v911
    %v941 = vunpack.c.l.b16 %v912
    %v942 = vunpack.c.l.b16 %v913
    %v943 = vunpack.c.l.b16 %v914
    %v944 = vunpack.c.l.b16 %v915
    %v945 = vunpack.c.l.b16 %v916
    %v946 = vunpack.c.l.b16 %v917
    %v947 = vunpack.c.l.b16 %v918
    %v948 = vpack.c.b16 %v937, %v936
    %v949 = vpack.c.b16 %v939, %v938
    %v950 = vpack.c.b16 %v941, %v940
    %v951 = vpack.c.b16 %v943, %v942
    %v952 = vpack.c.b16 %v945, %v944
    %v953 = vpack.c.b16 %v947, %v946
    %v961 = vsel %vm377, %v902, 0
    %v964 = vsel %vm377, %v903, 0
    %v967 = vsel %vm377, %v904, 0
    %v970 = vsel %vm377, %v905, 0
    %972 = vmatprep.subr.bf16.mxu0 0
    %973 = vmatpush1.bf16.msra.mxu0 0
    %974 = vmatprep.subr.bf16.mxu0 0
    %975 = vmatpush1.bf16.msra.mxu0 0
    %976 = vmatprep.subr.bf16.mxu0 0
    %977 = vmatpush1.bf16.msra.mxu0 %v953
    %978 = vmatprep.subr.bf16.mxu0 0
    %979 = vmatpush1.bf16.msra.mxu0 %v952
    %980 = vmatprep.subr.bf16.mxu0 0
    %981 = vmatpush1.bf16.msra.mxu0 %v951
    %982 = vmatprep.subr.bf16.mxu0 0
    %983 = vmatpush1.bf16.msra.mxu0 %v950
    %984 = vmatprep.subr.bf16.mxu0 0
    %985 = vmatpush1.bf16.msra.mxu0 %v949
    %986 = vmatprep.subr.bf16.mxu0 0
    %987 = vmatpush1.bf16.msra.mxu0 %v948
    %988 = vmatprep.subr.bf16.mxu0 0
    %989 = vmatpush2.bf16.msra.mxu0 0
    %990 = vmatprep.subr.bf16.mxu0 0
    %991 = vmatpush2.bf16.msra.mxu0 0
    %992 = vmatprep.subr.bf16.mxu0 0
    %993 = vmatpush2.bf16.msra.mxu0 0
    %994 = vmatprep.subr.bf16.mxu0 0
    %995 = vmatpush2.bf16.msra.mxu0 0
    %996 = vmatprep.subr.bf16.mxu0 0
    %997 = vmatpush2.bf16.msra.mxu0 0
    %998 = vmatprep.subr.bf16.mxu0 0
    %999 = vmatpush2.bf16.msra.mxu0 0
    %1000 = vmatprep.subr.bf16.mxu0 0
    %1001 = vmatpush2.bf16.msra.mxu0 0
    %1002 = vmatprep.subr.bf16.mxu0 0
    %1003 = vmatpush2.bf16.msra.mxu0 0
    %1004 = vmatprep.mubr.bf16.mxu0 0
    %1005 = vmatmul.mubr.bf16.gmra.mxu0 %v961
    %v1006 = vpop.f32.mrf.mxu0
    %v1007 = vadd.f32 %v923, %v1006
    %v1008 = vpop.f32.mrf.mxu0
    %v1009 = vpop.f32.mrf.mxu0
    %v1010 = vadd.f32 %v923, %v1009
    %v1011 = vpop.f32.mrf.mxu0
    %1012 = vmatprep.mubr.bf16.mxu0 0
    %1013 = vmatmul.mubr.bf16.gmra.mxu0 %v964
    %v1014 = vpop.f32.mrf.mxu0
    %v1015 = vpop.f32.mrf.mxu0
    %v1016 = vpop.f32.mrf.mxu0
    %v1017 = vpop.f32.mrf.mxu0
    %1018 = vmatprep.mubr.bf16.mxu0 0
    %1019 = vmatmul.mubr.bf16.gmra.mxu0 %v967
    %v1020 = vpop.f32.mrf.mxu0
    %v1021 = vpop.f32.mrf.mxu0
    %v1022 = vpop.f32.mrf.mxu0
    %v1023 = vpop.f32.mrf.mxu0
    %1024 = vmatprep.mubr.bf16.mxu0 0
    %1025 = vmatmul.mubr.bf16.gmra.mxu0 %v970
    %v1026 = vpop.f32.mrf.mxu0
    %v1027 = vadd.f32 %v923, %v1026
    %v1028 = vpop.f32.mrf.mxu0
    %v1029 = vpop.f32.mrf.mxu0
    %v1030 = vadd.f32 %v923, %v1029
    %v1031 = vpop.f32.mrf.mxu0
    %1032 = vdwg.mxu0
    %v1033 = vxor.u32 %v1007, 2147483648
    %v1034 = vxor.u32 %v1010, 2147483648
    %v1035 = vxor.u32 %v1027, 2147483648
    %v1036 = vxor.u32 %v1030, 2147483648
    %v1037 = vmul.f32 %v1033, 1.442695
    %v1038 = vpow.pop %v1037
    %v1039 = vmul.f32 %v1034, 1.442695
    %v1040 = vpow.pop %v1039
    %v1041 = vmul.f32 %v1035, 1.442695
    %v1042 = vpow.pop %v1041
    %v1043 = vmul.f32 %v1036, 1.442695
    %v1044 = vpow.pop %v1043
    %v1045 = vadd.f32 %v1038, 1.0
    %v1046 = vadd.f32 %v1040, 1.0
    %v1047 = vadd.f32 %v1042, 1.0
    %v1048 = vadd.f32 %v1044, 1.0
    %v1049 = vrcp.pop %v1045
    %v1050 = vmul.f32 1.0, %v1049
    %v1051 = vrcp.pop %v1046
    %v1052 = vmul.f32 1.0, %v1051
    %v1053 = vrcp.pop %v1047
    %v1054 = vmul.f32 1.0, %v1053
    %v1055 = vrcp.pop %v1048
    %v1056 = vmul.f32 1.0, %v1055
    %v1057 = vsub.f32 %v1007, %v831
    %v1058 = vsub.f32 %v1010, %v833
    %v1059 = vsub.f32 %v1027, %v843
    %v1060 = vsub.f32 %v1030, %v845
    %1065 = vrot.lane.b32.xlu0 %v1057, 96
    %v1066 = vpop.permute.xlu0 %1065
    %1067 = vrot.lane.b32.xlu0 %v1058, 96
    %v1068 = vpop.permute.xlu0 %1067
    %1069 = vrot.lane.b32.xlu0 %v1059, 96
    %v1070 = vpop.permute.xlu0 %1069
    %1071 = vrot.lane.b32.xlu0 %v1060, 96
    %v1072 = vpop.permute.xlu0 %1071
    %v1077 = vmul.f32 %v1050, %v1066
    %v1078 = vmul.f32 %v1052, %v1068
    %v1079 = vmul.f32 %v1054, %v1070
    %v1080 = vmul.f32 %v1056, %v1072
    %v1081 = vadd.f32 %v798, %v1077
    %v1082 = vadd.f32 %v799, %v1078
    %v1083 = vadd.f32 %v804, %v1079
    %v1084 = vadd.f32 %v805, %v1080
    %1085 = vst.msk [vmem:[#allocation2 + $0x20] sm:$0xff] %vm143, %v1081
    %1086 = vst.msk [vmem:[#allocation2 + $0x28] sm:$0xff] %vm143, %v1082
    %1087 = vst.msk [vmem:[#allocation2 + $0x50] sm:$0xff] %vm143, %v1083
    %1088 = vst.msk [vmem:[#allocation2 + $0x58] sm:$0xff] %vm143, %v1084
    %v1089 = vld [vmem:[#allocation2 + $0x20] sm:$0xff]
    %v1090 = vld [vmem:[#allocation2 + $0x28] sm:$0xff]
    %v1091 = vld [vmem:[#allocation2 + $0x30] sm:$0xff]
    %v1092 = vld [vmem:[#allocation2 + $0x38] sm:$0xff]
    %v1093 = vld [vmem:[#allocation2 + $0x40] sm:$0xff]
    %v1094 = vld [vmem:[#allocation2 + $0x48] sm:$0xff]
    %v1095 = vld [vmem:[#allocation2 + $0x50] sm:$0xff]
    %v1096 = vld [vmem:[#allocation2 + $0x58] sm:$0xff]
    %v1097 = vld [vmem:[#allocation2 + $0x5] sm:$0xff]
    %v1098 = vld [vmem:[#allocation2 + $0xd] sm:$0xff]
    %v1099 = vld [vmem:[#allocation2 + $0x15] sm:$0xff]
    %v1100 = vld [vmem:[#allocation2 + $0x1d] sm:$0xff]
    %v1101 = vld [vmem:[#allocation2 + $0x25] sm:$0xff]
    %v1102 = vld [vmem:[#allocation2 + $0x2d] sm:$0xff]
    %v1103 = vld [vmem:[#allocation2 + $0x35] sm:$0xff]
    %v1104 = vld [vmem:[#allocation2 + $0x3d] sm:$0xff]
    %v1105 = vld [vmem:[#allocation2 + $0x3b] sm:$0xff]
    %v1106 = vld [vmem:[#allocation2 + $0x43] sm:$0xff]
    %v1107 = vld [vmem:[#allocation2 + $0x4b] sm:$0xff]
    %v1108 = vld [vmem:[#allocation2 + $0x53] sm:$0xff]
    %v1109 = vld [vmem:[#allocation2 + $0x5b] sm:$0xff]
    %v1110 = vld [vmem:[#allocation2 + $0x63] sm:$0xff]
    %v1111 = vld [vmem:[#allocation2 + $0x6b] sm:$0xff]
    %v1112 = vld [vmem:[#allocation2 + $0x73] sm:$0xff]
    %1121 = vrot.lane.b32.xlu0 %v1089, 32
    %v1122 = vpop.permute.xlu0 %1121
    %1123 = vrot.lane.b32.xlu0 %v1090, 32
    %v1124 = vpop.permute.xlu0 %1123
    %1125 = vrot.lane.b32.xlu0 %v1091, 32
    %v1126 = vpop.permute.xlu0 %1125
    %1127 = vrot.lane.b32.xlu0 %v1092, 32
    %v1128 = vpop.permute.xlu0 %1127
    %1129 = vrot.lane.b32.xlu0 %v1093, 32
    %v1130 = vpop.permute.xlu0 %1129
    %1131 = vrot.lane.b32.xlu0 %v1094, 32
    %v1132 = vpop.permute.xlu0 %1131
    %1133 = vrot.lane.b32.xlu0 %v1095, 32
    %v1134 = vpop.permute.xlu0 %1133
    %1135 = vrot.lane.b32.xlu0 %v1096, 32
    %v1136 = vpop.permute.xlu0 %1135
    %1153 = vrot.lane.b32.xlu0 %v1105, 64
    %v1154 = vpop.permute.xlu0 %1153
    %1155 = vrot.lane.b32.xlu0 %v1106, 64
    %v1156 = vpop.permute.xlu0 %1155
    %1157 = vrot.lane.b32.xlu0 %v1107, 64
    %v1158 = vpop.permute.xlu0 %1157
    %1159 = vrot.lane.b32.xlu0 %v1108, 64
    %v1160 = vpop.permute.xlu0 %1159
    %1161 = vrot.lane.b32.xlu0 %v1109, 64
    %v1162 = vpop.permute.xlu0 %1161
    %1163 = vrot.lane.b32.xlu0 %v1110, 64
    %v1164 = vpop.permute.xlu0 %1163
    %1165 = vrot.lane.b32.xlu0 %v1111, 64
    %v1166 = vpop.permute.xlu0 %1165
    %1167 = vrot.lane.b32.xlu0 %v1112, 64
    %v1168 = vpop.permute.xlu0 %1167
    %v1177 = vsel %vm143, %v1097, %v1122
    %v1178 = vsel %vm143, %v1098, %v1124
    %v1179 = vsel %vm143, %v1099, %v1126
    %v1180 = vsel %vm143, %v1100, %v1128
    %v1181 = vsel %vm143, %v1101, %v1130
    %v1182 = vsel %vm143, %v1102, %v1132
    %v1183 = vsel %vm143, %v1103, %v1134
    %v1184 = vsel %vm143, %v1104, %v1136
    %v1185 = vsel %vm311, %v1177, %v1154
    %v1186 = vsel %vm311, %v1178, %v1156
    %v1187 = vsel %vm311, %v1179, %v1158
    %v1188 = vsel %vm311, %v1180, %v1160
    %v1189 = vsel %vm311, %v1181, %v1162
    %v1190 = vsel %vm311, %v1182, %v1164
    %v1191 = vsel %vm311, %v1183, %v1166
    %v1192 = vsel %vm311, %v1184, %v1168
    %v1193 = vpack.c.bf16 %v1186, %v1185
    %v1194 = vpack.c.bf16 %v1188, %v1187
    %v1195 = vpack.c.bf16 %v1190, %v1189
    %v1196 = vpack.c.bf16 %v1192, %v1191
    %s1197 = scalar_lea.vmem %s5, 144
    %v1198 = vld [vmem:[%s1197] sm:$0xf]
    %v1199 = vld [vmem:[%s1197 + $0x4] sm:$0xf]
    %v1200 = vld [vmem:[%s1197 + $0x8] sm:$0xf]
    %v1201 = vld [vmem:[%s1197 + $0xc] sm:$0xf]
    %v1202 = vld [vmem:[%s1197 + $0x10] sm:$0xf]
    %v1203 = vld [vmem:[%s1197 + $0x14] sm:$0xf]
    %v1204 = vld [vmem:[%s1197 + $0x18] sm:$0xf]
    %v1205 = vld [vmem:[%s1197 + $0x1c] sm:$0xf]
    %v1206 = vld [vmem:[%s1197 + $0x20] sm:$0xf]
    %v1207 = vld [vmem:[%s1197 + $0x24] sm:$0xf]
    %v1208 = vld [vmem:[%s1197 + $0x28] sm:$0xf]
    %v1209 = vld [vmem:[%s1197 + $0x2c] sm:$0xf]
    %v1210 = vld [vmem:[%s6 + $0x3] sm:$0x1]
    %v1211 = vlaneseq
    %v1212 = vshrl.u32 %v1211, 7
    %v1213 = vsub.s32 0, %v1212
    %v1214 = vrot.slane %v1210, %v1213
    %v1227 = vunpack.c.l.b16 %v1198
    %v1228 = vunpack.c.l.b16 %v1199
    %v1229 = vunpack.c.l.b16 %v1200
    %v1230 = vunpack.c.l.b16 %v1201
    %v1231 = vunpack.c.l.b16 %v1202
    %v1232 = vunpack.c.l.b16 %v1203
    %v1233 = vunpack.c.l.b16 %v1204
    %v1234 = vunpack.c.l.b16 %v1205
    %v1235 = vunpack.c.l.b16 %v1206
    %v1236 = vunpack.c.l.b16 %v1207
    %v1237 = vunpack.c.l.b16 %v1208
    %v1238 = vunpack.c.l.b16 %v1209
    %v1239 = vpack.c.b16 %v1228, %v1227
    %v1240 = vpack.c.b16 %v1230, %v1229
    %v1241 = vpack.c.b16 %v1232, %v1231
    %v1242 = vpack.c.b16 %v1234, %v1233
    %v1243 = vpack.c.b16 %v1236, %v1235
    %v1244 = vpack.c.b16 %v1238, %v1237
    %v1252 = vsel %vm377, %v1193, 0
    %v1255 = vsel %vm377, %v1194, 0
    %v1258 = vsel %vm377, %v1195, 0
    %v1261 = vsel %vm377, %v1196, 0
    %1263 = vmatprep.subr.bf16.mxu0 0
    %1264 = vmatpush1.bf16.msra.mxu0 0
    %1265 = vmatprep.subr.bf16.mxu0 0
    %1266 = vmatpush1.bf16.msra.mxu0 0
    %1267 = vmatprep.subr.bf16.mxu0 0
    %1268 = vmatpush1.bf16.msra.mxu0 %v1244
    %1269 = vmatprep.subr.bf16.mxu0 0
    %1270 = vmatpush1.bf16.msra.mxu0 %v1243
    %1271 = vmatprep.subr.bf16.mxu0 0
    %1272 = vmatpush1.bf16.msra.mxu0 %v1242
    %1273 = vmatprep.subr.bf16.mxu0 0
    %1274 = vmatpush1.bf16.msra.mxu0 %v1241
    %1275 = vmatprep.subr.bf16.mxu0 0
    %1276 = vmatpush1.bf16.msra.mxu0 %v1240
    %1277 = vmatprep.subr.bf16.mxu0 0
    %1278 = vmatpush1.bf16.msra.mxu0 %v1239
    %1279 = vmatprep.subr.bf16.mxu0 0
    %1280 = vmatpush2.bf16.msra.mxu0 0
    %1281 = vmatprep.subr.bf16.mxu0 0
    %1282 = vmatpush2.bf16.msra.mxu0 0
    %1283 = vmatprep.subr.bf16.mxu0 0
    %1284 = vmatpush2.bf16.msra.mxu0 0
    %1285 = vmatprep.subr.bf16.mxu0 0
    %1286 = vmatpush2.bf16.msra.mxu0 0
    %1287 = vmatprep.subr.bf16.mxu0 0
    %1288 = vmatpush2.bf16.msra.mxu0 0
    %1289 = vmatprep.subr.bf16.mxu0 0
    %1290 = vmatpush2.bf16.msra.mxu0 0
    %1291 = vmatprep.subr.bf16.mxu0 0
    %1292 = vmatpush2.bf16.msra.mxu0 0
    %1293 = vmatprep.subr.bf16.mxu0 0
    %1294 = vmatpush2.bf16.msra.mxu0 0
    %1295 = vmatprep.mubr.bf16.mxu0 0
    %1296 = vmatmul.mubr.bf16.gmra.mxu0 %v1252
    %v1297 = vpop.f32.mrf.mxu0
    %v1298 = vadd.f32 %v1214, %v1297
    %v1299 = vpop.f32.mrf.mxu0
    %v1300 = vpop.f32.mrf.mxu0
    %v1301 = vadd.f32 %v1214, %v1300
    %v1302 = vpop.f32.mrf.mxu0
    %1303 = vmatprep.mubr.bf16.mxu0 0
    %1304 = vmatmul.mubr.bf16.gmra.mxu0 %v1255
    %v1305 = vpop.f32.mrf.mxu0
    %v1306 = vpop.f32.mrf.mxu0
    %v1307 = vpop.f32.mrf.mxu0
    %v1308 = vpop.f32.mrf.mxu0
    %1309 = vmatprep.mubr.bf16.mxu0 0
    %1310 = vmatmul.mubr.bf16.gmra.mxu0 %v1258
    %v1311 = vpop.f32.mrf.mxu0
    %v1312 = vpop.f32.mrf.mxu0
    %v1313 = vpop.f32.mrf.mxu0
    %v1314 = vpop.f32.mrf.mxu0
    %1315 = vmatprep.mubr.bf16.mxu0 0
    %1316 = vmatmul.mubr.bf16.gmra.mxu0 %v1261
    %v1317 = vpop.f32.mrf.mxu0
    %v1318 = vadd.f32 %v1214, %v1317
    %v1319 = vpop.f32.mrf.mxu0
    %v1320 = vpop.f32.mrf.mxu0
    %v1321 = vadd.f32 %v1214, %v1320
    %v1322 = vpop.f32.mrf.mxu0
    %1323 = vdwg.mxu0
    %v1324 = vxor.u32 %v1298, 2147483648
    %v1325 = vxor.u32 %v1301, 2147483648
    %v1326 = vxor.u32 %v1318, 2147483648
    %v1327 = vxor.u32 %v1321, 2147483648
    %v1328 = vmul.f32 %v1324, 1.442695
    %v1329 = vpow.pop %v1328
    %v1330 = vmul.f32 %v1325, 1.442695
    %v1331 = vpow.pop %v1330
    %v1332 = vmul.f32 %v1326, 1.442695
    %v1333 = vpow.pop %v1332
    %v1334 = vmul.f32 %v1327, 1.442695
    %v1335 = vpow.pop %v1334
    %v1336 = vadd.f32 %v1329, 1.0
    %v1337 = vadd.f32 %v1331, 1.0
    %v1338 = vadd.f32 %v1333, 1.0
    %v1339 = vadd.f32 %v1335, 1.0
    %v1340 = vrcp.pop %v1336
    %v1341 = vmul.f32 1.0, %v1340
    %v1342 = vrcp.pop %v1337
    %v1343 = vmul.f32 1.0, %v1342
    %v1344 = vrcp.pop %v1338
    %v1345 = vmul.f32 1.0, %v1344
    %v1346 = vrcp.pop %v1339
    %v1347 = vmul.f32 1.0, %v1346
    %v1348 = vsub.f32 %v1298, %v1122
    %v1349 = vsub.f32 %v1301, %v1124
    %v1350 = vsub.f32 %v1318, %v1134
    %v1351 = vsub.f32 %v1321, %v1136
    %1356 = vrot.lane.b32.xlu0 %v1348, 96
    %v1357 = vpop.permute.xlu0 %1356
    %1358 = vrot.lane.b32.xlu0 %v1349, 96
    %v1359 = vpop.permute.xlu0 %1358
    %1360 = vrot.lane.b32.xlu0 %v1350, 96
    %v1361 = vpop.permute.xlu0 %1360
    %1362 = vrot.lane.b32.xlu0 %v1351, 96
    %v1363 = vpop.permute.xlu0 %1362
    %v1368 = vmul.f32 %v1341, %v1357
    %v1369 = vmul.f32 %v1343, %v1359
    %v1370 = vmul.f32 %v1345, %v1361
    %v1371 = vmul.f32 %v1347, %v1363
    %v1372 = vadd.f32 %v1089, %v1368
    %v1373 = vadd.f32 %v1090, %v1369
    %v1374 = vadd.f32 %v1095, %v1370
    %v1375 = vadd.f32 %v1096, %v1371
    %1376 = vst.msk [vmem:[#allocation2 + $0x20] sm:$0xff] %vm143, %v1372
    %1377 = vst.msk [vmem:[#allocation2 + $0x28] sm:$0xff] %vm143, %v1373
    %1378 = vst.msk [vmem:[#allocation2 + $0x50] sm:$0xff] %vm143, %v1374
    %1379 = vst.msk [vmem:[#allocation2 + $0x58] sm:$0xff] %vm143, %v1375
    %v1380 = vld [vmem:[#allocation2 + $0x20] sm:$0xff]
    %v1381 = vld [vmem:[#allocation2 + $0x28] sm:$0xff]
    %v1382 = vld [vmem:[#allocation2 + $0x30] sm:$0xff]
    %v1383 = vld [vmem:[#allocation2 + $0x38] sm:$0xff]
    %v1384 = vld [vmem:[#allocation2 + $0x40] sm:$0xff]
    %v1385 = vld [vmem:[#allocation2 + $0x48] sm:$0xff]
    %v1386 = vld [vmem:[#allocation2 + $0x50] sm:$0xff]
    %v1387 = vld [vmem:[#allocation2 + $0x58] sm:$0xff]
    %v1388 = vld [vmem:[#allocation2 + $0x1f] sm:$0xff]
    %v1389 = vld [vmem:[#allocation2 + $0x27] sm:$0xff]
    %v1390 = vld [vmem:[#allocation2 + $0x2f] sm:$0xff]
    %v1391 = vld [vmem:[#allocation2 + $0x37] sm:$0xff]
    %v1392 = vld [vmem:[#allocation2 + $0x3f] sm:$0xff]
    %v1393 = vld [vmem:[#allocation2 + $0x47] sm:$0xff]
    %v1394 = vld [vmem:[#allocation2 + $0x4f] sm:$0xff]
    %v1395 = vld [vmem:[#allocation2 + $0x57] sm:$0xff]
    %v1396 = vld [vmem:[#allocation2 + $0x21] sm:$0xff]
    %v1397 = vld [vmem:[#allocation2 + $0x29] sm:$0xff]
    %v1398 = vld [vmem:[#allocation2 + $0x31] sm:$0xff]
    %v1399 = vld [vmem:[#allocation2 + $0x39] sm:$0xff]
    %v1400 = vld [vmem:[#allocation2 + $0x41] sm:$0xff]
    %v1401 = vld [vmem:[#allocation2 + $0x49] sm:$0xff]
    %v1402 = vld [vmem:[#allocation2 + $0x51] sm:$0xff]
    %v1403 = vld [vmem:[#allocation2 + $0x59] sm:$0xff]
    %1412 = vrot.lane.b32.xlu0 %v1380, 32
    %v1413 = vpop.permute.xlu0 %1412
    %1414 = vrot.lane.b32.xlu0 %v1381, 32
    %v1415 = vpop.permute.xlu0 %1414
    %1416 = vrot.lane.b32.xlu0 %v1382, 32
    %v1417 = vpop.permute.xlu0 %1416
    %1418 = vrot.lane.b32.xlu0 %v1383, 32
    %v1419 = vpop.permute.xlu0 %1418
    %1420 = vrot.lane.b32.xlu0 %v1384, 32
    %v1421 = vpop.permute.xlu0 %1420
    %1422 = vrot.lane.b32.xlu0 %v1385, 32
    %v1423 = vpop.permute.xlu0 %1422
    %1424 = vrot.lane.b32.xlu0 %v1386, 32
    %v1425 = vpop.permute.xlu0 %1424
    %1426 = vrot.lane.b32.xlu0 %v1387, 32
    %v1427 = vpop.permute.xlu0 %1426
    %1444 = vrot.lane.b32.xlu0 %v1396, 64
    %v1445 = vpop.permute.xlu0 %1444
    %1446 = vrot.lane.b32.xlu0 %v1397, 64
    %v1447 = vpop.permute.xlu0 %1446
    %1448 = vrot.lane.b32.xlu0 %v1398, 64
    %v1449 = vpop.permute.xlu0 %1448
    %1450 = vrot.lane.b32.xlu0 %v1399, 64
    %v1451 = vpop.permute.xlu0 %1450
    %1452 = vrot.lane.b32.xlu0 %v1400, 64
    %v1453 = vpop.permute.xlu0 %1452
    %1454 = vrot.lane.b32.xlu0 %v1401, 64
    %v1455 = vpop.permute.xlu0 %1454
    %1456 = vrot.lane.b32.xlu0 %v1402, 64
    %v1457 = vpop.permute.xlu0 %1456
    %1458 = vrot.lane.b32.xlu0 %v1403, 64
    %v1459 = vpop.permute.xlu0 %1458
    %v1468 = vsel %vm143, %v1388, %v1413
    %v1469 = vsel %vm143, %v1389, %v1415
    %v1470 = vsel %vm143, %v1390, %v1417
    %v1471 = vsel %vm143, %v1391, %v1419
    %v1472 = vsel %vm143, %v1392, %v1421
    %v1473 = vsel %vm143, %v1393, %v1423
    %v1474 = vsel %vm143, %v1394, %v1425
    %v1475 = vsel %vm143, %v1395, %v1427
    %v1476 = vsel %vm311, %v1468, %v1445
    %v1477 = vsel %vm311, %v1469, %v1447
    %v1478 = vsel %vm311, %v1470, %v1449
    %v1479 = vsel %vm311, %v1471, %v1451
    %v1480 = vsel %vm311, %v1472, %v1453
    %v1481 = vsel %vm311, %v1473, %v1455
    %v1482 = vsel %vm311, %v1474, %v1457
    %v1483 = vsel %vm311, %v1475, %v1459
    %v1484 = vpack.c.bf16 %v1477, %v1476
    %v1485 = vpack.c.bf16 %v1479, %v1478
    %v1486 = vpack.c.bf16 %v1481, %v1480
    %v1487 = vpack.c.bf16 %v1483, %v1482
    %s1488 = scalar_lea.vmem %s5, 192
    %v1489 = vld [vmem:[%s1488] sm:$0xf]
    %v1490 = vld [vmem:[%s1488 + $0x4] sm:$0xf]
    %v1491 = vld [vmem:[%s1488 + $0x8] sm:$0xf]
    %v1492 = vld [vmem:[%s1488 + $0xc] sm:$0xf]
    %v1493 = vld [vmem:[%s1488 + $0x10] sm:$0xf]
    %v1494 = vld [vmem:[%s1488 + $0x14] sm:$0xf]
    %v1495 = vld [vmem:[%s1488 + $0x18] sm:$0xf]
    %v1496 = vld [vmem:[%s1488 + $0x1c] sm:$0xf]
    %v1497 = vld [vmem:[%s1488 + $0x20] sm:$0xf]
    %v1498 = vld [vmem:[%s1488 + $0x24] sm:$0xf]
    %v1499 = vld [vmem:[%s1488 + $0x28] sm:$0xf]
    %v1500 = vld [vmem:[%s1488 + $0x2c] sm:$0xf]
    %v1501 = vld [vmem:[%s6 + $0x4] sm:$0x1]
    %v1502 = vlaneseq
    %v1503 = vshrl.u32 %v1502, 7
    %v1504 = vsub.s32 0, %v1503
    %v1505 = vrot.slane %v1501, %v1504
    %v1518 = vunpack.c.l.b16 %v1489
    %v1519 = vunpack.c.l.b16 %v1490
    %v1520 = vunpack.c.l.b16 %v1491
    %v1521 = vunpack.c.l.b16 %v1492
    %v1522 = vunpack.c.l.b16 %v1493
    %v1523 = vunpack.c.l.b16 %v1494
    %v1524 = vunpack.c.l.b16 %v1495
    %v1525 = vunpack.c.l.b16 %v1496
    %v1526 = vunpack.c.l.b16 %v1497
    %v1527 = vunpack.c.l.b16 %v1498
    %v1528 = vunpack.c.l.b16 %v1499
    %v1529 = vunpack.c.l.b16 %v1500
    %v1530 = vpack.c.b16 %v1519, %v1518
    %v1531 = vpack.c.b16 %v1521, %v1520
    %v1532 = vpack.c.b16 %v1523, %v1522
    %v1533 = vpack.c.b16 %v1525, %v1524
    %v1534 = vpack.c.b16 %v1527, %v1526
    %v1535 = vpack.c.b16 %v1529, %v1528
    %v1543 = vsel %vm377, %v1484, 0
    %v1546 = vsel %vm377, %v1485, 0
    %v1549 = vsel %vm377, %v1486, 0
    %v1552 = vsel %vm377, %v1487, 0
    %1554 = vmatprep.subr.bf16.mxu0 0
    %1555 = vmatpush1.bf16.msra.mxu0 0
    %1556 = vmatprep.subr.bf16.mxu0 0
    %1557 = vmatpush1.bf16.msra.mxu0 0
    %1558 = vmatprep.subr.bf16.mxu0 0
    %1559 = vmatpush1.bf16.msra.mxu0 %v1535
    %1560 = vmatprep.subr.bf16.mxu0 0
    %1561 = vmatpush1.bf16.msra.mxu0 %v1534
    %1562 = vmatprep.subr.bf16.mxu0 0
    %1563 = vmatpush1.bf16.msra.mxu0 %v1533
    %1564 = vmatprep.subr.bf16.mxu0 0
    %1565 = vmatpush1.bf16.msra.mxu0 %v1532
    %1566 = vmatprep.subr.bf16.mxu0 0
    %1567 = vmatpush1.bf16.msra.mxu0 %v1531
    %1568 = vmatprep.subr.bf16.mxu0 0
    %1569 = vmatpush1.bf16.msra.mxu0 %v1530
    %1570 = vmatprep.subr.bf16.mxu0 0
    %1571 = vmatpush2.bf16.msra.mxu0 0
    %1572 = vmatprep.subr.bf16.mxu0 0
    %1573 = vmatpush2.bf16.msra.mxu0 0
    %1574 = vmatprep.subr.bf16.mxu0 0
    %1575 = vmatpush2.bf16.msra.mxu0 0
    %1576 = vmatprep.subr.bf16.mxu0 0
    %1577 = vmatpush2.bf16.msra.mxu0 0
    %1578 = vmatprep.subr.bf16.mxu0 0
    %1579 = vmatpush2.bf16.msra.mxu0 0
    %1580 = vmatprep.subr.bf16.mxu0 0
    %1581 = vmatpush2.bf16.msra.mxu0 0
    %1582 = vmatprep.subr.bf16.mxu0 0
    %1583 = vmatpush2.bf16.msra.mxu0 0
    %1584 = vmatprep.subr.bf16.mxu0 0
    %1585 = vmatpush2.bf16.msra.mxu0 0
    %1586 = vmatprep.mubr.bf16.mxu0 0
    %1587 = vmatmul.mubr.bf16.gmra.mxu0 %v1543
    %v1588 = vpop.f32.mrf.mxu0
    %v1589 = vadd.f32 %v1505, %v1588
    %v1590 = vpop.f32.mrf.mxu0
    %v1591 = vpop.f32.mrf.mxu0
    %v1592 = vadd.f32 %v1505, %v1591
    %v1593 = vpop.f32.mrf.mxu0
    %1594 = vmatprep.mubr.bf16.mxu0 0
    %1595 = vmatmul.mubr.bf16.gmra.mxu0 %v1546
    %v1596 = vpop.f32.mrf.mxu0
    %v1597 = vpop.f32.mrf.mxu0
    %v1598 = vpop.f32.mrf.mxu0
    %v1599 = vpop.f32.mrf.mxu0
    %1600 = vmatprep.mubr.bf16.mxu0 0
    %1601 = vmatmul.mubr.bf16.gmra.mxu0 %v1549
    %v1602 = vpop.f32.mrf.mxu0
    %v1603 = vpop.f32.mrf.mxu0
    %v1604 = vpop.f32.mrf.mxu0
    %v1605 = vpop.f32.mrf.mxu0
    %1606 = vmatprep.mubr.bf16.mxu0 0
    %1607 = vmatmul.mubr.bf16.gmra.mxu0 %v1552
    %v1608 = vpop.f32.mrf.mxu0
    %v1609 = vadd.f32 %v1505, %v1608
    %v1610 = vpop.f32.mrf.mxu0
    %v1611 = vpop.f32.mrf.mxu0
    %v1612 = vadd.f32 %v1505, %v1611
    %v1613 = vpop.f32.mrf.mxu0
    %1614 = vdwg.mxu0
    %v1615 = vxor.u32 %v1589, 2147483648
    %v1616 = vxor.u32 %v1592, 2147483648
    %v1617 = vxor.u32 %v1609, 2147483648
    %v1618 = vxor.u32 %v1612, 2147483648
    %v1619 = vmul.f32 %v1615, 1.442695
    %v1620 = vpow.pop %v1619
    %v1621 = vmul.f32 %v1616, 1.442695
    %v1622 = vpow.pop %v1621
    %v1623 = vmul.f32 %v1617, 1.442695
    %v1624 = vpow.pop %v1623
    %v1625 = vmul.f32 %v1618, 1.442695
    %v1626 = vpow.pop %v1625
    %v1627 = vadd.f32 %v1620, 1.0
    %v1628 = vadd.f32 %v1622, 1.0
    %v1629 = vadd.f32 %v1624, 1.0
    %v1630 = vadd.f32 %v1626, 1.0
    %v1631 = vrcp.pop %v1627
    %v1632 = vmul.f32 1.0, %v1631
    %v1633 = vrcp.pop %v1628
    %v1634 = vmul.f32 1.0, %v1633
    %v1635 = vrcp.pop %v1629
    %v1636 = vmul.f32 1.0, %v1635
    %v1637 = vrcp.pop %v1630
    %v1638 = vmul.f32 1.0, %v1637
    %v1639 = vsub.f32 %v1589, %v1413
    %v1640 = vsub.f32 %v1592, %v1415
    %v1641 = vsub.f32 %v1609, %v1425
    %v1642 = vsub.f32 %v1612, %v1427
    %1647 = vrot.lane.b32.xlu0 %v1639, 96
    %v1648 = vpop.permute.xlu0 %1647
    %1649 = vrot.lane.b32.xlu0 %v1640, 96
    %v1650 = vpop.permute.xlu0 %1649
    %1651 = vrot.lane.b32.xlu0 %v1641, 96
    %v1652 = vpop.permute.xlu0 %1651
    %1653 = vrot.lane.b32.xlu0 %v1642, 96
    %v1654 = vpop.permute.xlu0 %1653
    %v1659 = vmul.f32 %v1632, %v1648
    %v1660 = vmul.f32 %v1634, %v1650
    %v1661 = vmul.f32 %v1636, %v1652
    %v1662 = vmul.f32 %v1638, %v1654
    %v1663 = vadd.f32 %v1380, %v1659
    %v1664 = vadd.f32 %v1381, %v1660
    %v1665 = vadd.f32 %v1386, %v1661
    %v1666 = vadd.f32 %v1387, %v1662
    %1667 = vst.msk [vmem:[#allocation2 + $0x20] sm:$0xff] %vm143, %v1663
    %1668 = vst.msk [vmem:[#allocation2 + $0x28] sm:$0xff] %vm143, %v1664
    %1669 = vst.msk [vmem:[#allocation2 + $0x50] sm:$0xff] %vm143, %v1665
    %1670 = vst.msk [vmem:[#allocation2 + $0x58] sm:$0xff] %vm143, %v1666
    %v1671 = vld [vmem:[#allocation2 + $0x20] sm:$0xff]
    %v1672 = vld [vmem:[#allocation2 + $0x28] sm:$0xff]
    %v1673 = vld [vmem:[#allocation2 + $0x30] sm:$0xff]
    %v1674 = vld [vmem:[#allocation2 + $0x38] sm:$0xff]
    %v1675 = vld [vmem:[#allocation2 + $0x40] sm:$0xff]
    %v1676 = vld [vmem:[#allocation2 + $0x48] sm:$0xff]
    %v1677 = vld [vmem:[#allocation2 + $0x50] sm:$0xff]
    %v1678 = vld [vmem:[#allocation2 + $0x58] sm:$0xff]
    %v1679 = vld [vmem:[#allocation2 + $0x1d] sm:$0xff]
    %v1680 = vld [vmem:[#allocation2 + $0x25] sm:$0xff]
    %v1681 = vld [vmem:[#allocation2 + $0x2d] sm:$0xff]
    %v1682 = vld [vmem:[#allocation2 + $0x35] sm:$0xff]
    %v1683 = vld [vmem:[#allocation2 + $0x3d] sm:$0xff]
    %v1684 = vld [vmem:[#allocation2 + $0x45] sm:$0xff]
    %v1685 = vld [vmem:[#allocation2 + $0x4d] sm:$0xff]
    %v1686 = vld [vmem:[#allocation2 + $0x55] sm:$0xff]
    %v1687 = vld [vmem:[#allocation2 + $0x23] sm:$0xff]
    %v1688 = vld [vmem:[#allocation2 + $0x2b] sm:$0xff]
    %v1689 = vld [vmem:[#allocation2 + $0x33] sm:$0xff]
    %v1690 = vld [vmem:[#allocation2 + $0x3b] sm:$0xff]
    %v1691 = vld [vmem:[#allocation2 + $0x43] sm:$0xff]
    %v1692 = vld [vmem:[#allocation2 + $0x4b] sm:$0xff]
    %v1693 = vld [vmem:[#allocation2 + $0x53] sm:$0xff]
    %v1694 = vld [vmem:[#allocation2 + $0x5b] sm:$0xff]
    %1703 = vrot.lane.b32.xlu0 %v1671, 32
    %v1704 = vpop.permute.xlu0 %1703
    %1705 = vrot.lane.b32.xlu0 %v1672, 32
    %v1706 = vpop.permute.xlu0 %1705
    %1707 = vrot.lane.b32.xlu0 %v1673, 32
    %v1708 = vpop.permute.xlu0 %1707
    %1709 = vrot.lane.b32.xlu0 %v1674, 32
    %v1710 = vpop.permute.xlu0 %1709
    %1711 = vrot.lane.b32.xlu0 %v1675, 32
    %v1712 = vpop.permute.xlu0 %1711
    %1713 = vrot.lane.b32.xlu0 %v1676, 32
    %v1714 = vpop.permute.xlu0 %1713
    %1715 = vrot.lane.b32.xlu0 %v1677, 32
    %v1716 = vpop.permute.xlu0 %1715
    %1717 = vrot.lane.b32.xlu0 %v1678, 32
    %v1718 = vpop.permute.xlu0 %1717
    %1735 = vrot.lane.b32.xlu0 %v1687, 64
    %v1736 = vpop.permute.xlu0 %1735
    %1737 = vrot.lane.b32.xlu0 %v1688, 64
    %v1738 = vpop.permute.xlu0 %1737
    %1739 = vrot.lane.b32.xlu0 %v1689, 64
    %v1740 = vpop.permute.xlu0 %1739
    %1741 = vrot.lane.b32.xlu0 %v1690, 64
    %v1742 = vpop.permute.xlu0 %1741
    %1743 = vrot.lane.b32.xlu0 %v1691, 64
    %v1744 = vpop.permute.xlu0 %1743
    %1745 = vrot.lane.b32.xlu0 %v1692, 64
    %v1746 = vpop.permute.xlu0 %1745
    %1747 = vrot.lane.b32.xlu0 %v1693, 64
    %v1748 = vpop.permute.xlu0 %1747
    %1749 = vrot.lane.b32.xlu0 %v1694, 64
    %v1750 = vpop.permute.xlu0 %1749
    %v1759 = vsel %vm143, %v1679, %v1704
    %v1760 = vsel %vm143, %v1680, %v1706
    %v1761 = vsel %vm143, %v1681, %v1708
    %v1762 = vsel %vm143, %v1682, %v1710
    %v1763 = vsel %vm143, %v1683, %v1712
    %v1764 = vsel %vm143, %v1684, %v1714
    %v1765 = vsel %vm143, %v1685, %v1716
    %v1766 = vsel %vm143, %v1686, %v1718
    %v1767 = vsel %vm311, %v1759, %v1736
    %v1768 = vsel %vm311, %v1760, %v1738
    %v1769 = vsel %vm311, %v1761, %v1740
    %v1770 = vsel %vm311, %v1762, %v1742
    %v1771 = vsel %vm311, %v1763, %v1744
    %v1772 = vsel %vm311, %v1764, %v1746
    %v1773 = vsel %vm311, %v1765, %v1748
    %v1774 = vsel %vm311, %v1766, %v1750
    %v1775 = vpack.c.bf16 %v1768, %v1767
    %v1776 = vpack.c.bf16 %v1770, %v1769
    %v1777 = vpack.c.bf16 %v1772, %v1771
    %v1778 = vpack.c.bf16 %v1774, %v1773
    %s1779 = scalar_lea.vmem %s5, 240
    %v1780 = vld [vmem:[%s1779] sm:$0xf]
    %v1781 = vld [vmem:[%s1779 + $0x4] sm:$0xf]
    %v1782 = vld [vmem:[%s1779 + $0x8] sm:$0xf]
    %v1783 = vld [vmem:[%s1779 + $0xc] sm:$0xf]
    %v1784 = vld [vmem:[%s1779 + $0x10] sm:$0xf]
    %v1785 = vld [vmem:[%s1779 + $0x14] sm:$0xf]
    %v1786 = vld [vmem:[%s1779 + $0x18] sm:$0xf]
    %v1787 = vld [vmem:[%s1779 + $0x1c] sm:$0xf]
    %v1788 = vld [vmem:[%s1779 + $0x20] sm:$0xf]
    %v1789 = vld [vmem:[%s1779 + $0x24] sm:$0xf]
    %v1790 = vld [vmem:[%s1779 + $0x28] sm:$0xf]
    %v1791 = vld [vmem:[%s1779 + $0x2c] sm:$0xf]
    %v1792 = vld [vmem:[%s6 + $0x5] sm:$0x1]
    %v1793 = vlaneseq
    %v1794 = vshrl.u32 %v1793, 7
    %v1795 = vsub.s32 0, %v1794
    %v1796 = vrot.slane %v1792, %v1795
    %v1809 = vunpack.c.l.b16 %v1780
    %v1810 = vunpack.c.l.b16 %v1781
    %v1811 = vunpack.c.l.b16 %v1782
    %v1812 = vunpack.c.l.b16 %v1783
    %v1813 = vunpack.c.l.b16 %v1784
    %v1814 = vunpack.c.l.b16 %v1785
    %v1815 = vunpack.c.l.b16 %v1786
    %v1816 = vunpack.c.l.b16 %v1787
    %v1817 = vunpack.c.l.b16 %v1788
    %v1818 = vunpack.c.l.b16 %v1789
    %v1819 = vunpack.c.l.b16 %v1790
    %v1820 = vunpack.c.l.b16 %v1791
    %v1821 = vpack.c.b16 %v1810, %v1809
    %v1822 = vpack.c.b16 %v1812, %v1811
    %v1823 = vpack.c.b16 %v1814, %v1813
    %v1824 = vpack.c.b16 %v1816, %v1815
    %v1825 = vpack.c.b16 %v1818, %v1817
    %v1826 = vpack.c.b16 %v1820, %v1819
    %v1834 = vsel %vm377, %v1775, 0
    %v1837 = vsel %vm377, %v1776, 0
    %v1840 = vsel %vm377, %v1777, 0
    %v1843 = vsel %vm377, %v1778, 0
    %1845 = vmatprep.subr.bf16.mxu0 0
    %1846 = vmatpush1.bf16.msra.mxu0 0
    %1847 = vmatprep.subr.bf16.mxu0 0
    %1848 = vmatpush1.bf16.msra.mxu0 0
    %1849 = vmatprep.subr.bf16.mxu0 0
    %1850 = vmatpush1.bf16.msra.mxu0 %v1826
    %1851 = vmatprep.subr.bf16.mxu0 0
    %1852 = vmatpush1.bf16.msra.mxu0 %v1825
    %1853 = vmatprep.subr.bf16.mxu0 0
    %1854 = vmatpush1.bf16.msra.mxu0 %v1824
    %1855 = vmatprep.subr.bf16.mxu0 0
    %1856 = vmatpush1.bf16.msra.mxu0 %v1823
    %1857 = vmatprep.subr.bf16.mxu0 0
    %1858 = vmatpush1.bf16.msra.mxu0 %v1822
    %1859 = vmatprep.subr.bf16.mxu0 0
    %1860 = vmatpush1.bf16.msra.mxu0 %v1821
    %1861 = vmatprep.subr.bf16.mxu0 0
    %1862 = vmatpush2.bf16.msra.mxu0 0
    %1863 = vmatprep.subr.bf16.mxu0 0
    %1864 = vmatpush2.bf16.msra.mxu0 0
    %1865 = vmatprep.subr.bf16.mxu0 0
    %1866 = vmatpush2.bf16.msra.mxu0 0
    %1867 = vmatprep.subr.bf16.mxu0 0
    %1868 = vmatpush2.bf16.msra.mxu0 0
    %1869 = vmatprep.subr.bf16.mxu0 0
    %1870 = vmatpush2.bf16.msra.mxu0 0
    %1871 = vmatprep.subr.bf16.mxu0 0
    %1872 = vmatpush2.bf16.msra.mxu0 0
    %1873 = vmatprep.subr.bf16.mxu0 0
    %1874 = vmatpush2.bf16.msra.mxu0 0
    %1875 = vmatprep.subr.bf16.mxu0 0
    %1876 = vmatpush2.bf16.msra.mxu0 0
    %1877 = vmatprep.mubr.bf16.mxu0 0
    %1878 = vmatmul.mubr.bf16.gmra.mxu0 %v1834
    %v1879 = vpop.f32.mrf.mxu0
    %v1880 = vadd.f32 %v1796, %v1879
    %v1881 = vpop.f32.mrf.mxu0
    %v1882 = vpop.f32.mrf.mxu0
    %v1883 = vadd.f32 %v1796, %v1882
    %v1884 = vpop.f32.mrf.mxu0
    %1885 = vmatprep.mubr.bf16.mxu0 0
    %1886 = vmatmul.mubr.bf16.gmra.mxu0 %v1837
    %v1887 = vpop.f32.mrf.mxu0
    %v1888 = vpop.f32.mrf.mxu0
    %v1889 = vpop.f32.mrf.mxu0
    %v1890 = vpop.f32.mrf.mxu0
    %1891 = vmatprep.mubr.bf16.mxu0 0
    %1892 = vmatmul.mubr.bf16.gmra.mxu0 %v1840
    %v1893 = vpop.f32.mrf.mxu0
    %v1894 = vpop.f32.mrf.mxu0
    %v1895 = vpop.f32.mrf.mxu0
    %v1896 = vpop.f32.mrf.mxu0
    %1897 = vmatprep.mubr.bf16.mxu0 0
    %1898 = vmatmul.mubr.bf16.gmra.mxu0 %v1843
    %v1899 = vpop.f32.mrf.mxu0
    %v1900 = vadd.f32 %v1796, %v1899
    %v1901 = vpop.f32.mrf.mxu0
    %v1902 = vpop.f32.mrf.mxu0
    %v1903 = vadd.f32 %v1796, %v1902
    %v1904 = vpop.f32.mrf.mxu0
    %1905 = vdwg.mxu0
    %v1906 = vxor.u32 %v1880, 2147483648
    %v1907 = vxor.u32 %v1883, 2147483648
    %v1908 = vxor.u32 %v1900, 2147483648
    %v1909 = vxor.u32 %v1903, 2147483648
    %v1910 = vmul.f32 %v1906, 1.442695
    %v1911 = vpow.pop %v1910
    %v1912 = vmul.f32 %v1907, 1.442695
    %v1913 = vpow.pop %v1912
    %v1914 = vmul.f32 %v1908, 1.442695
    %v1915 = vpow.pop %v1914
    %v1916 = vmul.f32 %v1909, 1.442695
    %v1917 = vpow.pop %v1916
    %v1918 = vadd.f32 %v1911, 1.0
    %v1919 = vadd.f32 %v1913, 1.0
    %v1920 = vadd.f32 %v1915, 1.0
    %v1921 = vadd.f32 %v1917, 1.0
    %v1922 = vrcp.pop %v1918
    %v1923 = vmul.f32 1.0, %v1922
    %v1924 = vrcp.pop %v1919
    %v1925 = vmul.f32 1.0, %v1924
    %v1926 = vrcp.pop %v1920
    %v1927 = vmul.f32 1.0, %v1926
    %v1928 = vrcp.pop %v1921
    %v1929 = vmul.f32 1.0, %v1928
    %v1930 = vsub.f32 %v1880, %v1704
    %v1931 = vsub.f32 %v1883, %v1706
    %v1932 = vsub.f32 %v1900, %v1716
    %v1933 = vsub.f32 %v1903, %v1718
    %1938 = vrot.lane.b32.xlu0 %v1930, 96
    %v1939 = vpop.permute.xlu0 %1938
    %1940 = vrot.lane.b32.xlu0 %v1931, 96
    %v1941 = vpop.permute.xlu0 %1940
    %1942 = vrot.lane.b32.xlu0 %v1932, 96
    %v1943 = vpop.permute.xlu0 %1942
    %1944 = vrot.lane.b32.xlu0 %v1933, 96
    %v1945 = vpop.permute.xlu0 %1944
    %v1950 = vmul.f32 %v1923, %v1939
    %v1951 = vmul.f32 %v1925, %v1941
    %v1952 = vmul.f32 %v1927, %v1943
    %v1953 = vmul.f32 %v1929, %v1945
    %v1954 = vadd.f32 %v1671, %v1950
    %v1955 = vadd.f32 %v1672, %v1951
    %v1956 = vadd.f32 %v1677, %v1952
    %v1957 = vadd.f32 %v1678, %v1953
    %1958 = vst.msk [vmem:[#allocation2 + $0x20] sm:$0xff] %vm143, %v1954
    %1959 = vst.msk [vmem:[#allocation2 + $0x28] sm:$0xff] %vm143, %v1955
    %1960 = vst.msk [vmem:[#allocation2 + $0x50] sm:$0xff] %vm143, %v1956
    %1961 = vst.msk [vmem:[#allocation2 + $0x58] sm:$0xff] %vm143, %v1957
    %v1962 = vld [vmem:[#allocation2 + $0x20] sm:$0xff]
    %v1963 = vld [vmem:[#allocation2 + $0x28] sm:$0xff]
    %v1964 = vld [vmem:[#allocation2 + $0x30] sm:$0xff]
    %v1965 = vld [vmem:[#allocation2 + $0x38] sm:$0xff]
    %v1966 = vld [vmem:[#allocation2 + $0x40] sm:$0xff]
    %v1967 = vld [vmem:[#allocation2 + $0x48] sm:$0xff]
    %v1968 = vld [vmem:[#allocation2 + $0x50] sm:$0xff]
    %v1969 = vld [vmem:[#allocation2 + $0x58] sm:$0xff]
    %v1970 = vld [vmem:[#allocation2 + $0x17] sm:$0xff]
    %v1971 = vld [vmem:[#allocation2 + $0x1f] sm:$0xff]
    %v1972 = vld [vmem:[#allocation2 + $0x27] sm:$0xff]
    %v1973 = vld [vmem:[#allocation2 + $0x2f] sm:$0xff]
    %v1974 = vld [vmem:[#allocation2 + $0x37] sm:$0xff]
    %v1975 = vld [vmem:[#allocation2 + $0x3f] sm:$0xff]
    %v1976 = vld [vmem:[#allocation2 + $0x47] sm:$0xff]
    %v1977 = vld [vmem:[#allocation2 + $0x4f] sm:$0xff]
    %v1978 = vld [vmem:[#allocation2 + $0x29] sm:$0xff]
    %v1979 = vld [vmem:[#allocation2 + $0x31] sm:$0xff]
    %v1980 = vld [vmem:[#allocation2 + $0x39] sm:$0xff]
    %v1981 = vld [vmem:[#allocation2 + $0x41] sm:$0xff]
    %v1982 = vld [vmem:[#allocation2 + $0x49] sm:$0xff]
    %v1983 = vld [vmem:[#allocation2 + $0x51] sm:$0xff]
    %v1984 = vld [vmem:[#allocation2 + $0x59] sm:$0xff]
    %v1985 = vld [vmem:[#allocation2 + $0x61] sm:$0xff]
    %1994 = vrot.lane.b32.xlu0 %v1962, 32
    %v1995 = vpop.permute.xlu0 %1994
    %1996 = vrot.lane.b32.xlu0 %v1963, 32
    %v1997 = vpop.permute.xlu0 %1996
    %1998 = vrot.lane.b32.xlu0 %v1964, 32
    %v1999 = vpop.permute.xlu0 %1998
    %2000 = vrot.lane.b32.xlu0 %v1965, 32
    %v2001 = vpop.permute.xlu0 %2000
    %2002 = vrot.lane.b32.xlu0 %v1966, 32
    %v2003 = vpop.permute.xlu0 %2002
    %2004 = vrot.lane.b32.xlu0 %v1967, 32
    %v2005 = vpop.permute.xlu0 %2004
    %2006 = vrot.lane.b32.xlu0 %v1968, 32
    %v2007 = vpop.permute.xlu0 %2006
    %2008 = vrot.lane.b32.xlu0 %v1969, 32
    %v2009 = vpop.permute.xlu0 %2008
    %2026 = vrot.lane.b32.xlu0 %v1978, 64
    %v2027 = vpop.permute.xlu0 %2026
    %2028 = vrot.lane.b32.xlu0 %v1979, 64
    %v2029 = vpop.permute.xlu0 %2028
    %2030 = vrot.lane.b32.xlu0 %v1980, 64
    %v2031 = vpop.permute.xlu0 %2030
    %2032 = vrot.lane.b32.xlu0 %v1981, 64
    %v2033 = vpop.permute.xlu0 %2032
    %2034 = vrot.lane.b32.xlu0 %v1982, 64
    %v2035 = vpop.permute.xlu0 %2034
    %2036 = vrot.lane.b32.xlu0 %v1983, 64
    %v2037 = vpop.permute.xlu0 %2036
    %2038 = vrot.lane.b32.xlu0 %v1984, 64
    %v2039 = vpop.permute.xlu0 %2038
    %2040 = vrot.lane.b32.xlu0 %v1985, 64
    %v2041 = vpop.permute.xlu0 %2040
    %v2050 = vsel %vm143, %v1970, %v1995
    %v2051 = vsel %vm143, %v1971, %v1997
    %v2052 = vsel %vm143, %v1972, %v1999
    %v2053 = vsel %vm143, %v1973, %v2001
    %v2054 = vsel %vm143, %v1974, %v2003
    %v2055 = vsel %vm143, %v1975, %v2005
    %v2056 = vsel %vm143, %v1976, %v2007
    %v2057 = vsel %vm143, %v1977, %v2009
    %v2058 = vsel %vm311, %v2050, %v2027
    %v2059 = vsel %vm311, %v2051, %v2029
    %v2060 = vsel %vm311, %v2052, %v2031
    %v2061 = vsel %vm311, %v2053, %v2033
    %v2062 = vsel %vm311, %v2054, %v2035
    %v2063 = vsel %vm311, %v2055, %v2037
    %v2064 = vsel %vm311, %v2056, %v2039
    %v2065 = vsel %vm311, %v2057, %v2041
    %v2066 = vpack.c.bf16 %v2059, %v2058
    %v2067 = vpack.c.bf16 %v2061, %v2060
    %v2068 = vpack.c.bf16 %v2063, %v2062
    %v2069 = vpack.c.bf16 %v2065, %v2064
    %s2070 = scalar_lea.vmem %s5, 288
    %v2071 = vld [vmem:[%s2070] sm:$0xf]
    %v2072 = vld [vmem:[%s2070 + $0x4] sm:$0xf]
    %v2073 = vld [vmem:[%s2070 + $0x8] sm:$0xf]
    %v2074 = vld [vmem:[%s2070 + $0xc] sm:$0xf]
    %v2075 = vld [vmem:[%s2070 + $0x10] sm:$0xf]
    %v2076 = vld [vmem:[%s2070 + $0x14] sm:$0xf]
    %v2077 = vld [vmem:[%s2070 + $0x18] sm:$0xf]
    %v2078 = vld [vmem:[%s2070 + $0x1c] sm:$0xf]
    %v2079 = vld [vmem:[%s2070 + $0x20] sm:$0xf]
    %v2080 = vld [vmem:[%s2070 + $0x24] sm:$0xf]
    %v2081 = vld [vmem:[%s2070 + $0x28] sm:$0xf]
    %v2082 = vld [vmem:[%s2070 + $0x2c] sm:$0xf]
    %v2083 = vld [vmem:[%s6 + $0x6] sm:$0x1]
    %v2084 = vlaneseq
    %v2085 = vshrl.u32 %v2084, 7
    %v2086 = vsub.s32 0, %v2085
    %v2087 = vrot.slane %v2083, %v2086
    %v2100 = vunpack.c.l.b16 %v2071
    %v2101 = vunpack.c.l.b16 %v2072
    %v2102 = vunpack.c.l.b16 %v2073
    %v2103 = vunpack.c.l.b16 %v2074
    %v2104 = vunpack.c.l.b16 %v2075
    %v2105 = vunpack.c.l.b16 %v2076
    %v2106 = vunpack.c.l.b16 %v2077
    %v2107 = vunpack.c.l.b16 %v2078
    %v2108 = vunpack.c.l.b16 %v2079
    %v2109 = vunpack.c.l.b16 %v2080
    %v2110 = vunpack.c.l.b16 %v2081
    %v2111 = vunpack.c.l.b16 %v2082
    %v2112 = vpack.c.b16 %v2101, %v2100
    %v2113 = vpack.c.b16 %v2103, %v2102
    %v2114 = vpack.c.b16 %v2105, %v2104
    %v2115 = vpack.c.b16 %v2107, %v2106
    %v2116 = vpack.c.b16 %v2109, %v2108
    %v2117 = vpack.c.b16 %v2111, %v2110
    %v2125 = vsel %vm377, %v2066, 0
    %v2128 = vsel %vm377, %v2067, 0
    %v2131 = vsel %vm377, %v2068, 0
    %v2134 = vsel %vm377, %v2069, 0
    %2136 = vmatprep.subr.bf16.mxu0 0
    %2137 = vmatpush1.bf16.msra.mxu0 0
    %2138 = vmatprep.subr.bf16.mxu0 0
    %2139 = vmatpush1.bf16.msra.mxu0 0
    %2140 = vmatprep.subr.bf16.mxu0 0
    %2141 = vmatpush1.bf16.msra.mxu0 %v2117
    %2142 = vmatprep.subr.bf16.mxu0 0
    %2143 = vmatpush1.bf16.msra.mxu0 %v2116
    %2144 = vmatprep.subr.bf16.mxu0 0
    %2145 = vmatpush1.bf16.msra.mxu0 %v2115
    %2146 = vmatprep.subr.bf16.mxu0 0
    %2147 = vmatpush1.bf16.msra.mxu0 %v2114
    %2148 = vmatprep.subr.bf16.mxu0 0
    %2149 = vmatpush1.bf16.msra.mxu0 %v2113
    %2150 = vmatprep.subr.bf16.mxu0 0
    %2151 = vmatpush1.bf16.msra.mxu0 %v2112
    %2152 = vmatprep.subr.bf16.mxu0 0
    %2153 = vmatpush2.bf16.msra.mxu0 0
    %2154 = vmatprep.subr.bf16.mxu0 0
    %2155 = vmatpush2.bf16.msra.mxu0 0
    %2156 = vmatprep.subr.bf16.mxu0 0
    %2157 = vmatpush2.bf16.msra.mxu0 0
    %2158 = vmatprep.subr.bf16.mxu0 0
    %2159 = vmatpush2.bf16.msra.mxu0 0
    %2160 = vmatprep.subr.bf16.mxu0 0
    %2161 = vmatpush2.bf16.msra.mxu0 0
    %2162 = vmatprep.subr.bf16.mxu0 0
    %2163 = vmatpush2.bf16.msra.mxu0 0
    %2164 = vmatprep.subr.bf16.mxu0 0
    %2165 = vmatpush2.bf16.msra.mxu0 0
    %2166 = vmatprep.subr.bf16.mxu0 0
    %2167 = vmatpush2.bf16.msra.mxu0 0
    %2168 = vmatprep.mubr.bf16.mxu0 0
    %2169 = vmatmul.mubr.bf16.gmra.mxu0 %v2125
    %v2170 = vpop.f32.mrf.mxu0
    %v2171 = vadd.f32 %v2087, %v2170
    %v2172 = vpop.f32.mrf.mxu0
    %v2173 = vpop.f32.mrf.mxu0
    %v2174 = vadd.f32 %v2087, %v2173
    %v2175 = vpop.f32.mrf.mxu0
    %2176 = vmatprep.mubr.bf16.mxu0 0
    %2177 = vmatmul.mubr.bf16.gmra.mxu0 %v2128
    %v2178 = vpop.f32.mrf.mxu0
    %v2179 = vpop.f32.mrf.mxu0
    %v2180 = vpop.f32.mrf.mxu0
    %v2181 = vpop.f32.mrf.mxu0
    %2182 = vmatprep.mubr.bf16.mxu0 0
    %2183 = vmatmul.mubr.bf16.gmra.mxu0 %v2131
    %v2184 = vpop.f32.mrf.mxu0
    %v2185 = vpop.f32.mrf.mxu0
    %v2186 = vpop.f32.mrf.mxu0
    %v2187 = vpop.f32.mrf.mxu0
    %2188 = vmatprep.mubr.bf16.mxu0 0
    %2189 = vmatmul.mubr.bf16.gmra.mxu0 %v2134
    %v2190 = vpop.f32.mrf.mxu0
    %v2191 = vadd.f32 %v2087, %v2190
    %v2192 = vpop.f32.mrf.mxu0
    %v2193 = vpop.f32.mrf.mxu0
    %v2194 = vadd.f32 %v2087, %v2193
    %v2195 = vpop.f32.mrf.mxu0
    %2196 = vdwg.mxu0
    %v2197 = vxor.u32 %v2171, 2147483648
    %v2198 = vxor.u32 %v2174, 2147483648
    %v2199 = vxor.u32 %v2191, 2147483648
    %v2200 = vxor.u32 %v2194, 2147483648
    %v2201 = vmul.f32 %v2197, 1.442695
    %v2202 = vpow.pop %v2201
    %v2203 = vmul.f32 %v2198, 1.442695
    %v2204 = vpow.pop %v2203
    %v2205 = vmul.f32 %v2199, 1.442695
    %v2206 = vpow.pop %v2205
    %v2207 = vmul.f32 %v2200, 1.442695
    %v2208 = vpow.pop %v2207
    %v2209 = vadd.f32 %v2202, 1.0
    %v2210 = vadd.f32 %v2204, 1.0
    %v2211 = vadd.f32 %v2206, 1.0
    %v2212 = vadd.f32 %v2208, 1.0
    %v2213 = vrcp.pop %v2209
    %v2214 = vmul.f32 1.0, %v2213
    %v2215 = vrcp.pop %v2210
    %v2216 = vmul.f32 1.0, %v2215
    %v2217 = vrcp.pop %v2211
    %v2218 = vmul.f32 1.0, %v2217
    %v2219 = vrcp.pop %v2212
    %v2220 = vmul.f32 1.0, %v2219
    %v2221 = vsub.f32 %v2171, %v1995
    %v2222 = vsub.f32 %v2174, %v1997
    %v2223 = vsub.f32 %v2191, %v2007
    %v2224 = vsub.f32 %v2194, %v2009
    %2229 = vrot.lane.b32.xlu0 %v2221, 96
    %v2230 = vpop.permute.xlu0 %2229
    %2231 = vrot.lane.b32.xlu0 %v2222, 96
    %v2232 = vpop.permute.xlu0 %2231
    %2233 = vrot.lane.b32.xlu0 %v2223, 96
    %v2234 = vpop.permute.xlu0 %2233
    %2235 = vrot.lane.b32.xlu0 %v2224, 96
    %v2236 = vpop.permute.xlu0 %2235
    %v2241 = vmul.f32 %v2214, %v2230
    %v2242 = vmul.f32 %v2216, %v2232
    %v2243 = vmul.f32 %v2218, %v2234
    %v2244 = vmul.f32 %v2220, %v2236
    %v2245 = vadd.f32 %v1962, %v2241
    %v2246 = vadd.f32 %v1963, %v2242
    %v2247 = vadd.f32 %v1968, %v2243
    %v2248 = vadd.f32 %v1969, %v2244
    %2249 = vst.msk [vmem:[#allocation2 + $0x20] sm:$0xff] %vm143, %v2245
    %2250 = vst.msk [vmem:[#allocation2 + $0x28] sm:$0xff] %vm143, %v2246
    %2251 = vst.msk [vmem:[#allocation2 + $0x50] sm:$0xff] %vm143, %v2247
    %2252 = vst.msk [vmem:[#allocation2 + $0x58] sm:$0xff] %vm143, %v2248
    %v2253 = vld [vmem:[#allocation2 + $0x20] sm:$0xff]
    %v2254 = vld [vmem:[#allocation2 + $0x28] sm:$0xff]
    %v2255 = vld [vmem:[#allocation2 + $0x30] sm:$0xff]
    %v2256 = vld [vmem:[#allocation2 + $0x38] sm:$0xff]
    %v2257 = vld [vmem:[#allocation2 + $0x40] sm:$0xff]
    %v2258 = vld [vmem:[#allocation2 + $0x48] sm:$0xff]
    %v2259 = vld [vmem:[#allocation2 + $0x50] sm:$0xff]
    %v2260 = vld [vmem:[#allocation2 + $0x58] sm:$0xff]
    %v2261 = vld [vmem:[#allocation2 + $0x5] sm:$0xff]
    %v2262 = vld [vmem:[#allocation2 + $0xd] sm:$0xff]
    %v2263 = vld [vmem:[#allocation2 + $0x15] sm:$0xff]
    %v2264 = vld [vmem:[#allocation2 + $0x1d] sm:$0xff]
    %v2265 = vld [vmem:[#allocation2 + $0x25] sm:$0xff]
    %v2266 = vld [vmem:[#allocation2 + $0x2d] sm:$0xff]
    %v2267 = vld [vmem:[#allocation2 + $0x35] sm:$0xff]
    %v2268 = vld [vmem:[#allocation2 + $0x3d] sm:$0xff]
    %v2269 = vld [vmem:[#allocation2 + $0x3b] sm:$0xff]
    %v2270 = vld [vmem:[#allocation2 + $0x43] sm:$0xff]
    %v2271 = vld [vmem:[#allocation2 + $0x4b] sm:$0xff]
    %v2272 = vld [vmem:[#allocation2 + $0x53] sm:$0xff]
    %v2273 = vld [vmem:[#allocation2 + $0x5b] sm:$0xff]
    %v2274 = vld [vmem:[#allocation2 + $0x63] sm:$0xff]
    %v2275 = vld [vmem:[#allocation2 + $0x6b] sm:$0xff]
    %v2276 = vld [vmem:[#allocation2 + $0x73] sm:$0xff]
    %2285 = vrot.lane.b32.xlu0 %v2253, 32
    %v2286 = vpop.permute.xlu0 %2285
    %2287 = vrot.lane.b32.xlu0 %v2254, 32
    %v2288 = vpop.permute.xlu0 %2287
    %2289 = vrot.lane.b32.xlu0 %v2255, 32
    %v2290 = vpop.permute.xlu0 %2289
    %2291 = vrot.lane.b32.xlu0 %v2256, 32
    %v2292 = vpop.permute.xlu0 %2291
    %2293 = vrot.lane.b32.xlu0 %v2257, 32
    %v2294 = vpop.permute.xlu0 %2293
    %2295 = vrot.lane.b32.xlu0 %v2258, 32
    %v2296 = vpop.permute.xlu0 %2295
    %2297 = vrot.lane.b32.xlu0 %v2259, 32
    %v2298 = vpop.permute.xlu0 %2297
    %2299 = vrot.lane.b32.xlu0 %v2260, 32
    %v2300 = vpop.permute.xlu0 %2299
    %2317 = vrot.lane.b32.xlu0 %v2269, 64
    %v2318 = vpop.permute.xlu0 %2317
    %2319 = vrot.lane.b32.xlu0 %v2270, 64
    %v2320 = vpop.permute.xlu0 %2319
    %2321 = vrot.lane.b32.xlu0 %v2271, 64
    %v2322 = vpop.permute.xlu0 %2321
    %2323 = vrot.lane.b32.xlu0 %v2272, 64
    %v2324 = vpop.permute.xlu0 %2323
    %2325 = vrot.lane.b32.xlu0 %v2273, 64
    %v2326 = vpop.permute.xlu0 %2325
    %2327 = vrot.lane.b32.xlu0 %v2274, 64
    %v2328 = vpop.permute.xlu0 %2327
    %2329 = vrot.lane.b32.xlu0 %v2275, 64
    %v2330 = vpop.permute.xlu0 %2329
    %2331 = vrot.lane.b32.xlu0 %v2276, 64
    %v2332 = vpop.permute.xlu0 %2331
    %v2341 = vsel %vm143, %v2261, %v2286
    %v2342 = vsel %vm143, %v2262, %v2288
    %v2343 = vsel %vm143, %v2263, %v2290
    %v2344 = vsel %vm143, %v2264, %v2292
    %v2345 = vsel %vm143, %v2265, %v2294
    %v2346 = vsel %vm143, %v2266, %v2296
    %v2347 = vsel %vm143, %v2267, %v2298
    %v2348 = vsel %vm143, %v2268, %v2300
    %v2349 = vsel %vm311, %v2341, %v2318
    %v2350 = vsel %vm311, %v2342, %v2320
    %v2351 = vsel %vm311, %v2343, %v2322
    %v2352 = vsel %vm311, %v2344, %v2324
    %v2353 = vsel %vm311, %v2345, %v2326
    %v2354 = vsel %vm311, %v2346, %v2328
    %v2355 = vsel %vm311, %v2347, %v2330
    %v2356 = vsel %vm311, %v2348, %v2332
    %v2357 = vpack.c.bf16 %v2350, %v2349
    %v2358 = vpack.c.bf16 %v2352, %v2351
    %v2359 = vpack.c.bf16 %v2354, %v2353
    %v2360 = vpack.c.bf16 %v2356, %v2355
    %s2361 = scalar_lea.vmem %s5, 336
    %v2362 = vld [vmem:[%s2361] sm:$0xf]
    %v2363 = vld [vmem:[%s2361 + $0x4] sm:$0xf]
    %v2364 = vld [vmem:[%s2361 + $0x8] sm:$0xf]
    %v2365 = vld [vmem:[%s2361 + $0xc] sm:$0xf]
    %v2366 = vld [vmem:[%s2361 + $0x10] sm:$0xf]
    %v2367 = vld [vmem:[%s2361 + $0x14] sm:$0xf]
    %v2368 = vld [vmem:[%s2361 + $0x18] sm:$0xf]
    %v2369 = vld [vmem:[%s2361 + $0x1c] sm:$0xf]
    %v2370 = vld [vmem:[%s2361 + $0x20] sm:$0xf]
    %v2371 = vld [vmem:[%s2361 + $0x24] sm:$0xf]
    %v2372 = vld [vmem:[%s2361 + $0x28] sm:$0xf]
    %v2373 = vld [vmem:[%s2361 + $0x2c] sm:$0xf]
    %v2374 = vld [vmem:[%s6 + $0x7] sm:$0x1]
    %v2375 = vlaneseq
    %v2376 = vshrl.u32 %v2375, 7
    %v2377 = vsub.s32 0, %v2376
    %v2378 = vrot.slane %v2374, %v2377
    %v2391 = vunpack.c.l.b16 %v2362
    %v2392 = vunpack.c.l.b16 %v2363
    %v2393 = vunpack.c.l.b16 %v2364
    %v2394 = vunpack.c.l.b16 %v2365
    %v2395 = vunpack.c.l.b16 %v2366
    %v2396 = vunpack.c.l.b16 %v2367
    %v2397 = vunpack.c.l.b16 %v2368
    %v2398 = vunpack.c.l.b16 %v2369
    %v2399 = vunpack.c.l.b16 %v2370
    %v2400 = vunpack.c.l.b16 %v2371
    %v2401 = vunpack.c.l.b16 %v2372
    %v2402 = vunpack.c.l.b16 %v2373
    %v2403 = vpack.c.b16 %v2392, %v2391
    %v2404 = vpack.c.b16 %v2394, %v2393
    %v2405 = vpack.c.b16 %v2396, %v2395
    %v2406 = vpack.c.b16 %v2398, %v2397
    %v2407 = vpack.c.b16 %v2400, %v2399
    %v2408 = vpack.c.b16 %v2402, %v2401
    %v2416 = vsel %vm377, %v2357, 0
    %v2419 = vsel %vm377, %v2358, 0
    %v2422 = vsel %vm377, %v2359, 0
    %v2425 = vsel %vm377, %v2360, 0
    %2427 = vmatprep.subr.bf16.mxu0 0
    %2428 = vmatpush1.bf16.msra.mxu0 0
    %2429 = vmatprep.subr.bf16.mxu0 0
    %2430 = vmatpush1.bf16.msra.mxu0 0
    %2431 = vmatprep.subr.bf16.mxu0 0
    %2432 = vmatpush1.bf16.msra.mxu0 %v2408
    %2433 = vmatprep.subr.bf16.mxu0 0
    %2434 = vmatpush1.bf16.msra.mxu0 %v2407
    %2435 = vmatprep.subr.bf16.mxu0 0
    %2436 = vmatpush1.bf16.msra.mxu0 %v2406
    %2437 = vmatprep.subr.bf16.mxu0 0
    %2438 = vmatpush1.bf16.msra.mxu0 %v2405
    %2439 = vmatprep.subr.bf16.mxu0 0
    %2440 = vmatpush1.bf16.msra.mxu0 %v2404
    %2441 = vmatprep.subr.bf16.mxu0 0
    %2442 = vmatpush1.bf16.msra.mxu0 %v2403
    %2443 = vmatprep.subr.bf16.mxu0 0
    %2444 = vmatpush2.bf16.msra.mxu0 0
    %2445 = vmatprep.subr.bf16.mxu0 0
    %2446 = vmatpush2.bf16.msra.mxu0 0
    %2447 = vmatprep.subr.bf16.mxu0 0
    %2448 = vmatpush2.bf16.msra.mxu0 0
    %2449 = vmatprep.subr.bf16.mxu0 0
    %2450 = vmatpush2.bf16.msra.mxu0 0
    %2451 = vmatprep.subr.bf16.mxu0 0
    %2452 = vmatpush2.bf16.msra.mxu0 0
    %2453 = vmatprep.subr.bf16.mxu0 0
    %2454 = vmatpush2.bf16.msra.mxu0 0
    %2455 = vmatprep.subr.bf16.mxu0 0
    %2456 = vmatpush2.bf16.msra.mxu0 0
    %2457 = vmatprep.subr.bf16.mxu0 0
    %2458 = vmatpush2.bf16.msra.mxu0 0
    %2459 = vmatprep.mubr.bf16.mxu0 0
    %2460 = vmatmul.mubr.bf16.gmra.mxu0 %v2416
    %v2461 = vpop.f32.mrf.mxu0
    %v2462 = vadd.f32 %v2378, %v2461
    %v2463 = vpop.f32.mrf.mxu0
    %v2464 = vpop.f32.mrf.mxu0
    %v2465 = vadd.f32 %v2378, %v2464
    %v2466 = vpop.f32.mrf.mxu0
    %2467 = vmatprep.mubr.bf16.mxu0 0
    %2468 = vmatmul.mubr.bf16.gmra.mxu0 %v2419
    %v2469 = vpop.f32.mrf.mxu0
    %v2470 = vpop.f32.mrf.mxu0
    %v2471 = vpop.f32.mrf.mxu0
    %v2472 = vpop.f32.mrf.mxu0
    %2473 = vmatprep.mubr.bf16.mxu0 0
    %2474 = vmatmul.mubr.bf16.gmra.mxu0 %v2422
    %v2475 = vpop.f32.mrf.mxu0
    %v2476 = vpop.f32.mrf.mxu0
    %v2477 = vpop.f32.mrf.mxu0
    %v2478 = vpop.f32.mrf.mxu0
    %2479 = vmatprep.mubr.bf16.mxu0 0
    %2480 = vmatmul.mubr.bf16.gmra.mxu0 %v2425
    %v2481 = vpop.f32.mrf.mxu0
    %v2482 = vadd.f32 %v2378, %v2481
    %v2483 = vpop.f32.mrf.mxu0
    %v2484 = vpop.f32.mrf.mxu0
    %v2485 = vadd.f32 %v2378, %v2484
    %v2486 = vpop.f32.mrf.mxu0
    %2487 = vdwg.mxu0
    %v2488 = vxor.u32 %v2462, 2147483648
    %v2489 = vxor.u32 %v2465, 2147483648
    %v2490 = vxor.u32 %v2482, 2147483648
    %v2491 = vxor.u32 %v2485, 2147483648
    %v2492 = vmul.f32 %v2488, 1.442695
    %v2493 = vpow.pop %v2492
    %v2494 = vmul.f32 %v2489, 1.442695
    %v2495 = vpow.pop %v2494
    %v2496 = vmul.f32 %v2490, 1.442695
    %v2497 = vpow.pop %v2496
    %v2498 = vmul.f32 %v2491, 1.442695
    %v2499 = vpow.pop %v2498
    %v2500 = vadd.f32 %v2493, 1.0
    %v2501 = vadd.f32 %v2495, 1.0
    %v2502 = vadd.f32 %v2497, 1.0
    %v2503 = vadd.f32 %v2499, 1.0
    %v2504 = vrcp.pop %v2500
    %v2505 = vmul.f32 1.0, %v2504
    %v2506 = vrcp.pop %v2501
    %v2507 = vmul.f32 1.0, %v2506
    %v2508 = vrcp.pop %v2502
    %v2509 = vmul.f32 1.0, %v2508
    %v2510 = vrcp.pop %v2503
    %v2511 = vmul.f32 1.0, %v2510
    %v2512 = vsub.f32 %v2462, %v2286
    %v2513 = vsub.f32 %v2465, %v2288
    %v2514 = vsub.f32 %v2482, %v2298
    %v2515 = vsub.f32 %v2485, %v2300
    %2520 = vrot.lane.b32.xlu0 %v2512, 96
    %v2521 = vpop.permute.xlu0 %2520
    %2522 = vrot.lane.b32.xlu0 %v2513, 96
    %v2523 = vpop.permute.xlu0 %2522
    %2524 = vrot.lane.b32.xlu0 %v2514, 96
    %v2525 = vpop.permute.xlu0 %2524
    %2526 = vrot.lane.b32.xlu0 %v2515, 96
    %v2527 = vpop.permute.xlu0 %2526
    %v2532 = vmul.f32 %v2505, %v2521
    %v2533 = vmul.f32 %v2507, %v2523
    %v2534 = vmul.f32 %v2509, %v2525
    %v2535 = vmul.f32 %v2511, %v2527
    %v2536 = vadd.f32 %v2253, %v2532
    %v2537 = vadd.f32 %v2254, %v2533
    %v2538 = vadd.f32 %v2259, %v2534
    %v2539 = vadd.f32 %v2260, %v2535
    %2540 = vst.msk [vmem:[#allocation2 + $0x20] sm:$0xff] %vm143, %v2536
    %2541 = vst.msk [vmem:[#allocation2 + $0x28] sm:$0xff] %vm143, %v2537
    %2542 = vst.msk [vmem:[#allocation2 + $0x50] sm:$0xff] %vm143, %v2538
    %2543 = vst.msk [vmem:[#allocation2 + $0x58] sm:$0xff] %vm143, %v2539
    %v2544 = vld [vmem:[#allocation2 + $0x20] sm:$0xff]
    %v2545 = vld [vmem:[#allocation2 + $0x28] sm:$0xff]
    %v2546 = vld [vmem:[#allocation2 + $0x30] sm:$0xff]
    %v2547 = vld [vmem:[#allocation2 + $0x38] sm:$0xff]
    %v2548 = vld [vmem:[#allocation2 + $0x40] sm:$0xff]
    %v2549 = vld [vmem:[#allocation2 + $0x48] sm:$0xff]
    %v2550 = vld [vmem:[#allocation2 + $0x50] sm:$0xff]
    %v2551 = vld [vmem:[#allocation2 + $0x58] sm:$0xff]
    %v2552 = vld [vmem:[#allocation2 + $0x1f] sm:$0xff]
    %v2553 = vld [vmem:[#allocation2 + $0x27] sm:$0xff]
    %v2554 = vld [vmem:[#allocation2 + $0x2f] sm:$0xff]
    %v2555 = vld [vmem:[#allocation2 + $0x37] sm:$0xff]
    %v2556 = vld [vmem:[#allocation2 + $0x3f] sm:$0xff]
    %v2557 = vld [vmem:[#allocation2 + $0x47] sm:$0xff]
    %v2558 = vld [vmem:[#allocation2 + $0x4f] sm:$0xff]
    %v2559 = vld [vmem:[#allocation2 + $0x57] sm:$0xff]
    %v2560 = vld [vmem:[#allocation2 + $0x21] sm:$0xff]
    %v2561 = vld [vmem:[#allocation2 + $0x29] sm:$0xff]
    %v2562 = vld [vmem:[#allocation2 + $0x31] sm:$0xff]
    %v2563 = vld [vmem:[#allocation2 + $0x39] sm:$0xff]
    %v2564 = vld [vmem:[#allocation2 + $0x41] sm:$0xff]
    %v2565 = vld [vmem:[#allocation2 + $0x49] sm:$0xff]
    %v2566 = vld [vmem:[#allocation2 + $0x51] sm:$0xff]
    %v2567 = vld [vmem:[#allocation2 + $0x59] sm:$0xff]
    %2576 = vrot.lane.b32.xlu0 %v2544, 32
    %v2577 = vpop.permute.xlu0 %2576
    %2578 = vrot.lane.b32.xlu0 %v2545, 32
    %v2579 = vpop.permute.xlu0 %2578
    %2580 = vrot.lane.b32.xlu0 %v2546, 32
    %v2581 = vpop.permute.xlu0 %2580
    %2582 = vrot.lane.b32.xlu0 %v2547, 32
    %v2583 = vpop.permute.xlu0 %2582
    %2584 = vrot.lane.b32.xlu0 %v2548, 32
    %v2585 = vpop.permute.xlu0 %2584
    %2586 = vrot.lane.b32.xlu0 %v2549, 32
    %v2587 = vpop.permute.xlu0 %2586
    %2588 = vrot.lane.b32.xlu0 %v2550, 32
    %v2589 = vpop.permute.xlu0 %2588
    %2590 = vrot.lane.b32.xlu0 %v2551, 32
    %v2591 = vpop.permute.xlu0 %2590
    %2608 = vrot.lane.b32.xlu0 %v2560, 64
    %v2609 = vpop.permute.xlu0 %2608
    %2610 = vrot.lane.b32.xlu0 %v2561, 64
    %v2611 = vpop.permute.xlu0 %2610
    %2612 = vrot.lane.b32.xlu0 %v2562, 64
    %v2613 = vpop.permute.xlu0 %2612
    %2614 = vrot.lane.b32.xlu0 %v2563, 64
    %v2615 = vpop.permute.xlu0 %2614
    %2616 = vrot.lane.b32.xlu0 %v2564, 64
    %v2617 = vpop.permute.xlu0 %2616
    %2618 = vrot.lane.b32.xlu0 %v2565, 64
    %v2619 = vpop.permute.xlu0 %2618
    %2620 = vrot.lane.b32.xlu0 %v2566, 64
    %v2621 = vpop.permute.xlu0 %2620
    %2622 = vrot.lane.b32.xlu0 %v2567, 64
    %v2623 = vpop.permute.xlu0 %2622
    %v2632 = vsel %vm143, %v2552, %v2577
    %v2633 = vsel %vm143, %v2553, %v2579
    %v2634 = vsel %vm143, %v2554, %v2581
    %v2635 = vsel %vm143, %v2555, %v2583
    %v2636 = vsel %vm143, %v2556, %v2585
    %v2637 = vsel %vm143, %v2557, %v2587
    %v2638 = vsel %vm143, %v2558, %v2589
    %v2639 = vsel %vm143, %v2559, %v2591
    %v2640 = vsel %vm311, %v2632, %v2609
    %v2641 = vsel %vm311, %v2633, %v2611
    %v2642 = vsel %vm311, %v2634, %v2613
    %v2643 = vsel %vm311, %v2635, %v2615
    %v2644 = vsel %vm311, %v2636, %v2617
    %v2645 = vsel %vm311, %v2637, %v2619
    %v2646 = vsel %vm311, %v2638, %v2621
    %v2647 = vsel %vm311, %v2639, %v2623
    %v2648 = vpack.c.bf16 %v2641, %v2640
    %v2649 = vpack.c.bf16 %v2643, %v2642
    %v2650 = vpack.c.bf16 %v2645, %v2644
    %v2651 = vpack.c.bf16 %v2647, %v2646
    %s2652 = scalar_lea.vmem %s5, 384
    %v2653 = vld [vmem:[%s2652] sm:$0xf]
    %v2654 = vld [vmem:[%s2652 + $0x4] sm:$0xf]
    %v2655 = vld [vmem:[%s2652 + $0x8] sm:$0xf]
    %v2656 = vld [vmem:[%s2652 + $0xc] sm:$0xf]
    %v2657 = vld [vmem:[%s2652 + $0x10] sm:$0xf]
    %v2658 = vld [vmem:[%s2652 + $0x14] sm:$0xf]
    %v2659 = vld [vmem:[%s2652 + $0x18] sm:$0xf]
    %v2660 = vld [vmem:[%s2652 + $0x1c] sm:$0xf]
    %v2661 = vld [vmem:[%s2652 + $0x20] sm:$0xf]
    %v2662 = vld [vmem:[%s2652 + $0x24] sm:$0xf]
    %v2663 = vld [vmem:[%s2652 + $0x28] sm:$0xf]
    %v2664 = vld [vmem:[%s2652 + $0x2c] sm:$0xf]
    %v2665 = vld [vmem:[%s6 + $0x8] sm:$0x1]
    %v2666 = vlaneseq
    %v2667 = vshrl.u32 %v2666, 7
    %v2668 = vsub.s32 0, %v2667
    %v2669 = vrot.slane %v2665, %v2668
    %v2682 = vunpack.c.l.b16 %v2653
    %v2683 = vunpack.c.l.b16 %v2654
    %v2684 = vunpack.c.l.b16 %v2655
    %v2685 = vunpack.c.l.b16 %v2656
    %v2686 = vunpack.c.l.b16 %v2657
    %v2687 = vunpack.c.l.b16 %v2658
    %v2688 = vunpack.c.l.b16 %v2659
    %v2689 = vunpack.c.l.b16 %v2660
    %v2690 = vunpack.c.l.b16 %v2661
    %v2691 = vunpack.c.l.b16 %v2662
    %v2692 = vunpack.c.l.b16 %v2663
    %v2693 = vunpack.c.l.b16 %v2664
    %v2694 = vpack.c.b16 %v2683, %v2682
    %v2695 = vpack.c.b16 %v2685, %v2684
    %v2696 = vpack.c.b16 %v2687, %v2686
    %v2697 = vpack.c.b16 %v2689, %v2688
    %v2698 = vpack.c.b16 %v2691, %v2690
    %v2699 = vpack.c.b16 %v2693, %v2692
    %v2707 = vsel %vm377, %v2648, 0
    %v2710 = vsel %vm377, %v2649, 0
    %v2713 = vsel %vm377, %v2650, 0
    %v2716 = vsel %vm377, %v2651, 0
    %2718 = vmatprep.subr.bf16.mxu0 0
    %2719 = vmatpush1.bf16.msra.mxu0 0
    %2720 = vmatprep.subr.bf16.mxu0 0
    %2721 = vmatpush1.bf16.msra.mxu0 0
    %2722 = vmatprep.subr.bf16.mxu0 0
    %2723 = vmatpush1.bf16.msra.mxu0 %v2699
    %2724 = vmatprep.subr.bf16.mxu0 0
    %2725 = vmatpush1.bf16.msra.mxu0 %v2698
    %2726 = vmatprep.subr.bf16.mxu0 0
    %2727 = vmatpush1.bf16.msra.mxu0 %v2697
    %2728 = vmatprep.subr.bf16.mxu0 0
    %2729 = vmatpush1.bf16.msra.mxu0 %v2696
    %2730 = vmatprep.subr.bf16.mxu0 0
    %2731 = vmatpush1.bf16.msra.mxu0 %v2695
    %2732 = vmatprep.subr.bf16.mxu0 0
    %2733 = vmatpush1.bf16.msra.mxu0 %v2694
    %2734 = vmatprep.subr.bf16.mxu0 0
    %2735 = vmatpush2.bf16.msra.mxu0 0
    %2736 = vmatprep.subr.bf16.mxu0 0
    %2737 = vmatpush2.bf16.msra.mxu0 0
    %2738 = vmatprep.subr.bf16.mxu0 0
    %2739 = vmatpush2.bf16.msra.mxu0 0
    %2740 = vmatprep.subr.bf16.mxu0 0
    %2741 = vmatpush2.bf16.msra.mxu0 0
    %2742 = vmatprep.subr.bf16.mxu0 0
    %2743 = vmatpush2.bf16.msra.mxu0 0
    %2744 = vmatprep.subr.bf16.mxu0 0
    %2745 = vmatpush2.bf16.msra.mxu0 0
    %2746 = vmatprep.subr.bf16.mxu0 0
    %2747 = vmatpush2.bf16.msra.mxu0 0
    %2748 = vmatprep.subr.bf16.mxu0 0
    %2749 = vmatpush2.bf16.msra.mxu0 0
    %2750 = vmatprep.mubr.bf16.mxu0 0
    %2751 = vmatmul.mubr.bf16.gmra.mxu0 %v2707
    %v2752 = vpop.f32.mrf.mxu0
    %v2753 = vadd.f32 %v2669, %v2752
    %v2754 = vpop.f32.mrf.mxu0
    %v2755 = vpop.f32.mrf.mxu0
    %v2756 = vadd.f32 %v2669, %v2755
    %v2757 = vpop.f32.mrf.mxu0
    %2758 = vmatprep.mubr.bf16.mxu0 0
    %2759 = vmatmul.mubr.bf16.gmra.mxu0 %v2710
    %v2760 = vpop.f32.mrf.mxu0
    %v2761 = vpop.f32.mrf.mxu0
    %v2762 = vpop.f32.mrf.mxu0
    %v2763 = vpop.f32.mrf.mxu0
    %2764 = vmatprep.mubr.bf16.mxu0 0
    %2765 = vmatmul.mubr.bf16.gmra.mxu0 %v2713
    %v2766 = vpop.f32.mrf.mxu0
    %v2767 = vpop.f32.mrf.mxu0
    %v2768 = vpop.f32.mrf.mxu0
    %v2769 = vpop.f32.mrf.mxu0
    %2770 = vmatprep.mubr.bf16.mxu0 0
    %2771 = vmatmul.mubr.bf16.gmra.mxu0 %v2716
    %v2772 = vpop.f32.mrf.mxu0
    %v2773 = vadd.f32 %v2669, %v2772
    %v2774 = vpop.f32.mrf.mxu0
    %v2775 = vpop.f32.mrf.mxu0
    %v2776 = vadd.f32 %v2669, %v2775
    %v2777 = vpop.f32.mrf.mxu0
    %2778 = vdwg.mxu0
    %v2779 = vxor.u32 %v2753, 2147483648
    %v2780 = vxor.u32 %v2756, 2147483648
    %v2781 = vxor.u32 %v2773, 2147483648
    %v2782 = vxor.u32 %v2776, 2147483648
    %v2783 = vmul.f32 %v2779, 1.442695
    %v2784 = vpow.pop %v2783
    %v2785 = vmul.f32 %v2780, 1.442695
    %v2786 = vpow.pop %v2785
    %v2787 = vmul.f32 %v2781, 1.442695
    %v2788 = vpow.pop %v2787
    %v2789 = vmul.f32 %v2782, 1.442695
    %v2790 = vpow.pop %v2789
    %v2791 = vadd.f32 %v2784, 1.0
    %v2792 = vadd.f32 %v2786, 1.0
    %v2793 = vadd.f32 %v2788, 1.0
    %v2794 = vadd.f32 %v2790, 1.0
    %v2795 = vrcp.pop %v2791
    %v2796 = vmul.f32 1.0, %v2795
    %v2797 = vrcp.pop %v2792
    %v2798 = vmul.f32 1.0, %v2797
    %v2799 = vrcp.pop %v2793
    %v2800 = vmul.f32 1.0, %v2799
    %v2801 = vrcp.pop %v2794
    %v2802 = vmul.f32 1.0, %v2801
    %v2803 = vsub.f32 %v2753, %v2577
    %v2804 = vsub.f32 %v2756, %v2579
    %v2805 = vsub.f32 %v2773, %v2589
    %v2806 = vsub.f32 %v2776, %v2591
    %2811 = vrot.lane.b32.xlu0 %v2803, 96
    %v2812 = vpop.permute.xlu0 %2811
    %2813 = vrot.lane.b32.xlu0 %v2804, 96
    %v2814 = vpop.permute.xlu0 %2813
    %2815 = vrot.lane.b32.xlu0 %v2805, 96
    %v2816 = vpop.permute.xlu0 %2815
    %2817 = vrot.lane.b32.xlu0 %v2806, 96
    %v2818 = vpop.permute.xlu0 %2817
    %v2823 = vmul.f32 %v2796, %v2812
    %v2824 = vmul.f32 %v2798, %v2814
    %v2825 = vmul.f32 %v2800, %v2816
    %v2826 = vmul.f32 %v2802, %v2818
    %v2827 = vadd.f32 %v2544, %v2823
    %v2828 = vadd.f32 %v2545, %v2824
    %v2829 = vadd.f32 %v2550, %v2825
    %v2830 = vadd.f32 %v2551, %v2826
    %2831 = vst.msk [vmem:[#allocation2 + $0x20] sm:$0xff] %vm143, %v2827
    %2832 = vst.msk [vmem:[#allocation2 + $0x28] sm:$0xff] %vm143, %v2828
    %2833 = vst.msk [vmem:[#allocation2 + $0x50] sm:$0xff] %vm143, %v2829
    %2834 = vst.msk [vmem:[#allocation2 + $0x58] sm:$0xff] %vm143, %v2830
    %v2835 = vld [vmem:[#allocation2 + $0x20] sm:$0xff]
    %v2836 = vld [vmem:[#allocation2 + $0x28] sm:$0xff]
    %v2837 = vld [vmem:[#allocation2 + $0x30] sm:$0xff]
    %v2838 = vld [vmem:[#allocation2 + $0x38] sm:$0xff]
    %v2839 = vld [vmem:[#allocation2 + $0x40] sm:$0xff]
    %v2840 = vld [vmem:[#allocation2 + $0x48] sm:$0xff]
    %v2841 = vld [vmem:[#allocation2 + $0x50] sm:$0xff]
    %v2842 = vld [vmem:[#allocation2 + $0x58] sm:$0xff]
    %v2843 = vld [vmem:[#allocation2 + $0x1f] sm:$0xff]
    %v2844 = vld [vmem:[#allocation2 + $0x27] sm:$0xff]
    %v2845 = vld [vmem:[#allocation2 + $0x2f] sm:$0xff]
    %v2846 = vld [vmem:[#allocation2 + $0x37] sm:$0xff]
    %v2847 = vld [vmem:[#allocation2 + $0x3f] sm:$0xff]
    %v2848 = vld [vmem:[#allocation2 + $0x47] sm:$0xff]
    %v2849 = vld [vmem:[#allocation2 + $0x4f] sm:$0xff]
    %v2850 = vld [vmem:[#allocation2 + $0x57] sm:$0xff]
    %v2851 = vld [vmem:[#allocation2 + $0x21] sm:$0xff]
    %v2852 = vld [vmem:[#allocation2 + $0x29] sm:$0xff]
    %v2853 = vld [vmem:[#allocation2 + $0x31] sm:$0xff]
    %v2854 = vld [vmem:[#allocation2 + $0x39] sm:$0xff]
    %v2855 = vld [vmem:[#allocation2 + $0x41] sm:$0xff]
    %v2856 = vld [vmem:[#allocation2 + $0x49] sm:$0xff]
    %v2857 = vld [vmem:[#allocation2 + $0x51] sm:$0xff]
    %v2858 = vld [vmem:[#allocation2 + $0x59] sm:$0xff]
    %2867 = vrot.lane.b32.xlu0 %v2835, 32
    %v2868 = vpop.permute.xlu0 %2867
    %2869 = vrot.lane.b32.xlu0 %v2836, 32
    %v2870 = vpop.permute.xlu0 %2869
    %2871 = vrot.lane.b32.xlu0 %v2837, 32
    %v2872 = vpop.permute.xlu0 %2871
    %2873 = vrot.lane.b32.xlu0 %v2838, 32
    %v2874 = vpop.permute.xlu0 %2873
    %2875 = vrot.lane.b32.xlu0 %v2839, 32
    %v2876 = vpop.permute.xlu0 %2875
    %2877 = vrot.lane.b32.xlu0 %v2840, 32
    %v2878 = vpop.permute.xlu0 %2877
    %2879 = vrot.lane.b32.xlu0 %v2841, 32
    %v2880 = vpop.permute.xlu0 %2879
    %2881 = vrot.lane.b32.xlu0 %v2842, 32
    %v2882 = vpop.permute.xlu0 %2881
    %2899 = vrot.lane.b32.xlu0 %v2851, 64
    %v2900 = vpop.permute.xlu0 %2899
    %2901 = vrot.lane.b32.xlu0 %v2852, 64
    %v2902 = vpop.permute.xlu0 %2901
    %2903 = vrot.lane.b32.xlu0 %v2853, 64
    %v2904 = vpop.permute.xlu0 %2903
    %2905 = vrot.lane.b32.xlu0 %v2854, 64
    %v2906 = vpop.permute.xlu0 %2905
    %2907 = vrot.lane.b32.xlu0 %v2855, 64
    %v2908 = vpop.permute.xlu0 %2907
    %2909 = vrot.lane.b32.xlu0 %v2856, 64
    %v2910 = vpop.permute.xlu0 %2909
    %2911 = vrot.lane.b32.xlu0 %v2857, 64
    %v2912 = vpop.permute.xlu0 %2911
    %2913 = vrot.lane.b32.xlu0 %v2858, 64
    %v2914 = vpop.permute.xlu0 %2913
    %v2923 = vsel %vm143, %v2843, %v2868
    %v2924 = vsel %vm143, %v2844, %v2870
    %v2925 = vsel %vm143, %v2845, %v2872
    %v2926 = vsel %vm143, %v2846, %v2874
    %v2927 = vsel %vm143, %v2847, %v2876
    %v2928 = vsel %vm143, %v2848, %v2878
    %v2929 = vsel %vm143, %v2849, %v2880
    %v2930 = vsel %vm143, %v2850, %v2882
    %v2931 = vsel %vm311, %v2923, %v2900
    %v2932 = vsel %vm311, %v2924, %v2902
    %v2933 = vsel %vm311, %v2925, %v2904
    %v2934 = vsel %vm311, %v2926, %v2906
    %v2935 = vsel %vm311, %v2927, %v2908
    %v2936 = vsel %vm311, %v2928, %v2910
    %v2937 = vsel %vm311, %v2929, %v2912
    %v2938 = vsel %vm311, %v2930, %v2914
    %v2939 = vpack.c.bf16 %v2932, %v2931
    %v2940 = vpack.c.bf16 %v2934, %v2933
    %v2941 = vpack.c.bf16 %v2936, %v2935
    %v2942 = vpack.c.bf16 %v2938, %v2937
    %s2943 = scalar_lea.vmem %s5, 432
    %v2944 = vld [vmem:[%s2943] sm:$0xf]
    %v2945 = vld [vmem:[%s2943 + $0x4] sm:$0xf]
    %v2946 = vld [vmem:[%s2943 + $0x8] sm:$0xf]
    %v2947 = vld [vmem:[%s2943 + $0xc] sm:$0xf]
    %v2948 = vld [vmem:[%s2943 + $0x10] sm:$0xf]
    %v2949 = vld [vmem:[%s2943 + $0x14] sm:$0xf]
    %v2950 = vld [vmem:[%s2943 + $0x18] sm:$0xf]
    %v2951 = vld [vmem:[%s2943 + $0x1c] sm:$0xf]
    %v2952 = vld [vmem:[%s2943 + $0x20] sm:$0xf]
    %v2953 = vld [vmem:[%s2943 + $0x24] sm:$0xf]
    %v2954 = vld [vmem:[%s2943 + $0x28] sm:$0xf]
    %v2955 = vld [vmem:[%s2943 + $0x2c] sm:$0xf]
    %v2956 = vld [vmem:[%s6 + $0x9] sm:$0x1]
    %v2957 = vlaneseq
    %v2958 = vshrl.u32 %v2957, 7
    %v2959 = vsub.s32 0, %v2958
    %v2960 = vrot.slane %v2956, %v2959
    %v2973 = vunpack.c.l.b16 %v2944
    %v2974 = vunpack.c.l.b16 %v2945
    %v2975 = vunpack.c.l.b16 %v2946
    %v2976 = vunpack.c.l.b16 %v2947
    %v2977 = vunpack.c.l.b16 %v2948
    %v2978 = vunpack.c.l.b16 %v2949
    %v2979 = vunpack.c.l.b16 %v2950
    %v2980 = vunpack.c.l.b16 %v2951
    %v2981 = vunpack.c.l.b16 %v2952
    %v2982 = vunpack.c.l.b16 %v2953
    %v2983 = vunpack.c.l.b16 %v2954
    %v2984 = vunpack.c.l.b16 %v2955
    %v2985 = vpack.c.b16 %v2974, %v2973
    %v2986 = vpack.c.b16 %v2976, %v2975
    %v2987 = vpack.c.b16 %v2978, %v2977
    %v2988 = vpack.c.b16 %v2980, %v2979
    %v2989 = vpack.c.b16 %v2982, %v2981
    %v2990 = vpack.c.b16 %v2984, %v2983
    %v2998 = vsel %vm377, %v2939, 0
    %v3001 = vsel %vm377, %v2940, 0
    %v3004 = vsel %vm377, %v2941, 0
    %v3007 = vsel %vm377, %v2942, 0
    %3009 = vmatprep.subr.bf16.mxu0 0
    %3010 = vmatpush1.bf16.msra.mxu0 0
    %3011 = vmatprep.subr.bf16.mxu0 0
    %3012 = vmatpush1.bf16.msra.mxu0 0
    %3013 = vmatprep.subr.bf16.mxu0 0
    %3014 = vmatpush1.bf16.msra.mxu0 %v2990
    %3015 = vmatprep.subr.bf16.mxu0 0
    %3016 = vmatpush1.bf16.msra.mxu0 %v2989
    %3017 = vmatprep.subr.bf16.mxu0 0
    %3018 = vmatpush1.bf16.msra.mxu0 %v2988
    %3019 = vmatprep.subr.bf16.mxu0 0
    %3020 = vmatpush1.bf16.msra.mxu0 %v2987
    %3021 = vmatprep.subr.bf16.mxu0 0
    %3022 = vmatpush1.bf16.msra.mxu0 %v2986
    %3023 = vmatprep.subr.bf16.mxu0 0
    %3024 = vmatpush1.bf16.msra.mxu0 %v2985
    %3025 = vmatprep.subr.bf16.mxu0 0
    %3026 = vmatpush2.bf16.msra.mxu0 0
    %3027 = vmatprep.subr.bf16.mxu0 0
    %3028 = vmatpush2.bf16.msra.mxu0 0
    %3029 = vmatprep.subr.bf16.mxu0 0
    %3030 = vmatpush2.bf16.msra.mxu0 0
    %3031 = vmatprep.subr.bf16.mxu0 0
    %3032 = vmatpush2.bf16.msra.mxu0 0
    %3033 = vmatprep.subr.bf16.mxu0 0
    %3034 = vmatpush2.bf16.msra.mxu0 0
    %3035 = vmatprep.subr.bf16.mxu0 0
    %3036 = vmatpush2.bf16.msra.mxu0 0
    %3037 = vmatprep.subr.bf16.mxu0 0
    %3038 = vmatpush2.bf16.msra.mxu0 0
    %3039 = vmatprep.subr.bf16.mxu0 0
    %3040 = vmatpush2.bf16.msra.mxu0 0
    %3041 = vmatprep.mubr.bf16.mxu0 0
    %3042 = vmatmul.mubr.bf16.gmra.mxu0 %v2998
    %v3043 = vpop.f32.mrf.mxu0
    %v3044 = vadd.f32 %v2960, %v3043
    %v3045 = vpop.f32.mrf.mxu0
    %v3046 = vpop.f32.mrf.mxu0
    %v3047 = vadd.f32 %v2960, %v3046
    %v3048 = vpop.f32.mrf.mxu0
    %3049 = vmatprep.mubr.bf16.mxu0 0
    %3050 = vmatmul.mubr.bf16.gmra.mxu0 %v3001
    %v3051 = vpop.f32.mrf.mxu0
    %v3052 = vpop.f32.mrf.mxu0
    %v3053 = vpop.f32.mrf.mxu0
    %v3054 = vpop.f32.mrf.mxu0
    %3055 = vmatprep.mubr.bf16.mxu0 0
    %3056 = vmatmul.mubr.bf16.gmra.mxu0 %v3004
    %v3057 = vpop.f32.mrf.mxu0
    %v3058 = vpop.f32.mrf.mxu0
    %v3059 = vpop.f32.mrf.mxu0
    %v3060 = vpop.f32.mrf.mxu0
    %3061 = vmatprep.mubr.bf16.mxu0 0
    %3062 = vmatmul.mubr.bf16.gmra.mxu0 %v3007
    %v3063 = vpop.f32.mrf.mxu0
    %v3064 = vadd.f32 %v2960, %v3063
    %v3065 = vpop.f32.mrf.mxu0
    %v3066 = vpop.f32.mrf.mxu0
    %v3067 = vadd.f32 %v2960, %v3066
    %v3068 = vpop.f32.mrf.mxu0
    %3069 = vdwg.mxu0
    %v3070 = vxor.u32 %v3044, 2147483648
    %v3071 = vxor.u32 %v3047, 2147483648
    %v3072 = vxor.u32 %v3064, 2147483648
    %v3073 = vxor.u32 %v3067, 2147483648
    %v3074 = vmul.f32 %v3070, 1.442695
    %v3075 = vpow.pop %v3074
    %v3076 = vmul.f32 %v3071, 1.442695
    %v3077 = vpow.pop %v3076
    %v3078 = vmul.f32 %v3072, 1.442695
    %v3079 = vpow.pop %v3078
    %v3080 = vmul.f32 %v3073, 1.442695
    %v3081 = vpow.pop %v3080
    %v3082 = vadd.f32 %v3075, 1.0
    %v3083 = vadd.f32 %v3077, 1.0
    %v3084 = vadd.f32 %v3079, 1.0
    %v3085 = vadd.f32 %v3081, 1.0
    %v3086 = vrcp.pop %v3082
    %v3087 = vmul.f32 1.0, %v3086
    %v3088 = vrcp.pop %v3083
    %v3089 = vmul.f32 1.0, %v3088
    %v3090 = vrcp.pop %v3084
    %v3091 = vmul.f32 1.0, %v3090
    %v3092 = vrcp.pop %v3085
    %v3093 = vmul.f32 1.0, %v3092
    %v3094 = vsub.f32 %v3044, %v2868
    %v3095 = vsub.f32 %v3047, %v2870
    %v3096 = vsub.f32 %v3064, %v2880
    %v3097 = vsub.f32 %v3067, %v2882
    %3102 = vrot.lane.b32.xlu0 %v3094, 96
    %v3103 = vpop.permute.xlu0 %3102
    %3104 = vrot.lane.b32.xlu0 %v3095, 96
    %v3105 = vpop.permute.xlu0 %3104
    %3106 = vrot.lane.b32.xlu0 %v3096, 96
    %v3107 = vpop.permute.xlu0 %3106
    %3108 = vrot.lane.b32.xlu0 %v3097, 96
    %v3109 = vpop.permute.xlu0 %3108
    %v3114 = vmul.f32 %v3087, %v3103
    %v3115 = vmul.f32 %v3089, %v3105
    %v3116 = vmul.f32 %v3091, %v3107
    %v3117 = vmul.f32 %v3093, %v3109
    %v3118 = vadd.f32 %v2835, %v3114
    %v3119 = vadd.f32 %v2836, %v3115
    %v3120 = vadd.f32 %v2841, %v3116
    %v3121 = vadd.f32 %v2842, %v3117
    %3122 = vst.msk [vmem:[#allocation2 + $0x20] sm:$0xff] %vm143, %v3118
    %3123 = vst.msk [vmem:[#allocation2 + $0x28] sm:$0xff] %vm143, %v3119
    %3124 = vst.msk [vmem:[#allocation2 + $0x50] sm:$0xff] %vm143, %v3120
    %3125 = vst.msk [vmem:[#allocation2 + $0x58] sm:$0xff] %vm143, %v3121
    %v3126 = vld [vmem:[#allocation2 + $0x20] sm:$0xff]
    %v3127 = vld [vmem:[#allocation2 + $0x28] sm:$0xff]
    %v3128 = vld [vmem:[#allocation2 + $0x30] sm:$0xff]
    %v3129 = vld [vmem:[#allocation2 + $0x38] sm:$0xff]
    %v3130 = vld [vmem:[#allocation2 + $0x40] sm:$0xff]
    %v3131 = vld [vmem:[#allocation2 + $0x48] sm:$0xff]
    %v3132 = vld [vmem:[#allocation2 + $0x50] sm:$0xff]
    %v3133 = vld [vmem:[#allocation2 + $0x58] sm:$0xff]
    %v3134 = vld [vmem:[#allocation2 + $0x1f] sm:$0xff]
    %v3135 = vld [vmem:[#allocation2 + $0x27] sm:$0xff]
    %v3136 = vld [vmem:[#allocation2 + $0x2f] sm:$0xff]
    %v3137 = vld [vmem:[#allocation2 + $0x37] sm:$0xff]
    %v3138 = vld [vmem:[#allocation2 + $0x3f] sm:$0xff]
    %v3139 = vld [vmem:[#allocation2 + $0x47] sm:$0xff]
    %v3140 = vld [vmem:[#allocation2 + $0x4f] sm:$0xff]
    %v3141 = vld [vmem:[#allocation2 + $0x57] sm:$0xff]
    %v3142 = vld [vmem:[#allocation2 + $0x21] sm:$0xff]
    %v3143 = vld [vmem:[#allocation2 + $0x29] sm:$0xff]
    %v3144 = vld [vmem:[#allocation2 + $0x31] sm:$0xff]
    %v3145 = vld [vmem:[#allocation2 + $0x39] sm:$0xff]
    %v3146 = vld [vmem:[#allocation2 + $0x41] sm:$0xff]
    %v3147 = vld [vmem:[#allocation2 + $0x49] sm:$0xff]
    %v3148 = vld [vmem:[#allocation2 + $0x51] sm:$0xff]
    %v3149 = vld [vmem:[#allocation2 + $0x59] sm:$0xff]
    %3158 = vrot.lane.b32.xlu0 %v3126, 32
    %v3159 = vpop.permute.xlu0 %3158
    %3160 = vrot.lane.b32.xlu0 %v3127, 32
    %v3161 = vpop.permute.xlu0 %3160
    %3162 = vrot.lane.b32.xlu0 %v3128, 32
    %v3163 = vpop.permute.xlu0 %3162
    %3164 = vrot.lane.b32.xlu0 %v3129, 32
    %v3165 = vpop.permute.xlu0 %3164
    %3166 = vrot.lane.b32.xlu0 %v3130, 32
    %v3167 = vpop.permute.xlu0 %3166
    %3168 = vrot.lane.b32.xlu0 %v3131, 32
    %v3169 = vpop.permute.xlu0 %3168
    %3170 = vrot.lane.b32.xlu0 %v3132, 32
    %v3171 = vpop.permute.xlu0 %3170
    %3172 = vrot.lane.b32.xlu0 %v3133, 32
    %v3173 = vpop.permute.xlu0 %3172
    %3190 = vrot.lane.b32.xlu0 %v3142, 64
    %v3191 = vpop.permute.xlu0 %3190
    %3192 = vrot.lane.b32.xlu0 %v3143, 64
    %v3193 = vpop.permute.xlu0 %3192
    %3194 = vrot.lane.b32.xlu0 %v3144, 64
    %v3195 = vpop.permute.xlu0 %3194
    %3196 = vrot.lane.b32.xlu0 %v3145, 64
    %v3197 = vpop.permute.xlu0 %3196
    %3198 = vrot.lane.b32.xlu0 %v3146, 64
    %v3199 = vpop.permute.xlu0 %3198
    %3200 = vrot.lane.b32.xlu0 %v3147, 64
    %v3201 = vpop.permute.xlu0 %3200
    %3202 = vrot.lane.b32.xlu0 %v3148, 64
    %v3203 = vpop.permute.xlu0 %3202
    %3204 = vrot.lane.b32.xlu0 %v3149, 64
    %v3205 = vpop.permute.xlu0 %3204
    %v3214 = vsel %vm143, %v3134, %v3159
    %v3215 = vsel %vm143, %v3135, %v3161
    %v3216 = vsel %vm143, %v3136, %v3163
    %v3217 = vsel %vm143, %v3137, %v3165
    %v3218 = vsel %vm143, %v3138, %v3167
    %v3219 = vsel %vm143, %v3139, %v3169
    %v3220 = vsel %vm143, %v3140, %v3171
    %v3221 = vsel %vm143, %v3141, %v3173
    %v3222 = vsel %vm311, %v3214, %v3191
    %v3223 = vsel %vm311, %v3215, %v3193
    %v3224 = vsel %vm311, %v3216, %v3195
    %v3225 = vsel %vm311, %v3217, %v3197
    %v3226 = vsel %vm311, %v3218, %v3199
    %v3227 = vsel %vm311, %v3219, %v3201
    %v3228 = vsel %vm311, %v3220, %v3203
    %v3229 = vsel %vm311, %v3221, %v3205
    %v3230 = vpack.c.bf16 %v3223, %v3222
    %v3231 = vpack.c.bf16 %v3225, %v3224
    %v3232 = vpack.c.bf16 %v3227, %v3226
    %v3233 = vpack.c.bf16 %v3229, %v3228
    %s3234 = scalar_lea.vmem %s5, 480
    %v3235 = vld [vmem:[%s3234] sm:$0xf]
    %v3236 = vld [vmem:[%s3234 + $0x4] sm:$0xf]
    %v3237 = vld [vmem:[%s3234 + $0x8] sm:$0xf]
    %v3238 = vld [vmem:[%s3234 + $0xc] sm:$0xf]
    %v3239 = vld [vmem:[%s3234 + $0x10] sm:$0xf]
    %v3240 = vld [vmem:[%s3234 + $0x14] sm:$0xf]
    %v3241 = vld [vmem:[%s3234 + $0x18] sm:$0xf]
    %v3242 = vld [vmem:[%s3234 + $0x1c] sm:$0xf]
    %v3243 = vld [vmem:[%s3234 + $0x20] sm:$0xf]
    %v3244 = vld [vmem:[%s3234 + $0x24] sm:$0xf]
    %v3245 = vld [vmem:[%s3234 + $0x28] sm:$0xf]
    %v3246 = vld [vmem:[%s3234 + $0x2c] sm:$0xf]
    %v3247 = vld [vmem:[%s6 + $0xa] sm:$0x1]
    %v3248 = vlaneseq
    %v3249 = vshrl.u32 %v3248, 7
    %v3250 = vsub.s32 0, %v3249
    %v3251 = vrot.slane %v3247, %v3250
    %v3264 = vunpack.c.l.b16 %v3235
    %v3265 = vunpack.c.l.b16 %v3236
    %v3266 = vunpack.c.l.b16 %v3237
    %v3267 = vunpack.c.l.b16 %v3238
    %v3268 = vunpack.c.l.b16 %v3239
    %v3269 = vunpack.c.l.b16 %v3240
    %v3270 = vunpack.c.l.b16 %v3241
    %v3271 = vunpack.c.l.b16 %v3242
    %v3272 = vunpack.c.l.b16 %v3243
    %v3273 = vunpack.c.l.b16 %v3244
    %v3274 = vunpack.c.l.b16 %v3245
    %v3275 = vunpack.c.l.b16 %v3246
    %v3276 = vpack.c.b16 %v3265, %v3264
    %v3277 = vpack.c.b16 %v3267, %v3266
    %v3278 = vpack.c.b16 %v3269, %v3268
    %v3279 = vpack.c.b16 %v3271, %v3270
    %v3280 = vpack.c.b16 %v3273, %v3272
    %v3281 = vpack.c.b16 %v3275, %v3274
    %v3289 = vsel %vm377, %v3230, 0
    %v3292 = vsel %vm377, %v3231, 0
    %v3295 = vsel %vm377, %v3232, 0
    %v3298 = vsel %vm377, %v3233, 0
    %3300 = vmatprep.subr.bf16.mxu0 0
    %3301 = vmatpush1.bf16.msra.mxu0 0
    %3302 = vmatprep.subr.bf16.mxu0 0
    %3303 = vmatpush1.bf16.msra.mxu0 0
    %3304 = vmatprep.subr.bf16.mxu0 0
    %3305 = vmatpush1.bf16.msra.mxu0 %v3281
    %3306 = vmatprep.subr.bf16.mxu0 0
    %3307 = vmatpush1.bf16.msra.mxu0 %v3280
    %3308 = vmatprep.subr.bf16.mxu0 0
    %3309 = vmatpush1.bf16.msra.mxu0 %v3279
    %3310 = vmatprep.subr.bf16.mxu0 0
    %3311 = vmatpush1.bf16.msra.mxu0 %v3278
    %3312 = vmatprep.subr.bf16.mxu0 0
    %3313 = vmatpush1.bf16.msra.mxu0 %v3277
    %3314 = vmatprep.subr.bf16.mxu0 0
    %3315 = vmatpush1.bf16.msra.mxu0 %v3276
    %3316 = vmatprep.subr.bf16.mxu0 0
    %3317 = vmatpush2.bf16.msra.mxu0 0
    %3318 = vmatprep.subr.bf16.mxu0 0
    %3319 = vmatpush2.bf16.msra.mxu0 0
    %3320 = vmatprep.subr.bf16.mxu0 0
    %3321 = vmatpush2.bf16.msra.mxu0 0
    %3322 = vmatprep.subr.bf16.mxu0 0
    %3323 = vmatpush2.bf16.msra.mxu0 0
    %3324 = vmatprep.subr.bf16.mxu0 0
    %3325 = vmatpush2.bf16.msra.mxu0 0
    %3326 = vmatprep.subr.bf16.mxu0 0
    %3327 = vmatpush2.bf16.msra.mxu0 0
    %3328 = vmatprep.subr.bf16.mxu0 0
    %3329 = vmatpush2.bf16.msra.mxu0 0
    %3330 = vmatprep.subr.bf16.mxu0 0
    %3331 = vmatpush2.bf16.msra.mxu0 0
    %3332 = vmatprep.mubr.bf16.mxu0 0
    %3333 = vmatmul.mubr.bf16.gmra.mxu0 %v3289
    %v3334 = vpop.f32.mrf.mxu0
    %v3335 = vadd.f32 %v3251, %v3334
    %v3336 = vpop.f32.mrf.mxu0
    %v3337 = vpop.f32.mrf.mxu0
    %v3338 = vadd.f32 %v3251, %v3337
    %v3339 = vpop.f32.mrf.mxu0
    %3340 = vmatprep.mubr.bf16.mxu0 0
    %3341 = vmatmul.mubr.bf16.gmra.mxu0 %v3292
    %v3342 = vpop.f32.mrf.mxu0
    %v3343 = vpop.f32.mrf.mxu0
    %v3344 = vpop.f32.mrf.mxu0
    %v3345 = vpop.f32.mrf.mxu0
    %3346 = vmatprep.mubr.bf16.mxu0 0
    %3347 = vmatmul.mubr.bf16.gmra.mxu0 %v3295
    %v3348 = vpop.f32.mrf.mxu0
    %v3349 = vpop.f32.mrf.mxu0
    %v3350 = vpop.f32.mrf.mxu0
    %v3351 = vpop.f32.mrf.mxu0
    %3352 = vmatprep.mubr.bf16.mxu0 0
    %3353 = vmatmul.mubr.bf16.gmra.mxu0 %v3298
    %v3354 = vpop.f32.mrf.mxu0
    %v3355 = vadd.f32 %v3251, %v3354
    %v3356 = vpop.f32.mrf.mxu0
    %v3357 = vpop.f32.mrf.mxu0
    %v3358 = vadd.f32 %v3251, %v3357
    %v3359 = vpop.f32.mrf.mxu0
    %3360 = vdwg.mxu0
    %v3361 = vxor.u32 %v3335, 2147483648
    %v3362 = vxor.u32 %v3338, 2147483648
    %v3363 = vxor.u32 %v3355, 2147483648
    %v3364 = vxor.u32 %v3358, 2147483648
    %v3365 = vmul.f32 %v3361, 1.442695
    %v3366 = vpow.pop %v3365
    %v3367 = vmul.f32 %v3362, 1.442695
    %v3368 = vpow.pop %v3367
    %v3369 = vmul.f32 %v3363, 1.442695
    %v3370 = vpow.pop %v3369
    %v3371 = vmul.f32 %v3364, 1.442695
    %v3372 = vpow.pop %v3371
    %v3373 = vadd.f32 %v3366, 1.0
    %v3374 = vadd.f32 %v3368, 1.0
    %v3375 = vadd.f32 %v3370, 1.0
    %v3376 = vadd.f32 %v3372, 1.0
    %v3377 = vrcp.pop %v3373
    %v3378 = vmul.f32 1.0, %v3377
    %v3379 = vrcp.pop %v3374
    %v3380 = vmul.f32 1.0, %v3379
    %v3381 = vrcp.pop %v3375
    %v3382 = vmul.f32 1.0, %v3381
    %v3383 = vrcp.pop %v3376
    %v3384 = vmul.f32 1.0, %v3383
    %v3385 = vsub.f32 %v3335, %v3159
    %v3386 = vsub.f32 %v3338, %v3161
    %v3387 = vsub.f32 %v3355, %v3171
    %v3388 = vsub.f32 %v3358, %v3173
    %3393 = vrot.lane.b32.xlu0 %v3385, 96
    %v3394 = vpop.permute.xlu0 %3393
    %3395 = vrot.lane.b32.xlu0 %v3386, 96
    %v3396 = vpop.permute.xlu0 %3395
    %3397 = vrot.lane.b32.xlu0 %v3387, 96
    %v3398 = vpop.permute.xlu0 %3397
    %3399 = vrot.lane.b32.xlu0 %v3388, 96
    %v3400 = vpop.permute.xlu0 %3399
    %v3405 = vmul.f32 %v3378, %v3394
    %v3406 = vmul.f32 %v3380, %v3396
    %v3407 = vmul.f32 %v3382, %v3398
    %v3408 = vmul.f32 %v3384, %v3400
    %v3409 = vadd.f32 %v3126, %v3405
    %v3410 = vadd.f32 %v3127, %v3406
    %v3411 = vadd.f32 %v3132, %v3407
    %v3412 = vadd.f32 %v3133, %v3408
    %3413 = vst.msk [vmem:[#allocation2 + $0x20] sm:$0xff] %vm143, %v3409
    %3414 = vst.msk [vmem:[#allocation2 + $0x28] sm:$0xff] %vm143, %v3410
    %3415 = vst.msk [vmem:[#allocation2 + $0x50] sm:$0xff] %vm143, %v3411
    %3416 = vst.msk [vmem:[#allocation2 + $0x58] sm:$0xff] %vm143, %v3412
    %v3417 = vld [vmem:[#allocation2 + $0x20] sm:$0xff]
    %v3418 = vld [vmem:[#allocation2 + $0x28] sm:$0xff]
    %v3419 = vld [vmem:[#allocation2 + $0x30] sm:$0xff]
    %v3420 = vld [vmem:[#allocation2 + $0x38] sm:$0xff]
    %v3421 = vld [vmem:[#allocation2 + $0x40] sm:$0xff]
    %v3422 = vld [vmem:[#allocation2 + $0x48] sm:$0xff]
    %v3423 = vld [vmem:[#allocation2 + $0x50] sm:$0xff]
    %v3424 = vld [vmem:[#allocation2 + $0x58] sm:$0xff]
    %v3425 = vld [vmem:[#allocation2 + $0x1f] sm:$0xff]
    %v3426 = vld [vmem:[#allocation2 + $0x27] sm:$0xff]
    %v3427 = vld [vmem:[#allocation2 + $0x2f] sm:$0xff]
    %v3428 = vld [vmem:[#allocation2 + $0x37] sm:$0xff]
    %v3429 = vld [vmem:[#allocation2 + $0x3f] sm:$0xff]
    %v3430 = vld [vmem:[#allocation2 + $0x47] sm:$0xff]
    %v3431 = vld [vmem:[#allocation2 + $0x4f] sm:$0xff]
    %v3432 = vld [vmem:[#allocation2 + $0x57] sm:$0xff]
    %v3433 = vld [vmem:[#allocation2 + $0x21] sm:$0xff]
    %v3434 = vld [vmem:[#allocation2 + $0x29] sm:$0xff]
    %v3435 = vld [vmem:[#allocation2 + $0x31] sm:$0xff]
    %v3436 = vld [vmem:[#allocation2 + $0x39] sm:$0xff]
    %v3437 = vld [vmem:[#allocation2 + $0x41] sm:$0xff]
    %v3438 = vld [vmem:[#allocation2 + $0x49] sm:$0xff]
    %v3439 = vld [vmem:[#allocation2 + $0x51] sm:$0xff]
    %v3440 = vld [vmem:[#allocation2 + $0x59] sm:$0xff]
    %3449 = vrot.lane.b32.xlu0 %v3417, 32
    %v3450 = vpop.permute.xlu0 %3449
    %3451 = vrot.lane.b32.xlu0 %v3418, 32
    %v3452 = vpop.permute.xlu0 %3451
    %3453 = vrot.lane.b32.xlu0 %v3419, 32
    %v3454 = vpop.permute.xlu0 %3453
    %3455 = vrot.lane.b32.xlu0 %v3420, 32
    %v3456 = vpop.permute.xlu0 %3455
    %3457 = vrot.lane.b32.xlu0 %v3421, 32
    %v3458 = vpop.permute.xlu0 %3457
    %3459 = vrot.lane.b32.xlu0 %v3422, 32
    %v3460 = vpop.permute.xlu0 %3459
    %3461 = vrot.lane.b32.xlu0 %v3423, 32
    %v3462 = vpop.permute.xlu0 %3461
    %3463 = vrot.lane.b32.xlu0 %v3424, 32
    %v3464 = vpop.permute.xlu0 %3463
    %3481 = vrot.lane.b32.xlu0 %v3433, 64
    %v3482 = vpop.permute.xlu0 %3481
    %3483 = vrot.lane.b32.xlu0 %v3434, 64
    %v3484 = vpop.permute.xlu0 %3483
    %3485 = vrot.lane.b32.xlu0 %v3435, 64
    %v3486 = vpop.permute.xlu0 %3485
    %3487 = vrot.lane.b32.xlu0 %v3436, 64
    %v3488 = vpop.permute.xlu0 %3487
    %3489 = vrot.lane.b32.xlu0 %v3437, 64
    %v3490 = vpop.permute.xlu0 %3489
    %3491 = vrot.lane.b32.xlu0 %v3438, 64
    %v3492 = vpop.permute.xlu0 %3491
    %3493 = vrot.lane.b32.xlu0 %v3439, 64
    %v3494 = vpop.permute.xlu0 %3493
    %3495 = vrot.lane.b32.xlu0 %v3440, 64
    %v3496 = vpop.permute.xlu0 %3495
    %v3505 = vsel %vm143, %v3425, %v3450
    %v3506 = vsel %vm143, %v3426, %v3452
    %v3507 = vsel %vm143, %v3427, %v3454
    %v3508 = vsel %vm143, %v3428, %v3456
    %v3509 = vsel %vm143, %v3429, %v3458
    %v3510 = vsel %vm143, %v3430, %v3460
    %v3511 = vsel %vm143, %v3431, %v3462
    %v3512 = vsel %vm143, %v3432, %v3464
    %v3513 = vsel %vm311, %v3505, %v3482
    %v3514 = vsel %vm311, %v3506, %v3484
    %v3515 = vsel %vm311, %v3507, %v3486
    %v3516 = vsel %vm311, %v3508, %v3488
    %v3517 = vsel %vm311, %v3509, %v3490
    %v3518 = vsel %vm311, %v3510, %v3492
    %v3519 = vsel %vm311, %v3511, %v3494
    %v3520 = vsel %vm311, %v3512, %v3496
    %v3521 = vpack.c.bf16 %v3514, %v3513
    %v3522 = vpack.c.bf16 %v3516, %v3515
    %v3523 = vpack.c.bf16 %v3518, %v3517
    %v3524 = vpack.c.bf16 %v3520, %v3519
    %s3525 = scalar_lea.vmem %s5, 528
    %v3526 = vld [vmem:[%s3525] sm:$0xf]
    %v3527 = vld [vmem:[%s3525 + $0x4] sm:$0xf]
    %v3528 = vld [vmem:[%s3525 + $0x8] sm:$0xf]
    %v3529 = vld [vmem:[%s3525 + $0xc] sm:$0xf]
    %v3530 = vld [vmem:[%s3525 + $0x10] sm:$0xf]
    %v3531 = vld [vmem:[%s3525 + $0x14] sm:$0xf]
    %v3532 = vld [vmem:[%s3525 + $0x18] sm:$0xf]
    %v3533 = vld [vmem:[%s3525 + $0x1c] sm:$0xf]
    %v3534 = vld [vmem:[%s3525 + $0x20] sm:$0xf]
    %v3535 = vld [vmem:[%s3525 + $0x24] sm:$0xf]
    %v3536 = vld [vmem:[%s3525 + $0x28] sm:$0xf]
    %v3537 = vld [vmem:[%s3525 + $0x2c] sm:$0xf]
    %v3538 = vld [vmem:[%s6 + $0xb] sm:$0x1]
    %v3539 = vlaneseq
    %v3540 = vshrl.u32 %v3539, 7
    %v3541 = vsub.s32 0, %v3540
    %v3542 = vrot.slane %v3538, %v3541
    %v3555 = vunpack.c.l.b16 %v3526
    %v3556 = vunpack.c.l.b16 %v3527
    %v3557 = vunpack.c.l.b16 %v3528
    %v3558 = vunpack.c.l.b16 %v3529
    %v3559 = vunpack.c.l.b16 %v3530
    %v3560 = vunpack.c.l.b16 %v3531
    %v3561 = vunpack.c.l.b16 %v3532
    %v3562 = vunpack.c.l.b16 %v3533
    %v3563 = vunpack.c.l.b16 %v3534
    %v3564 = vunpack.c.l.b16 %v3535
    %v3565 = vunpack.c.l.b16 %v3536
    %v3566 = vunpack.c.l.b16 %v3537
    %v3567 = vpack.c.b16 %v3556, %v3555
    %v3568 = vpack.c.b16 %v3558, %v3557
    %v3569 = vpack.c.b16 %v3560, %v3559
    %v3570 = vpack.c.b16 %v3562, %v3561
    %v3571 = vpack.c.b16 %v3564, %v3563
    %v3572 = vpack.c.b16 %v3566, %v3565
    %v3580 = vsel %vm377, %v3521, 0
    %v3583 = vsel %vm377, %v3522, 0
    %v3586 = vsel %vm377, %v3523, 0
    %v3589 = vsel %vm377, %v3524, 0
    %3591 = vmatprep.subr.bf16.mxu0 0
    %3592 = vmatpush1.bf16.msra.mxu0 0
    %3593 = vmatprep.subr.bf16.mxu0 0
    %3594 = vmatpush1.bf16.msra.mxu0 0
    %3595 = vmatprep.subr.bf16.mxu0 0
    %3596 = vmatpush1.bf16.msra.mxu0 %v3572
    %3597 = vmatprep.subr.bf16.mxu0 0
    %3598 = vmatpush1.bf16.msra.mxu0 %v3571
    %3599 = vmatprep.subr.bf16.mxu0 0
    %3600 = vmatpush1.bf16.msra.mxu0 %v3570
    %3601 = vmatprep.subr.bf16.mxu0 0
    %3602 = vmatpush1.bf16.msra.mxu0 %v3569
    %3603 = vmatprep.subr.bf16.mxu0 0
    %3604 = vmatpush1.bf16.msra.mxu0 %v3568
    %3605 = vmatprep.subr.bf16.mxu0 0
    %3606 = vmatpush1.bf16.msra.mxu0 %v3567
    %3607 = vmatprep.subr.bf16.mxu0 0
    %3608 = vmatpush2.bf16.msra.mxu0 0
    %3609 = vmatprep.subr.bf16.mxu0 0
    %3610 = vmatpush2.bf16.msra.mxu0 0
    %3611 = vmatprep.subr.bf16.mxu0 0
    %3612 = vmatpush2.bf16.msra.mxu0 0
    %3613 = vmatprep.subr.bf16.mxu0 0
    %3614 = vmatpush2.bf16.msra.mxu0 0
    %3615 = vmatprep.subr.bf16.mxu0 0
    %3616 = vmatpush2.bf16.msra.mxu0 0
    %3617 = vmatprep.subr.bf16.mxu0 0
    %3618 = vmatpush2.bf16.msra.mxu0 0
    %3619 = vmatprep.subr.bf16.mxu0 0
    %3620 = vmatpush2.bf16.msra.mxu0 0
    %3621 = vmatprep.subr.bf16.mxu0 0
    %3622 = vmatpush2.bf16.msra.mxu0 0
    %3623 = vmatprep.mubr.bf16.mxu0 0
    %3624 = vmatmul.mubr.bf16.gmra.mxu0 %v3580
    %v3625 = vpop.f32.mrf.mxu0
    %v3626 = vadd.f32 %v3542, %v3625
    %v3627 = vpop.f32.mrf.mxu0
    %v3628 = vpop.f32.mrf.mxu0
    %v3629 = vadd.f32 %v3542, %v3628
    %v3630 = vpop.f32.mrf.mxu0
    %3631 = vmatprep.mubr.bf16.mxu0 0
    %3632 = vmatmul.mubr.bf16.gmra.mxu0 %v3583
    %v3633 = vpop.f32.mrf.mxu0
    %v3634 = vpop.f32.mrf.mxu0
    %v3635 = vpop.f32.mrf.mxu0
    %v3636 = vpop.f32.mrf.mxu0
    %3637 = vmatprep.mubr.bf16.mxu0 0
    %3638 = vmatmul.mubr.bf16.gmra.mxu0 %v3586
    %v3639 = vpop.f32.mrf.mxu0
    %v3640 = vpop.f32.mrf.mxu0
    %v3641 = vpop.f32.mrf.mxu0
    %v3642 = vpop.f32.mrf.mxu0
    %3643 = vmatprep.mubr.bf16.mxu0 0
    %3644 = vmatmul.mubr.bf16.gmra.mxu0 %v3589
    %v3645 = vpop.f32.mrf.mxu0
    %v3646 = vadd.f32 %v3542, %v3645
    %v3647 = vpop.f32.mrf.mxu0
    %v3648 = vpop.f32.mrf.mxu0
    %v3649 = vadd.f32 %v3542, %v3648
    %v3650 = vpop.f32.mrf.mxu0
    %3651 = vdwg.mxu0
    %v3652 = vxor.u32 %v3626, 2147483648
    %v3653 = vxor.u32 %v3629, 2147483648
    %v3654 = vxor.u32 %v3646, 2147483648
    %v3655 = vxor.u32 %v3649, 2147483648
    %v3656 = vmul.f32 %v3652, 1.442695
    %v3657 = vpow.pop %v3656
    %v3658 = vmul.f32 %v3653, 1.442695
    %v3659 = vpow.pop %v3658
    %v3660 = vmul.f32 %v3654, 1.442695
    %v3661 = vpow.pop %v3660
    %v3662 = vmul.f32 %v3655, 1.442695
    %v3663 = vpow.pop %v3662
    %v3664 = vadd.f32 %v3657, 1.0
    %v3665 = vadd.f32 %v3659, 1.0
    %v3666 = vadd.f32 %v3661, 1.0
    %v3667 = vadd.f32 %v3663, 1.0
    %v3668 = vrcp.pop %v3664
    %v3669 = vmul.f32 1.0, %v3668
    %v3670 = vrcp.pop %v3665
    %v3671 = vmul.f32 1.0, %v3670
    %v3672 = vrcp.pop %v3666
    %v3673 = vmul.f32 1.0, %v3672
    %v3674 = vrcp.pop %v3667
    %v3675 = vmul.f32 1.0, %v3674
    %v3676 = vsub.f32 %v3626, %v3450
    %v3677 = vsub.f32 %v3629, %v3452
    %v3678 = vsub.f32 %v3646, %v3462
    %v3679 = vsub.f32 %v3649, %v3464
    %3684 = vrot.lane.b32.xlu0 %v3676, 96
    %v3685 = vpop.permute.xlu0 %3684
    %3686 = vrot.lane.b32.xlu0 %v3677, 96
    %v3687 = vpop.permute.xlu0 %3686
    %3688 = vrot.lane.b32.xlu0 %v3678, 96
    %v3689 = vpop.permute.xlu0 %3688
    %3690 = vrot.lane.b32.xlu0 %v3679, 96
    %v3691 = vpop.permute.xlu0 %3690
    %v3696 = vmul.f32 %v3669, %v3685
    %v3697 = vmul.f32 %v3671, %v3687
    %v3698 = vmul.f32 %v3673, %v3689
    %v3699 = vmul.f32 %v3675, %v3691
    %v3700 = vadd.f32 %v3417, %v3696
    %v3701 = vadd.f32 %v3418, %v3697
    %v3702 = vadd.f32 %v3423, %v3698
    %v3703 = vadd.f32 %v3424, %v3699
    %3704 = vst.msk [vmem:[#allocation2 + $0x20] sm:$0xff] %vm143, %v3700
    %3705 = vst.msk [vmem:[#allocation2 + $0x28] sm:$0xff] %vm143, %v3701
    %3706 = vst.msk [vmem:[#allocation2 + $0x50] sm:$0xff] %vm143, %v3702
    %3707 = vst.msk [vmem:[#allocation2 + $0x58] sm:$0xff] %vm143, %v3703
    %v3708 = vld [vmem:[#allocation2 + $0x20] sm:$0xff]
    %v3709 = vld [vmem:[#allocation2 + $0x28] sm:$0xff]
    %3710 = vst.msk [vmem:[#allocation3] sm:$0xff] %vm143, %v3708
    %3711 = vst.msk [vmem:[#allocation3 + $0x8] sm:$0xff] %vm143, %v3709
    %v3712 = vld [vmem:[#allocation2 + $0x50] sm:$0xff]
    %v3713 = vld [vmem:[#allocation2 + $0x58] sm:$0xff]
    %s3714 = scalar_lea.vmem [#allocation3], 16
    %3715 = vst.msk [vmem:[%s3714] sm:$0xff] %vm143, %v3712
    %3716 = vst.msk [vmem:[%s3714 + $0x8] sm:$0xff] %vm143, %v3713
    // Predicated region
    $region30: #{tpu_custom_call.1} parent=1 // pred_check
      _
    $region31: #{tpu_custom_call.1} parent=1 // pred_check_branch
      %3718 = sbr.rel (0) target = $region33
    $region32: #{tpu_custom_call.1} parent=1 // pred_region
      %s3720 = ssub.s32 512, 512
      %3721 = vsyncadd [#allocation4], %s3720
      %s3722 = sshll.u32 [#allocation3], 4
      %s3723 = int_to_ptr.vmem [resolvable:$true] %s3722
      %3728 = dma.vmem_to_hbm [thread:$0]  %s3723, 512, %s7, [#allocation4], 128, 128, 8
    $region33: #{tpu_custom_call.1} parent=1 // pred_fallthru
      _
    // Predicated region
    $region34: #{tpu_custom_call.1} parent=1 // pred_check
      _
    $region35: #{tpu_custom_call.1} parent=1 // pred_check_branch
      %3730 = sbr.rel (0) target = $region37
    $region36: #{tpu_custom_call.1} parent=1 // pred_region
      %3731 = dma.done [#allocation4], 512
    $region37: #{tpu_custom_call.1} parent=1 // pred_fallthru
      _
    %3732 = vsyncpa [#allocation4], 1

</llo_original>
